<compile_context>
chip_gen: v7x
topology: tpu7x:2x2x1
jax: 0.10.0
libtpu: 0.0.40
codegen_flags: <defaults>
</compile_context>

<pallas_src>
import jax
import jax.numpy as jnp
import numpy as np
from jax.experimental import pallas as pl
from jax.experimental.pallas import tpu as pltpu

GROUPS = 32
EPS = 1e-5


def _make_kernel(H, W, Cin, Cout, RB):
    """Kernel body for static (H, W, Cin, Cout); RB = image rows per chunk."""
    Wp = W + 2                      # padded row stride
    HW = H * W
    L = H * Wp                      # flat conv-output length (2 junk cols/row)
    n_chunks = H // RB
    CW = RB * W                     # input-chunk width (lanes)
    CL = RB * Wp                    # conv-chunk width (lanes)
    cpg = Cin // GROUPS
    inv_n = 1.0 / float(cpg * HW)

    def kernel(x_ref, gamma_ref, beta_ref, g2c_ref, c2g_ref, w_ref, b_ref,
               o_ref, pad_ref):
        # x_ref:    (1, Cin, H*W)          input image (channels on sublanes)
        # gamma/beta: (Cin, 1)             GroupNorm affine
        # g2c_ref:  (GROUPS, Cin)          one-hot group<-channel reduce matrix
        # c2g_ref:  (Cin, GROUPS)          one-hot channel<-group spread matrix
        # w_ref:    (9, Cout, Cin) bf16    conv taps, t = ky*3 + kx (lane-dense)
        # b_ref:    (Cout, 1)              conv bias
        # o_ref:    (1, Cout, H*(W+2))     flat conv output (lane-dense stores)
        # pad_ref:  (Cin, (H+2)*(W+2)+2)   bf16 flat zero-padded activation scratch

        # Zero the padded scratch once: only the 1-px halo + guard lanes rely on it,
        # the interior is fully rewritten every grid step.  Needs the batch axis to
        # be "arbitrary" (sequential) so the init is seen by every iteration.
        @pl.when(pl.program_id(0) == 0)
        def _init():
            pad_ref[...] = jnp.zeros(pad_ref.shape, pad_ref.dtype)

        # ---- Phase 1: per-channel sum / sum-of-squares (fused, chunked) ---------
        s1 = jnp.zeros((Cin, 1), jnp.float32)
        s2 = jnp.zeros((Cin, 1), jnp.float32)
        for c in range(n_chunks):
            xr = x_ref[0, :, c * CW:(c + 1) * CW].astype(jnp.float32)  # (Cin, CW)
            s1 = s1 + jnp.sum(xr, axis=1, keepdims=True)
            s2 = s2 + jnp.sum(xr * xr, axis=1, keepdims=True)

        # ---- GroupNorm stats via tiny one-hot matmuls (no CxC mask build) -------
        sum_g = jnp.dot(g2c_ref[...], s1, preferred_element_type=jnp.float32)
        sumsq_g = jnp.dot(g2c_ref[...], s2, preferred_element_type=jnp.float32)
        mean_g = sum_g * inv_n
        var_g = sumsq_g * inv_n - mean_g * mean_g
        inv_g = jax.lax.rsqrt(var_g + EPS)
        mean_c = jnp.dot(c2g_ref[...], mean_g, preferred_element_type=jnp.float32)
        inv_c = jnp.dot(c2g_ref[...], inv_g, preferred_element_type=jnp.float32)
        scale_c = gamma_ref[...] * inv_c                    # (Cin, 1)
        shift_c = beta_ref[...] - mean_c * scale_c          # (Cin, 1)

        # ---- Phase 2: GN affine + SiLU (f32), written row-wise into flat pad ----
        for c in range(n_chunks):
            xr = x_ref[0, :, c * CW:(c + 1) * CW].astype(jnp.float32)  # (Cin, CW)
            a = xr * scale_c + shift_c
            a = (a * jax.nn.sigmoid(a)).astype(pad_ref.dtype)          # SiLU -> bf16
            for i in range(RB):
                y = c * RB + i
                dst = (y + 1) * Wp + 1
                pad_ref[:, dst:dst + W] = a[:, i * W:(i + 1) * W]

        # ---- Phase 3: 3x3 conv = 9 contiguous shifted bf16 matmuls per chunk ----
        w_taps = [w_ref[t] for t in range(9)]               # each (Cout, Cin) bf16
        bias = b_ref[...]                                    # (Cout, 1) f32
        for c in range(n_chunks):
            base = c * CL
            acc = jnp.zeros((Cout, CL), jnp.float32)
            for ky in range(3):
                for kx in range(3):
                    off = base + ky * Wp + kx
                    patch = pad_ref[:, off:off + CL]         # (Cin, CL) contiguous
                    acc = acc + jnp.dot(w_taps[ky * 3 + kx], patch,
                                        preferred_element_type=jnp.float32)
            acc = acc + bias
            o_ref[0, :, base:base + CL] = acc.astype(o_ref.dtype)      # lane-dense

    return kernel


def unet_output_layer(x_nchw, gamma, beta, w_oihw, bias):
    """GroupNorm(32) -> SiLU -> Conv2d(3x3, pad=1).  NCHW in, NCHW out."""
    N, Cin, H, W = x_nchw.shape
    Cout = w_oihw.shape[0]
    assert Cin % GROUPS == 0, "in_channels must be divisible by 32"

    HW = H * W
    Wp = W + 2
    L = H * Wp
    pad_len = (H + 2) * Wp + 2            # +2 guard lanes keep the last tap in-bounds
    RB = next(r for r in (8, 4, 2, 1) if H % r == 0)

    x_flat = x_nchw.reshape(N, Cin, HW)                      # free reshape, no transpose
    gamma2 = gamma.reshape(Cin, 1).astype(jnp.float32)
    beta2 = beta.reshape(Cin, 1).astype(jnp.float32)
    bias2 = bias.reshape(Cout, 1).astype(jnp.float32)
    # Conv taps, lane-dense (last dim = Cin), bf16 for the MXU.
    w9 = jnp.transpose(w_oihw, (2, 3, 0, 1)).reshape(9, Cout, Cin).astype(jnp.bfloat16)
    # One-hot group reduce / spread matrices (replace the old CxC block-diag mask).
    cpg = Cin // GROUPS
    c2g = jax.nn.one_hot(jnp.arange(Cin) // cpg, GROUPS, dtype=jnp.float32)  # (Cin, G)
    g2c = c2g.T                                                              # (G, Cin)

    kernel = _make_kernel(H, W, Cin, Cout, RB)

    out_flat = pl.pallas_call(
        kernel,
        out_shape=jax.ShapeDtypeStruct((N, Cout, L), x_nchw.dtype),
        grid_spec=pltpu.PrefetchScalarGridSpec(
            num_scalar_prefetch=0,
            grid=(N,),
            in_specs=[
                pl.BlockSpec((1, Cin, HW), lambda n: (n, 0, 0)),
                pl.BlockSpec((Cin, 1), lambda n: (0, 0)),
                pl.BlockSpec((Cin, 1), lambda n: (0, 0)),
                pl.BlockSpec((GROUPS, Cin), lambda n: (0, 0)),
                pl.BlockSpec((Cin, GROUPS), lambda n: (0, 0)),
                pl.BlockSpec((9, Cout, Cin), lambda n: (0, 0, 0)),
                pl.BlockSpec((Cout, 1), lambda n: (0, 0)),
            ],
            out_specs=pl.BlockSpec((1, Cout, L), lambda n: (n, 0, 0)),
            scratch_shapes=[pltpu.VMEM((Cin, pad_len), jnp.bfloat16)],
        ),
        compiler_params=pltpu.CompilerParams(
            # "arbitrary": the pad-scratch halo is zeroed only at program_id==0 and
            # persists, so the batch axis must stay sequential on one core.
            # TODO(synk): two-pass row-tiled variant (stats pass + apply/conv pass
            # with a 1-row halo) for large H*W so it fits v7x's 64 MiB VMEM and
            # enables spatial pipelining / megacore parallelism.
            dimension_semantics=("arbitrary",),
            vmem_limit_bytes=48 * 1024 * 1024,
        ),
    )(x_flat, gamma2, beta2, g2c, c2g, w9, bias2)

    # Strip the two junk pad columns per row (tiny Cout-wide slice at XLA level).
    return out_flat.reshape(N, Cout, H, Wp)[:, :, :, :W]


def _reference(x, gamma, beta, w, b):
    """Pure-JAX reference matching the PyTorch module semantics."""
    N, C, H, W = x.shape
    xg = x.reshape(N, GROUPS, C // GROUPS, H, W)
    mean = xg.mean(axis=(2, 3, 4), keepdims=True)
    var = xg.var(axis=(2, 3, 4), keepdims=True)
    xn = ((xg - mean) / jnp.sqrt(var + EPS)).reshape(N, C, H, W)
    xn = xn * gamma[None, :, None, None] + beta[None, :, None, None]
    a = xn * jax.nn.sigmoid(xn)
    out = jax.lax.conv_general_dilated(
        a, w, window_strides=(1, 1), padding=((1, 1), (1, 1)),
        dimension_numbers=("NCHW", "OIHW", "NCHW"))
    return out + b[None, :, None, None]


if __name__ == "__main__":
    # Small shapes consistent with the module (in_channels must divide by 32).
    N, Cin, Cout, H, W = 2, 64, 4, 16, 16

    key = jax.random.PRNGKey(0)
    kx, kg, kb, kw, kbias = jax.random.split(key, 5)

    x = jax.random.normal(kx, (N, Cin, H, W), dtype=jnp.float32)            # NCHW
    gamma = 1.0 + 0.1 * jax.random.normal(kg, (Cin,), dtype=jnp.float32)
    beta = 0.1 * jax.random.normal(kb, (Cin,), dtype=jnp.float32)
    w = 0.05 * jax.random.normal(kw, (Cout, Cin, 3, 3), dtype=jnp.float32)  # OIHW
    bias = 0.01 * jax.random.normal(kbias, (Cout,), dtype=jnp.float32)

    out = unet_output_layer(x, gamma, beta, w, bias)
    out = jax.block_until_ready(out)

    ref = jax.block_until_ready(_reference(x, gamma, beta, w, bias))

    assert out.shape == (N, Cout, H, W), out.shape
    np.testing.assert_allclose(np.asarray(out), np.asarray(ref), rtol=2e-2, atol=2e-2)
    print("KERNEL_OK")
</pallas_src>

<mosaic_0001>
module attributes {stable_mosaic.version = 11 : i64} {
  func.func @kernel(%arg0: i32, %arg1: memref<1x64x256xf32, #tpu.memory_space<vmem>>, %arg2: memref<64x1xf32, #tpu.memory_space<vmem>>, %arg3: memref<64x1xf32, #tpu.memory_space<vmem>>, %arg4: memref<32x64xf32, #tpu.memory_space<vmem>>, %arg5: memref<64x32xf32, #tpu.memory_space<vmem>>, %arg6: memref<9x4x64xbf16, #tpu.memory_space<vmem>>, %arg7: memref<4x1xf32, #tpu.memory_space<vmem>>, %arg8: memref<1x4x288xf32, #tpu.memory_space<vmem>>, %arg9: memref<64x326xbf16, #tpu.memory_space<vmem>>) attributes {dimension_semantics = [#tpu.dimension_semantics<arbitrary>], iteration_bounds = array<i64: 2>, scalar_prefetch = 0 : i64, scratch_operands = 1 : i64, tpu.core_type = #tpu.core_type<tc>, window_params = [{transform_indices = @transform_0, window_bounds = array<i64: 1, 64, 256>}, {pipeline_mode = #tpu.pipeline_mode<synchronous>, transform_indices = @transform_1, window_bounds = array<i64: 64, 1>}, {pipeline_mode = #tpu.pipeline_mode<synchronous>, transform_indices = @transform_2, window_bounds = array<i64: 64, 1>}, {pipeline_mode = #tpu.pipeline_mode<synchronous>, transform_indices = @transform_3, window_bounds = array<i64: 32, 64>}, {pipeline_mode = #tpu.pipeline_mode<synchronous>, transform_indices = @transform_4, window_bounds = array<i64: 64, 32>}, {pipeline_mode = #tpu.pipeline_mode<synchronous>, transform_indices = @transform_5, window_bounds = array<i64: 9, 4, 64>}, {pipeline_mode = #tpu.pipeline_mode<synchronous>, transform_indices = @transform_6, window_bounds = array<i64: 4, 1>}, {transform_indices = @transform_7, window_bounds = array<i64: 1, 4, 288>}]} {
    %c0_i32 = arith.constant 0 : i32
    %0 = arith.cmpi eq, %arg0, %c0_i32 : i32
    %1 = arith.extui %0 : i1 to i32
    %c0_i32_0 = arith.constant 0 : i32
    %2 = arith.cmpi ne, %1, %c0_i32_0 : i32
    scf.if %2 {
      %cst_126 = arith.constant 0.000000e+00 : bf16
      %188 = vector.broadcast %cst_126 : bf16 to vector<64x326xbf16>
      %c0_127 = arith.constant 0 : index
      %c0_128 = arith.constant 0 : index
      %189 = vector.load %arg9[%c0_127, %c0_128] : memref<64x326xbf16, #tpu.memory_space<vmem>>, vector<64x326xbf16>
      tpu.vector_store %arg9[%c0_127, %c0_128], %188 {strides = array<i32>} : memref<64x326xbf16, #tpu.memory_space<vmem>>, vector<64x326xbf16>,
    } else {
    }
    %cst = arith.constant 0.000000e+00 : f32
    %3 = vector.broadcast %cst : f32 to vector<64x1xf32>
    %cst_1 = arith.constant 0.000000e+00 : f32
    %4 = vector.broadcast %cst_1 : f32 to vector<64x1xf32>
    %c0 = arith.constant 0 : index
    %c0_2 = arith.constant 0 : index
    %c0_3 = arith.constant 0 : index
    %5 = vector.load %arg1[%c0, %c0_2, %c0_3] : memref<1x64x256xf32, #tpu.memory_space<vmem>>, vector<1x64x128xf32>
    %6 = vector.shape_cast %5 : vector<1x64x128xf32> to vector<64x128xf32>
    %cst_4 = arith.constant dense<0.000000e+00> : vector<64xf32>
    %7 = vector.multi_reduction <add>, %6, %cst_4 [1] : vector<64x128xf32> to vector<64xf32>
    %8 = vector.shape_cast %7 : vector<64xf32> to vector<64x1xf32>
    %9 = arith.addf %3, %8 : vector<64x1xf32>
    %10 = arith.mulf %6, %6 : vector<64x128xf32>
    %cst_5 = arith.constant dense<0.000000e+00> : vector<64xf32>
    %11 = vector.multi_reduction <add>, %10, %cst_5 [1] : vector<64x128xf32> to vector<64xf32>
    %12 = vector.shape_cast %11 : vector<64xf32> to vector<64x1xf32>
    %13 = arith.addf %4, %12 : vector<64x1xf32>
    %c0_6 = arith.constant 0 : index
    %c0_7 = arith.constant 0 : index
    %c128 = arith.constant 128 : index
    %14 = vector.load %arg1[%c0_6, %c0_7, %c128] : memref<1x64x256xf32, #tpu.memory_space<vmem>>, vector<1x64x128xf32>
    %15 = vector.shape_cast %14 : vector<1x64x128xf32> to vector<64x128xf32>
    %cst_8 = arith.constant dense<0.000000e+00> : vector<64xf32>
    %16 = vector.multi_reduction <add>, %15, %cst_8 [1] : vector<64x128xf32> to vector<64xf32>
    %17 = vector.shape_cast %16 : vector<64xf32> to vector<64x1xf32>
    %18 = arith.addf %9, %17 : vector<64x1xf32>
    %19 = arith.mulf %15, %15 : vector<64x128xf32>
    %cst_9 = arith.constant dense<0.000000e+00> : vector<64xf32>
    %20 = vector.multi_reduction <add>, %19, %cst_9 [1] : vector<64x128xf32> to vector<64xf32>
    %21 = vector.shape_cast %20 : vector<64xf32> to vector<64x1xf32>
    %22 = arith.addf %13, %21 : vector<64x1xf32>
    %c0_10 = arith.constant 0 : index
    %c0_11 = arith.constant 0 : index
    %23 = vector.load %arg4[%c0_10, %c0_11] : memref<32x64xf32, #tpu.memory_space<vmem>>, vector<32x64xf32>
    %cst_12 = arith.constant dense<0.000000e+00> : vector<32x1xf32>
    %24 = tpu.matmul %23, %18, %cst_12 {dimension_numbers = #tpu.dot_dimension_numbers<[1], [0], [0], [1], [0, 0, 1, 1], [], []>} : vector<32x64xf32>, vector<64x1xf32>, vector<32x1xf32> -> vector<32x1xf32>
    %c0_13 = arith.constant 0 : index
    %c0_14 = arith.constant 0 : index
    %25 = vector.load %arg4[%c0_13, %c0_14] : memref<32x64xf32, #tpu.memory_space<vmem>>, vector<32x64xf32>
    %cst_15 = arith.constant dense<0.000000e+00> : vector<32x1xf32>
    %26 = tpu.matmul %25, %22, %cst_15 {dimension_numbers = #tpu.dot_dimension_numbers<[1], [0], [0], [1], [0, 0, 1, 1], [], []>} : vector<32x64xf32>, vector<64x1xf32>, vector<32x1xf32> -> vector<32x1xf32>
    %cst_16 = arith.constant 0.001953125 : f32
    %27 = vector.broadcast %cst_16 : f32 to vector<32x1xf32>
    %28 = arith.mulf %24, %27 : vector<32x1xf32>
    %cst_17 = arith.constant 0.001953125 : f32
    %29 = vector.broadcast %cst_17 : f32 to vector<32x1xf32>
    %30 = arith.mulf %26, %29 : vector<32x1xf32>
    %31 = arith.mulf %28, %28 : vector<32x1xf32>
    %32 = arith.subf %30, %31 : vector<32x1xf32>
    %cst_18 = arith.constant 9.99999974E-6 : f32
    %33 = vector.broadcast %cst_18 : f32 to vector<32x1xf32>
    %34 = arith.addf %32, %33 : vector<32x1xf32>
    %35 = math.rsqrt %34 : vector<32x1xf32>
    %c0_19 = arith.constant 0 : index
    %c0_20 = arith.constant 0 : index
    %36 = vector.load %arg5[%c0_19, %c0_20] : memref<64x32xf32, #tpu.memory_space<vmem>>, vector<64x32xf32>
    %cst_21 = arith.constant dense<0.000000e+00> : vector<64x1xf32>
    %37 = tpu.matmul %36, %28, %cst_21 {dimension_numbers = #tpu.dot_dimension_numbers<[1], [0], [0], [1], [0, 0, 1, 1], [], []>} : vector<64x32xf32>, vector<32x1xf32>, vector<64x1xf32> -> vector<64x1xf32>
    %c0_22 = arith.constant 0 : index
    %c0_23 = arith.constant 0 : index
    %38 = vector.load %arg5[%c0_22, %c0_23] : memref<64x32xf32, #tpu.memory_space<vmem>>, vector<64x32xf32>
    %cst_24 = arith.constant dense<0.000000e+00> : vector<64x1xf32>
    %39 = tpu.matmul %38, %35, %cst_24 {dimension_numbers = #tpu.dot_dimension_numbers<[1], [0], [0], [1], [0, 0, 1, 1], [], []>} : vector<64x32xf32>, vector<32x1xf32>, vector<64x1xf32> -> vector<64x1xf32>
    %c0_25 = arith.constant 0 : index
    %c0_26 = arith.constant 0 : index
    %40 = vector.load %arg2[%c0_25, %c0_26] : memref<64x1xf32, #tpu.memory_space<vmem>>, vector<64x1xf32>
    %41 = arith.mulf %40, %39 : vector<64x1xf32>
    %c0_27 = arith.constant 0 : index
    %c0_28 = arith.constant 0 : index
    %42 = vector.load %arg3[%c0_27, %c0_28] : memref<64x1xf32, #tpu.memory_space<vmem>>, vector<64x1xf32>
    %43 = arith.mulf %37, %41 : vector<64x1xf32>
    %44 = arith.subf %42, %43 : vector<64x1xf32>
    %c0_29 = arith.constant 0 : index
    %c0_30 = arith.constant 0 : index
    %c0_31 = arith.constant 0 : index
    %45 = vector.load %arg1[%c0_29, %c0_30, %c0_31] : memref<1x64x256xf32, #tpu.memory_space<vmem>>, vector<1x64x128xf32>
    %46 = vector.shape_cast %45 : vector<1x64x128xf32> to vector<64x128xf32>
    %47 = vector.broadcast %41 : vector<64x1xf32> to vector<64x128xf32>
    %48 = arith.mulf %46, %47 : vector<64x128xf32>
    %49 = vector.broadcast %44 : vector<64x1xf32> to vector<64x128xf32>
    %50 = arith.addf %48, %49 : vector<64x128xf32>
    %51 = arith.negf %50 : vector<64x128xf32>
    %52 = math.exp %51 : vector<64x128xf32>
    %cst_32 = arith.constant 1.000000e+00 : f32
    %53 = vector.broadcast %cst_32 : f32 to vector<64x128xf32>
    %54 = arith.addf %53, %52 : vector<64x128xf32>
    %55 = arith.divf %53, %54 : vector<64x128xf32>
    %56 = arith.mulf %50, %55 : vector<64x128xf32>
    %57 = arith.truncf %56 : vector<64x128xf32> to vector<64x128xbf16>
    %58 = vector.extract_strided_slice %57 {offsets = [0, 0], sizes = [64, 16], strides = [1, 1]} : vector<64x128xbf16> to vector<64x16xbf16>
    %c0_33 = arith.constant 0 : index
    %c19 = arith.constant 19 : index
    %59 = vector.load %arg9[%c0_33, %c19] : memref<64x326xbf16, #tpu.memory_space<vmem>>, vector<64x16xbf16>
    tpu.vector_store %arg9[%c0_33, %c19], %58 {strides = array<i32>} : memref<64x326xbf16, #tpu.memory_space<vmem>>, vector<64x16xbf16>,
    %60 = vector.extract_strided_slice %57 {offsets = [0, 16], sizes = [64, 16], strides = [1, 1]} : vector<64x128xbf16> to vector<64x16xbf16>
    %c0_34 = arith.constant 0 : index
    %c37 = arith.constant 37 : index
    %61 = vector.load %arg9[%c0_34, %c37] : memref<64x326xbf16, #tpu.memory_space<vmem>>, vector<64x16xbf16>
    tpu.vector_store %arg9[%c0_34, %c37], %60 {strides = array<i32>} : memref<64x326xbf16, #tpu.memory_space<vmem>>, vector<64x16xbf16>,
    %62 = vector.extract_strided_slice %57 {offsets = [0, 32], sizes = [64, 16], strides = [1, 1]} : vector<64x128xbf16> to vector<64x16xbf16>
    %c0_35 = arith.constant 0 : index
    %c55 = arith.constant 55 : index
    %63 = vector.load %arg9[%c0_35, %c55] : memref<64x326xbf16, #tpu.memory_space<vmem>>, vector<64x16xbf16>
    tpu.vector_store %arg9[%c0_35, %c55], %62 {strides = array<i32>} : memref<64x326xbf16, #tpu.memory_space<vmem>>, vector<64x16xbf16>,
    %64 = vector.extract_strided_slice %57 {offsets = [0, 48], sizes = [64, 16], strides = [1, 1]} : vector<64x128xbf16> to vector<64x16xbf16>
    %c0_36 = arith.constant 0 : index
    %c73 = arith.constant 73 : index
    %65 = vector.load %arg9[%c0_36, %c73] : memref<64x326xbf16, #tpu.memory_space<vmem>>, vector<64x16xbf16>
    tpu.vector_store %arg9[%c0_36, %c73], %64 {strides = array<i32>} : memref<64x326xbf16, #tpu.memory_space<vmem>>, vector<64x16xbf16>,
    %66 = vector.extract_strided_slice %57 {offsets = [0, 64], sizes = [64, 16], strides = [1, 1]} : vector<64x128xbf16> to vector<64x16xbf16>
    %c0_37 = arith.constant 0 : index
    %c91 = arith.constant 91 : index
    %67 = vector.load %arg9[%c0_37, %c91] : memref<64x326xbf16, #tpu.memory_space<vmem>>, vector<64x16xbf16>
    tpu.vector_store %arg9[%c0_37, %c91], %66 {strides = array<i32>} : memref<64x326xbf16, #tpu.memory_space<vmem>>, vector<64x16xbf16>,
    %68 = vector.extract_strided_slice %57 {offsets = [0, 80], sizes = [64, 16], strides = [1, 1]} : vector<64x128xbf16> to vector<64x16xbf16>
    %c0_38 = arith.constant 0 : index
    %c109 = arith.constant 109 : index
    %69 = vector.load %arg9[%c0_38, %c109] : memref<64x326xbf16, #tpu.memory_space<vmem>>, vector<64x16xbf16>
    tpu.vector_store %arg9[%c0_38, %c109], %68 {strides = array<i32>} : memref<64x326xbf16, #tpu.memory_space<vmem>>, vector<64x16xbf16>,
    %70 = vector.extract_strided_slice %57 {offsets = [0, 96], sizes = [64, 16], strides = [1, 1]} : vector<64x128xbf16> to vector<64x16xbf16>
    %c0_39 = arith.constant 0 : index
    %c127 = arith.constant 127 : index
    %71 = vector.load %arg9[%c0_39, %c127] : memref<64x326xbf16, #tpu.memory_space<vmem>>, vector<64x16xbf16>
    tpu.vector_store %arg9[%c0_39, %c127], %70 {strides = array<i32>} : memref<64x326xbf16, #tpu.memory_space<vmem>>, vector<64x16xbf16>,
    %72 = vector.extract_strided_slice %57 {offsets = [0, 112], sizes = [64, 16], strides = [1, 1]} : vector<64x128xbf16> to vector<64x16xbf16>
    %c0_40 = arith.constant 0 : index
    %c145 = arith.constant 145 : index
    %73 = vector.load %arg9[%c0_40, %c145] : memref<64x326xbf16, #tpu.memory_space<vmem>>, vector<64x16xbf16>
    tpu.vector_store %arg9[%c0_40, %c145], %72 {strides = array<i32>} : memref<64x326xbf16, #tpu.memory_space<vmem>>, vector<64x16xbf16>,
    %c0_41 = arith.constant 0 : index
    %c0_42 = arith.constant 0 : index
    %c128_43 = arith.constant 128 : index
    %74 = vector.load %arg1[%c0_41, %c0_42, %c128_43] : memref<1x64x256xf32, #tpu.memory_space<vmem>>, vector<1x64x128xf32>
    %75 = vector.shape_cast %74 : vector<1x64x128xf32> to vector<64x128xf32>
    %76 = vector.broadcast %41 : vector<64x1xf32> to vector<64x128xf32>
    %77 = arith.mulf %75, %76 : vector<64x128xf32>
    %78 = vector.broadcast %44 : vector<64x1xf32> to vector<64x128xf32>
    %79 = arith.addf %77, %78 : vector<64x128xf32>
    %80 = arith.negf %79 : vector<64x128xf32>
    %81 = math.exp %80 : vector<64x128xf32>
    %cst_44 = arith.constant 1.000000e+00 : f32
    %82 = vector.broadcast %cst_44 : f32 to vector<64x128xf32>
    %83 = arith.addf %82, %81 : vector<64x128xf32>
    %84 = arith.divf %82, %83 : vector<64x128xf32>
    %85 = arith.mulf %79, %84 : vector<64x128xf32>
    %86 = arith.truncf %85 : vector<64x128xf32> to vector<64x128xbf16>
    %87 = vector.extract_strided_slice %86 {offsets = [0, 0], sizes = [64, 16], strides = [1, 1]} : vector<64x128xbf16> to vector<64x16xbf16>
    %c0_45 = arith.constant 0 : index
    %c163 = arith.constant 163 : index
    %88 = vector.load %arg9[%c0_45, %c163] : memref<64x326xbf16, #tpu.memory_space<vmem>>, vector<64x16xbf16>
    tpu.vector_store %arg9[%c0_45, %c163], %87 {strides = array<i32>} : memref<64x326xbf16, #tpu.memory_space<vmem>>, vector<64x16xbf16>,
    %89 = vector.extract_strided_slice %86 {offsets = [0, 16], sizes = [64, 16], strides = [1, 1]} : vector<64x128xbf16> to vector<64x16xbf16>
    %c0_46 = arith.constant 0 : index
    %c181 = arith.constant 181 : index
    %90 = vector.load %arg9[%c0_46, %c181] : memref<64x326xbf16, #tpu.memory_space<vmem>>, vector<64x16xbf16>
    tpu.vector_store %arg9[%c0_46, %c181], %89 {strides = array<i32>} : memref<64x326xbf16, #tpu.memory_space<vmem>>, vector<64x16xbf16>,
    %91 = vector.extract_strided_slice %86 {offsets = [0, 32], sizes = [64, 16], strides = [1, 1]} : vector<64x128xbf16> to vector<64x16xbf16>
    %c0_47 = arith.constant 0 : index
    %c199 = arith.constant 199 : index
    %92 = vector.load %arg9[%c0_47, %c199] : memref<64x326xbf16, #tpu.memory_space<vmem>>, vector<64x16xbf16>
    tpu.vector_store %arg9[%c0_47, %c199], %91 {strides = array<i32>} : memref<64x326xbf16, #tpu.memory_space<vmem>>, vector<64x16xbf16>,
    %93 = vector.extract_strided_slice %86 {offsets = [0, 48], sizes = [64, 16], strides = [1, 1]} : vector<64x128xbf16> to vector<64x16xbf16>
    %c0_48 = arith.constant 0 : index
    %c217 = arith.constant 217 : index
    %94 = vector.load %arg9[%c0_48, %c217] : memref<64x326xbf16, #tpu.memory_space<vmem>>, vector<64x16xbf16>
    tpu.vector_store %arg9[%c0_48, %c217], %93 {strides = array<i32>} : memref<64x326xbf16, #tpu.memory_space<vmem>>, vector<64x16xbf16>,
    %95 = vector.extract_strided_slice %86 {offsets = [0, 64], sizes = [64, 16], strides = [1, 1]} : vector<64x128xbf16> to vector<64x16xbf16>
    %c0_49 = arith.constant 0 : index
    %c235 = arith.constant 235 : index
    %96 = vector.load %arg9[%c0_49, %c235] : memref<64x326xbf16, #tpu.memory_space<vmem>>, vector<64x16xbf16>
    tpu.vector_store %arg9[%c0_49, %c235], %95 {strides = array<i32>} : memref<64x326xbf16, #tpu.memory_space<vmem>>, vector<64x16xbf16>,
    %97 = vector.extract_strided_slice %86 {offsets = [0, 80], sizes = [64, 16], strides = [1, 1]} : vector<64x128xbf16> to vector<64x16xbf16>
    %c0_50 = arith.constant 0 : index
    %c253 = arith.constant 253 : index
    %98 = vector.load %arg9[%c0_50, %c253] : memref<64x326xbf16, #tpu.memory_space<vmem>>, vector<64x16xbf16>
    tpu.vector_store %arg9[%c0_50, %c253], %97 {strides = array<i32>} : memref<64x326xbf16, #tpu.memory_space<vmem>>, vector<64x16xbf16>,
    %99 = vector.extract_strided_slice %86 {offsets = [0, 96], sizes = [64, 16], strides = [1, 1]} : vector<64x128xbf16> to vector<64x16xbf16>
    %c0_51 = arith.constant 0 : index
    %c271 = arith.constant 271 : index
    %100 = vector.load %arg9[%c0_51, %c271] : memref<64x326xbf16, #tpu.memory_space<vmem>>, vector<64x16xbf16>
    tpu.vector_store %arg9[%c0_51, %c271], %99 {strides = array<i32>} : memref<64x326xbf16, #tpu.memory_space<vmem>>, vector<64x16xbf16>,
    %101 = vector.extract_strided_slice %86 {offsets = [0, 112], sizes = [64, 16], strides = [1, 1]} : vector<64x128xbf16> to vector<64x16xbf16>
    %c0_52 = arith.constant 0 : index
    %c289 = arith.constant 289 : index
    %102 = vector.load %arg9[%c0_52, %c289] : memref<64x326xbf16, #tpu.memory_space<vmem>>, vector<64x16xbf16>
    tpu.vector_store %arg9[%c0_52, %c289], %101 {strides = array<i32>} : memref<64x326xbf16, #tpu.memory_space<vmem>>, vector<64x16xbf16>,
    %c0_53 = arith.constant 0 : index
    %c0_54 = arith.constant 0 : index
    %c0_55 = arith.constant 0 : index
    %103 = vector.load %arg6[%c0_53, %c0_54, %c0_55] : memref<9x4x64xbf16, #tpu.memory_space<vmem>>, vector<1x4x64xbf16>
    %104 = vector.shape_cast %103 : vector<1x4x64xbf16> to vector<4x64xbf16>
    %c1 = arith.constant 1 : index
    %c0_56 = arith.constant 0 : index
    %c0_57 = arith.constant 0 : index
    %105 = vector.load %arg6[%c1, %c0_56, %c0_57] : memref<9x4x64xbf16, #tpu.memory_space<vmem>>, vector<1x4x64xbf16>
    %106 = vector.shape_cast %105 : vector<1x4x64xbf16> to vector<4x64xbf16>
    %c2 = arith.constant 2 : index
    %c0_58 = arith.constant 0 : index
    %c0_59 = arith.constant 0 : index
    %107 = vector.load %arg6[%c2, %c0_58, %c0_59] : memref<9x4x64xbf16, #tpu.memory_space<vmem>>, vector<1x4x64xbf16>
    %108 = vector.shape_cast %107 : vector<1x4x64xbf16> to vector<4x64xbf16>
    %c3 = arith.constant 3 : index
    %c0_60 = arith.constant 0 : index
    %c0_61 = arith.constant 0 : index
    %109 = vector.load %arg6[%c3, %c0_60, %c0_61] : memref<9x4x64xbf16, #tpu.memory_space<vmem>>, vector<1x4x64xbf16>
    %110 = vector.shape_cast %109 : vector<1x4x64xbf16> to vector<4x64xbf16>
    %c4 = arith.constant 4 : index
    %c0_62 = arith.constant 0 : index
    %c0_63 = arith.constant 0 : index
    %111 = vector.load %arg6[%c4, %c0_62, %c0_63] : memref<9x4x64xbf16, #tpu.memory_space<vmem>>, vector<1x4x64xbf16>
    %112 = vector.shape_cast %111 : vector<1x4x64xbf16> to vector<4x64xbf16>
    %c5 = arith.constant 5 : index
    %c0_64 = arith.constant 0 : index
    %c0_65 = arith.constant 0 : index
    %113 = vector.load %arg6[%c5, %c0_64, %c0_65] : memref<9x4x64xbf16, #tpu.memory_space<vmem>>, vector<1x4x64xbf16>
    %114 = vector.shape_cast %113 : vector<1x4x64xbf16> to vector<4x64xbf16>
    %c6 = arith.constant 6 : index
    %c0_66 = arith.constant 0 : index
    %c0_67 = arith.constant 0 : index
    %115 = vector.load %arg6[%c6, %c0_66, %c0_67] : memref<9x4x64xbf16, #tpu.memory_space<vmem>>, vector<1x4x64xbf16>
    %116 = vector.shape_cast %115 : vector<1x4x64xbf16> to vector<4x64xbf16>
    %c7 = arith.constant 7 : index
    %c0_68 = arith.constant 0 : index
    %c0_69 = arith.constant 0 : index
    %117 = vector.load %arg6[%c7, %c0_68, %c0_69] : memref<9x4x64xbf16, #tpu.memory_space<vmem>>, vector<1x4x64xbf16>
    %118 = vector.shape_cast %117 : vector<1x4x64xbf16> to vector<4x64xbf16>
    %c8 = arith.constant 8 : index
    %c0_70 = arith.constant 0 : index
    %c0_71 = arith.constant 0 : index
    %119 = vector.load %arg6[%c8, %c0_70, %c0_71] : memref<9x4x64xbf16, #tpu.memory_space<vmem>>, vector<1x4x64xbf16>
    %120 = vector.shape_cast %119 : vector<1x4x64xbf16> to vector<4x64xbf16>
    %c0_72 = arith.constant 0 : index
    %c0_73 = arith.constant 0 : index
    %121 = vector.load %arg7[%c0_72, %c0_73] : memref<4x1xf32, #tpu.memory_space<vmem>>, vector<4x1xf32>
    %cst_74 = arith.constant 0.000000e+00 : f32
    %122 = vector.broadcast %cst_74 : f32 to vector<4x144xf32>
    %c0_75 = arith.constant 0 : index
    %c0_76 = arith.constant 0 : index
    %123 = vector.load %arg9[%c0_75, %c0_76] : memref<64x326xbf16, #tpu.memory_space<vmem>>, vector<64x144xbf16>
    %cst_77 = arith.constant dense<0.000000e+00> : vector<4x144xf32>
    %124 = tpu.matmul %104, %123, %cst_77 {dimension_numbers = #tpu.dot_dimension_numbers<[1], [0], [0], [1], [0, 0, 1, 1], [], []>} : vector<4x64xbf16>, vector<64x144xbf16>, vector<4x144xf32> -> vector<4x144xf32>
    %125 = arith.addf %122, %124 : vector<4x144xf32>
    %c0_78 = arith.constant 0 : index
    %c1_79 = arith.constant 1 : index
    %126 = vector.load %arg9[%c0_78, %c1_79] : memref<64x326xbf16, #tpu.memory_space<vmem>>, vector<64x144xbf16>
    %cst_80 = arith.constant dense<0.000000e+00> : vector<4x144xf32>
    %127 = tpu.matmul %106, %126, %cst_80 {dimension_numbers = #tpu.dot_dimension_numbers<[1], [0], [0], [1], [0, 0, 1, 1], [], []>} : vector<4x64xbf16>, vector<64x144xbf16>, vector<4x144xf32> -> vector<4x144xf32>
    %128 = arith.addf %125, %127 : vector<4x144xf32>
    %c0_81 = arith.constant 0 : index
    %c2_82 = arith.constant 2 : index
    %129 = vector.load %arg9[%c0_81, %c2_82] : memref<64x326xbf16, #tpu.memory_space<vmem>>, vector<64x144xbf16>
    %cst_83 = arith.constant dense<0.000000e+00> : vector<4x144xf32>
    %130 = tpu.matmul %108, %129, %cst_83 {dimension_numbers = #tpu.dot_dimension_numbers<[1], [0], [0], [1], [0, 0, 1, 1], [], []>} : vector<4x64xbf16>, vector<64x144xbf16>, vector<4x144xf32> -> vector<4x144xf32>
    %131 = arith.addf %128, %130 : vector<4x144xf32>
    %c0_84 = arith.constant 0 : index
    %c18 = arith.constant 18 : index
    %132 = vector.load %arg9[%c0_84, %c18] : memref<64x326xbf16, #tpu.memory_space<vmem>>, vector<64x144xbf16>
    %cst_85 = arith.constant dense<0.000000e+00> : vector<4x144xf32>
    %133 = tpu.matmul %110, %132, %cst_85 {dimension_numbers = #tpu.dot_dimension_numbers<[1], [0], [0], [1], [0, 0, 1, 1], [], []>} : vector<4x64xbf16>, vector<64x144xbf16>, vector<4x144xf32> -> vector<4x144xf32>
    %134 = arith.addf %131, %133 : vector<4x144xf32>
    %c0_86 = arith.constant 0 : index
    %c19_87 = arith.constant 19 : index
    %135 = vector.load %arg9[%c0_86, %c19_87] : memref<64x326xbf16, #tpu.memory_space<vmem>>, vector<64x144xbf16>
    %cst_88 = arith.constant dense<0.000000e+00> : vector<4x144xf32>
    %136 = tpu.matmul %112, %135, %cst_88 {dimension_numbers = #tpu.dot_dimension_numbers<[1], [0], [0], [1], [0, 0, 1, 1], [], []>} : vector<4x64xbf16>, vector<64x144xbf16>, vector<4x144xf32> -> vector<4x144xf32>
    %137 = arith.addf %134, %136 : vector<4x144xf32>
    %c0_89 = arith.constant 0 : index
    %c20 = arith.constant 20 : index
    %138 = vector.load %arg9[%c0_89, %c20] : memref<64x326xbf16, #tpu.memory_space<vmem>>, vector<64x144xbf16>
    %cst_90 = arith.constant dense<0.000000e+00> : vector<4x144xf32>
    %139 = tpu.matmul %114, %138, %cst_90 {dimension_numbers = #tpu.dot_dimension_numbers<[1], [0], [0], [1], [0, 0, 1, 1], [], []>} : vector<4x64xbf16>, vector<64x144xbf16>, vector<4x144xf32> -> vector<4x144xf32>
    %140 = arith.addf %137, %139 : vector<4x144xf32>
    %c0_91 = arith.constant 0 : index
    %c36 = arith.constant 36 : index
    %141 = vector.load %arg9[%c0_91, %c36] : memref<64x326xbf16, #tpu.memory_space<vmem>>, vector<64x144xbf16>
    %cst_92 = arith.constant dense<0.000000e+00> : vector<4x144xf32>
    %142 = tpu.matmul %116, %141, %cst_92 {dimension_numbers = #tpu.dot_dimension_numbers<[1], [0], [0], [1], [0, 0, 1, 1], [], []>} : vector<4x64xbf16>, vector<64x144xbf16>, vector<4x144xf32> -> vector<4x144xf32>
    %143 = arith.addf %140, %142 : vector<4x144xf32>
    %c0_93 = arith.constant 0 : index
    %c37_94 = arith.constant 37 : index
    %144 = vector.load %arg9[%c0_93, %c37_94] : memref<64x326xbf16, #tpu.memory_space<vmem>>, vector<64x144xbf16>
    %cst_95 = arith.constant dense<0.000000e+00> : vector<4x144xf32>
    %145 = tpu.matmul %118, %144, %cst_95 {dimension_numbers = #tpu.dot_dimension_numbers<[1], [0], [0], [1], [0, 0, 1, 1], [], []>} : vector<4x64xbf16>, vector<64x144xbf16>, vector<4x144xf32> -> vector<4x144xf32>
    %146 = arith.addf %143, %145 : vector<4x144xf32>
    %c0_96 = arith.constant 0 : index
    %c38 = arith.constant 38 : index
    %147 = vector.load %arg9[%c0_96, %c38] : memref<64x326xbf16, #tpu.memory_space<vmem>>, vector<64x144xbf16>
    %cst_97 = arith.constant dense<0.000000e+00> : vector<4x144xf32>
    %148 = tpu.matmul %120, %147, %cst_97 {dimension_numbers = #tpu.dot_dimension_numbers<[1], [0], [0], [1], [0, 0, 1, 1], [], []>} : vector<4x64xbf16>, vector<64x144xbf16>, vector<4x144xf32> -> vector<4x144xf32>
    %149 = arith.addf %146, %148 : vector<4x144xf32>
    %150 = vector.broadcast %121 : vector<4x1xf32> to vector<4x144xf32>
    %151 = arith.addf %149, %150 : vector<4x144xf32>
    %c0_98 = arith.constant 0 : index
    %c0_99 = arith.constant 0 : index
    %c0_100 = arith.constant 0 : index
    %152 = vector.load %arg8[%c0_98, %c0_99, %c0_100] : memref<1x4x288xf32, #tpu.memory_space<vmem>>, vector<1x4x144xf32>
    %153 = vector.shape_cast %152 : vector<1x4x144xf32> to vector<4x144xf32>
    %154 = vector.shape_cast %151 : vector<4x144xf32> to vector<1x4x144xf32>
    tpu.vector_store %arg8[%c0_98, %c0_99, %c0_100], %154 {strides = array<i32>} : memref<1x4x288xf32, #tpu.memory_space<vmem>>, vector<1x4x144xf32>,
    %cst_101 = arith.constant 0.000000e+00 : f32
    %155 = vector.broadcast %cst_101 : f32 to vector<4x144xf32>
    %c0_102 = arith.constant 0 : index
    %c144 = arith.constant 144 : index
    %156 = vector.load %arg9[%c0_102, %c144] : memref<64x326xbf16, #tpu.memory_space<vmem>>, vector<64x144xbf16>
    %cst_103 = arith.constant dense<0.000000e+00> : vector<4x144xf32>
    %157 = tpu.matmul %104, %156, %cst_103 {dimension_numbers = #tpu.dot_dimension_numbers<[1], [0], [0], [1], [0, 0, 1, 1], [], []>} : vector<4x64xbf16>, vector<64x144xbf16>, vector<4x144xf32> -> vector<4x144xf32>
    %158 = arith.addf %155, %157 : vector<4x144xf32>
    %c0_104 = arith.constant 0 : index
    %c145_105 = arith.constant 145 : index
    %159 = vector.load %arg9[%c0_104, %c145_105] : memref<64x326xbf16, #tpu.memory_space<vmem>>, vector<64x144xbf16>
    %cst_106 = arith.constant dense<0.000000e+00> : vector<4x144xf32>
    %160 = tpu.matmul %106, %159, %cst_106 {dimension_numbers = #tpu.dot_dimension_numbers<[1], [0], [0], [1], [0, 0, 1, 1], [], []>} : vector<4x64xbf16>, vector<64x144xbf16>, vector<4x144xf32> -> vector<4x144xf32>
    %161 = arith.addf %158, %160 : vector<4x144xf32>
    %c0_107 = arith.constant 0 : index
    %c146 = arith.constant 146 : index
    %162 = vector.load %arg9[%c0_107, %c146] : memref<64x326xbf16, #tpu.memory_space<vmem>>, vector<64x144xbf16>
    %cst_108 = arith.constant dense<0.000000e+00> : vector<4x144xf32>
    %163 = tpu.matmul %108, %162, %cst_108 {dimension_numbers = #tpu.dot_dimension_numbers<[1], [0], [0], [1], [0, 0, 1, 1], [], []>} : vector<4x64xbf16>, vector<64x144xbf16>, vector<4x144xf32> -> vector<4x144xf32>
    %164 = arith.addf %161, %163 : vector<4x144xf32>
    %c0_109 = arith.constant 0 : index
    %c162 = arith.constant 162 : index
    %165 = vector.load %arg9[%c0_109, %c162] : memref<64x326xbf16, #tpu.memory_space<vmem>>, vector<64x144xbf16>
    %cst_110 = arith.constant dense<0.000000e+00> : vector<4x144xf32>
    %166 = tpu.matmul %110, %165, %cst_110 {dimension_numbers = #tpu.dot_dimension_numbers<[1], [0], [0], [1], [0, 0, 1, 1], [], []>} : vector<4x64xbf16>, vector<64x144xbf16>, vector<4x144xf32> -> vector<4x144xf32>
    %167 = arith.addf %164, %166 : vector<4x144xf32>
    %c0_111 = arith.constant 0 : index
    %c163_112 = arith.constant 163 : index
    %168 = vector.load %arg9[%c0_111, %c163_112] : memref<64x326xbf16, #tpu.memory_space<vmem>>, vector<64x144xbf16>
    %cst_113 = arith.constant dense<0.000000e+00> : vector<4x144xf32>
    %169 = tpu.matmul %112, %168, %cst_113 {dimension_numbers = #tpu.dot_dimension_numbers<[1], [0], [0], [1], [0, 0, 1, 1], [], []>} : vector<4x64xbf16>, vector<64x144xbf16>, vector<4x144xf32> -> vector<4x144xf32>
    %170 = arith.addf %167, %169 : vector<4x144xf32>
    %c0_114 = arith.constant 0 : index
    %c164 = arith.constant 164 : index
    %171 = vector.load %arg9[%c0_114, %c164] : memref<64x326xbf16, #tpu.memory_space<vmem>>, vector<64x144xbf16>
    %cst_115 = arith.constant dense<0.000000e+00> : vector<4x144xf32>
    %172 = tpu.matmul %114, %171, %cst_115 {dimension_numbers = #tpu.dot_dimension_numbers<[1], [0], [0], [1], [0, 0, 1, 1], [], []>} : vector<4x64xbf16>, vector<64x144xbf16>, vector<4x144xf32> -> vector<4x144xf32>
    %173 = arith.addf %170, %172 : vector<4x144xf32>
    %c0_116 = arith.constant 0 : index
    %c180 = arith.constant 180 : index
    %174 = vector.load %arg9[%c0_116, %c180] : memref<64x326xbf16, #tpu.memory_space<vmem>>, vector<64x144xbf16>
    %cst_117 = arith.constant dense<0.000000e+00> : vector<4x144xf32>
    %175 = tpu.matmul %116, %174, %cst_117 {dimension_numbers = #tpu.dot_dimension_numbers<[1], [0], [0], [1], [0, 0, 1, 1], [], []>} : vector<4x64xbf16>, vector<64x144xbf16>, vector<4x144xf32> -> vector<4x144xf32>
    %176 = arith.addf %173, %175 : vector<4x144xf32>
    %c0_118 = arith.constant 0 : index
    %c181_119 = arith.constant 181 : index
    %177 = vector.load %arg9[%c0_118, %c181_119] : memref<64x326xbf16, #tpu.memory_space<vmem>>, vector<64x144xbf16>
    %cst_120 = arith.constant dense<0.000000e+00> : vector<4x144xf32>
    %178 = tpu.matmul %118, %177, %cst_120 {dimension_numbers = #tpu.dot_dimension_numbers<[1], [0], [0], [1], [0, 0, 1, 1], [], []>} : vector<4x64xbf16>, vector<64x144xbf16>, vector<4x144xf32> -> vector<4x144xf32>
    %179 = arith.addf %176, %178 : vector<4x144xf32>
    %c0_121 = arith.constant 0 : index
    %c182 = arith.constant 182 : index
    %180 = vector.load %arg9[%c0_121, %c182] : memref<64x326xbf16, #tpu.memory_space<vmem>>, vector<64x144xbf16>
    %cst_122 = arith.constant dense<0.000000e+00> : vector<4x144xf32>
    %181 = tpu.matmul %120, %180, %cst_122 {dimension_numbers = #tpu.dot_dimension_numbers<[1], [0], [0], [1], [0, 0, 1, 1], [], []>} : vector<4x64xbf16>, vector<64x144xbf16>, vector<4x144xf32> -> vector<4x144xf32>
    %182 = arith.addf %179, %181 : vector<4x144xf32>
    %183 = vector.broadcast %121 : vector<4x1xf32> to vector<4x144xf32>
    %184 = arith.addf %182, %183 : vector<4x144xf32>
    %c0_123 = arith.constant 0 : index
    %c0_124 = arith.constant 0 : index
    %c144_125 = arith.constant 144 : index
    %185 = vector.load %arg8[%c0_123, %c0_124, %c144_125] : memref<1x4x288xf32, #tpu.memory_space<vmem>>, vector<1x4x144xf32>
    %186 = vector.shape_cast %185 : vector<1x4x144xf32> to vector<4x144xf32>
    %187 = vector.shape_cast %184 : vector<4x144xf32> to vector<1x4x144xf32>
    tpu.vector_store %arg8[%c0_123, %c0_124, %c144_125], %187 {strides = array<i32>} : memref<1x4x288xf32, #tpu.memory_space<vmem>>, vector<1x4x144xf32>,
    return
  }
  func.func @transform_0(%arg0: i32) -> (i32, i32, i32) {
    %c0_i32 = arith.constant 0 : i32
    %c0_i32_0 = arith.constant 0 : i32
    %c0_i32_1 = arith.constant 0 : i32
    return %arg0, %c0_i32, %c0_i32_0 : i32, i32, i32
  }
  func.func @transform_1(%arg0: i32) -> (i32, i32) {
    %c0_i32 = arith.constant 0 : i32
    %c0_i32_0 = arith.constant 0 : i32
    %c0_i32_1 = arith.constant 0 : i32
    return %c0_i32, %c0_i32_0 : i32, i32
  }
  func.func @transform_2(%arg0: i32) -> (i32, i32) {
    %c0_i32 = arith.constant 0 : i32
    %c0_i32_0 = arith.constant 0 : i32
    %c0_i32_1 = arith.constant 0 : i32
    return %c0_i32, %c0_i32_0 : i32, i32
  }
  func.func @transform_3(%arg0: i32) -> (i32, i32) {
    %c0_i32 = arith.constant 0 : i32
    %c0_i32_0 = arith.constant 0 : i32
    %c0_i32_1 = arith.constant 0 : i32
    return %c0_i32, %c0_i32_0 : i32, i32
  }
  func.func @transform_4(%arg0: i32) -> (i32, i32) {
    %c0_i32 = arith.constant 0 : i32
    %c0_i32_0 = arith.constant 0 : i32
    %c0_i32_1 = arith.constant 0 : i32
    return %c0_i32, %c0_i32_0 : i32, i32
  }
  func.func @transform_5(%arg0: i32) -> (i32, i32, i32) {
    %c0_i32 = arith.constant 0 : i32
    %c0_i32_0 = arith.constant 0 : i32
    %c0_i32_1 = arith.constant 0 : i32
    %c0_i32_2 = arith.constant 0 : i32
    return %c0_i32, %c0_i32_0, %c0_i32_1 : i32, i32, i32
  }
  func.func @transform_6(%arg0: i32) -> (i32, i32) {
    %c0_i32 = arith.constant 0 : i32
    %c0_i32_0 = arith.constant 0 : i32
    %c0_i32_1 = arith.constant 0 : i32
    return %c0_i32, %c0_i32_0 : i32, i32
  }
  func.func @transform_7(%arg0: i32) -> (i32, i32, i32) {
    %c0_i32 = arith.constant 0 : i32
    %c0_i32_0 = arith.constant 0 : i32
    %c0_i32_1 = arith.constant 0 : i32
    return %arg0, %c0_i32, %c0_i32_0 : i32, i32, i32
  }
}

</mosaic_0001>

<llo_original>
// kernel: tpu_custom_call.1
$region0: #{tpu_custom_call.1}
  #allocation0 [shape = 'u32[]', space=smem, size = 0x4, offset = 0x4, fixed_abs, tag = 'smem constant byte address 0x4 - core index']
  #allocation1 [shape = 'u32[144,128]{1,0:T(1,128)}', space=vmem, size = 0x12000, scoped, tag = 'internal scratch']
  #allocation2 [shape = 'bf16[64,326]{1,0:T(16,128)(2,1)}', space=vmem, size = 0xc000, scoped, tag = 'scratch operand']
  %s0 = inlined_call_operand.hbm [shape: f32[2,64,256], index: 0, kind: input, shape index: {}]
  %s1 = inlined_call_operand.vmem [shape: f32[64,1], index: 1, kind: input, shape index: {}]
  %s2 = inlined_call_operand.vmem [shape: f32[64,1], index: 2, kind: input, shape index: {}]
  %s3 = inlined_call_operand.vmem [shape: f32[32,64], index: 3, kind: input, shape index: {}]
  %s4 = inlined_call_operand.vmem [shape: f32[64,32], index: 4, kind: input, shape index: {}]
  %s5 = inlined_call_operand.vmem [shape: bf16[9,4,64], index: 5, kind: input, shape index: {}]
  %s6 = inlined_call_operand.vmem [shape: f32[4,1], index: 6, kind: input, shape index: {}]
  %s7 = inlined_call_operand.hbm [shape: f32[2,4,288], index: 7, kind: output, shape index: {}]
  %s8 = sld [smem:[#allocation0]]
  $region69: #{tpu_custom_call.1} parent=0
    _
  %s10 = ssub.s32 1, %s8
  %s11 = scalar_select 0, %s10, %s8
  $region1: #{tpu_custom_call.1} parent=0
    #allocation3 [shape = 'u8[131072]{0}', space=vmem, size = 0x20000, scoped, tag = 'input window, operand 0']
    #allocation4 [shape = 's32[2]{0}', space=sflag, size = 0x8, scoped, tag = 'scoped memory for tpu_custom_call.1']
    #allocation5 [shape = 's32[2]{0}', space=sflag, size = 0x8, scoped, tag = 'scoped memory for tpu_custom_call.1']
    #allocation6 [shape = 'u8[12288]{0}', space=vmem, size = 0x3000, scoped, tag = 'output window, operand 0']
    %12 = vsyncpa [#allocation4], 0
    %s13 = scalar_lea.sflag [#allocation4], 1
    %14 = vsyncpa %s13, 0
    %15 = vsyncpa [#allocation5], 0
    %s16 = scalar_lea.sflag [#allocation5], 1
    %17 = vsyncpa %s16, 0
    loop: start=0, step=1, limit=4
    $region2: #{tpu_custom_call.1} parent=1 // loop_pre_header
      _
    $region3: #{tpu_custom_call.1} parent=1 // loop_header
      %s19 = sphi 0, %s23
      %p20 = scmp.ge.s32.totalorder %s19, 4
      %s29 = sphi 0, %s31
      %s32 = sphi 0, %s29
      %s33 = sphi 0, %s32
      %s49 = sphi 0, %s33
      %s53 = sphi 0, %s53
      %s55 = sphi 0, %s53
      %s56 = sphi 0, %s55
      %s70 = sphi 0, %s56
      %s74 = sphi 0, %s74
      %s76 = sphi 0, %s74
      %s77 = sphi 0, %s76
      %s91 = sphi 0, %s77
      %s95 = sphi 0, %s95
      %s97 = sphi 0, %s95
      %s98 = sphi 0, %s97
      %s112 = sphi 0, %s98
      %s116 = sphi 0, %s116
      %s118 = sphi 0, %s116
      %s119 = sphi 0, %s118
      %s133 = sphi 0, %s119
      %s137 = sphi 0, %s137
      %s139 = sphi 0, %s137
      %s140 = sphi 0, %s139
      %s154 = sphi 0, %s140
      %s158 = sphi 0, %s158
      %s160 = sphi 0, %s158
      %s161 = sphi 0, %s160
      %s175 = sphi 0, %s161
      %s181 = sphi 0, %s183
      %s184 = sphi 0, %s181
      %s185 = sphi 0, %s184
      %s201 = sphi 0, %s185
    $region4: #{tpu_custom_call.1} parent=1 // loop_header_branch
      %22 = sbr.rel (%p20) target = $region8
    $region5: #{tpu_custom_call.1} parent=1 // loop_body
      %s24 = ssub.s32 %s19, 1
      %s25 = ssub.s32 %s19, 2
      %s26 = sadd.s32 %s19, 1
      %s27 = ssub.s32 %s19, %s26
      %p28 = scmp.eq.s32.totalorder %s27, 0
      %s30 = sadd.s32 %s29, 1
      %s31 = scalar_select %p28, %s29, %s30
      %p34 = pneg %p28
      %p35 = scmp.eq.s32.totalorder %s19, 1
      %p36 = por %p34, %p35
      %p37 = scmp.ne.s32.totalorder %s29, %s32
      %p38 = scmp.eq.s32.totalorder %s19, 0
      %p39 = por %p37, %p38
      %p40 = scmp.ne.s32.totalorder %s29, %s32
      %p41 = scmp.eq.s32.totalorder %s24, 1
      %p42 = por %p40, %p41
      %p43 = scmp.ne.s32.totalorder %s32, %s33
      %p44 = scmp.eq.s32.totalorder %s24, 0
      %p45 = por %p43, %p44
      %p46 = scmp.ne.s32.totalorder %s32, %s33
      %p47 = scmp.eq.s32.totalorder %s25, 1
      %p48 = por %p46, %p47
      %p50 = scmp.ne.s32.totalorder %s33, %s49
      %p51 = scmp.eq.s32.totalorder %s25, 0
      %p52 = por %p50, %p51
      %s54 = sadd.s32 %s53, 1
      %p57 = scmp.eq.s32.totalorder %s19, 1
      %p58 = scmp.ne.s32.totalorder %s53, %s55
      %p59 = scmp.eq.s32.totalorder %s19, 0
      %p60 = por %p58, %p59
      %p61 = scmp.ne.s32.totalorder %s53, %s55
      %p62 = scmp.eq.s32.totalorder %s24, 1
      %p63 = por %p61, %p62
      %p64 = scmp.ne.s32.totalorder %s55, %s56
      %p65 = scmp.eq.s32.totalorder %s24, 0
      %p66 = por %p64, %p65
      %p67 = scmp.ne.s32.totalorder %s55, %s56
      %p68 = scmp.eq.s32.totalorder %s25, 1
      %p69 = por %p67, %p68
      %p71 = scmp.ne.s32.totalorder %s56, %s70
      %p72 = scmp.eq.s32.totalorder %s25, 0
      %p73 = por %p71, %p72
      %s75 = sadd.s32 %s74, 1
      %p78 = scmp.eq.s32.totalorder %s19, 1
      %p79 = scmp.ne.s32.totalorder %s74, %s76
      %p80 = scmp.eq.s32.totalorder %s19, 0
      %p81 = por %p79, %p80
      %p82 = scmp.ne.s32.totalorder %s74, %s76
      %p83 = scmp.eq.s32.totalorder %s24, 1
      %p84 = por %p82, %p83
      %p85 = scmp.ne.s32.totalorder %s76, %s77
      %p86 = scmp.eq.s32.totalorder %s24, 0
      %p87 = por %p85, %p86
      %p88 = scmp.ne.s32.totalorder %s76, %s77
      %p89 = scmp.eq.s32.totalorder %s25, 1
      %p90 = por %p88, %p89
      %p92 = scmp.ne.s32.totalorder %s77, %s91
      %p93 = scmp.eq.s32.totalorder %s25, 0
      %p94 = por %p92, %p93
      %s96 = sadd.s32 %s95, 1
      %p99 = scmp.eq.s32.totalorder %s19, 1
      %p100 = scmp.ne.s32.totalorder %s95, %s97
      %p101 = scmp.eq.s32.totalorder %s19, 0
      %p102 = por %p100, %p101
      %p103 = scmp.ne.s32.totalorder %s95, %s97
      %p104 = scmp.eq.s32.totalorder %s24, 1
      %p105 = por %p103, %p104
      %p106 = scmp.ne.s32.totalorder %s97, %s98
      %p107 = scmp.eq.s32.totalorder %s24, 0
      %p108 = por %p106, %p107
      %p109 = scmp.ne.s32.totalorder %s97, %s98
      %p110 = scmp.eq.s32.totalorder %s25, 1
      %p111 = por %p109, %p110
      %p113 = scmp.ne.s32.totalorder %s98, %s112
      %p114 = scmp.eq.s32.totalorder %s25, 0
      %p115 = por %p113, %p114
      %s117 = sadd.s32 %s116, 1
      %p120 = scmp.eq.s32.totalorder %s19, 1
      %p121 = scmp.ne.s32.totalorder %s116, %s118
      %p122 = scmp.eq.s32.totalorder %s19, 0
      %p123 = por %p121, %p122
      %p124 = scmp.ne.s32.totalorder %s116, %s118
      %p125 = scmp.eq.s32.totalorder %s24, 1
      %p126 = por %p124, %p125
      %p127 = scmp.ne.s32.totalorder %s118, %s119
      %p128 = scmp.eq.s32.totalorder %s24, 0
      %p129 = por %p127, %p128
      %p130 = scmp.ne.s32.totalorder %s118, %s119
      %p131 = scmp.eq.s32.totalorder %s25, 1
      %p132 = por %p130, %p131
      %p134 = scmp.ne.s32.totalorder %s119, %s133
      %p135 = scmp.eq.s32.totalorder %s25, 0
      %p136 = por %p134, %p135
      %s138 = sadd.s32 %s137, 1
      %p141 = scmp.eq.s32.totalorder %s19, 1
      %p142 = scmp.ne.s32.totalorder %s137, %s139
      %p143 = scmp.eq.s32.totalorder %s19, 0
      %p144 = por %p142, %p143
      %p145 = scmp.ne.s32.totalorder %s137, %s139
      %p146 = scmp.eq.s32.totalorder %s24, 1
      %p147 = por %p145, %p146
      %p148 = scmp.ne.s32.totalorder %s139, %s140
      %p149 = scmp.eq.s32.totalorder %s24, 0
      %p150 = por %p148, %p149
      %p151 = scmp.ne.s32.totalorder %s139, %s140
      %p152 = scmp.eq.s32.totalorder %s25, 1
      %p153 = por %p151, %p152
      %p155 = scmp.ne.s32.totalorder %s140, %s154
      %p156 = scmp.eq.s32.totalorder %s25, 0
      %p157 = por %p155, %p156
      %s159 = sadd.s32 %s158, 1
      %p162 = scmp.eq.s32.totalorder %s19, 1
      %p163 = scmp.ne.s32.totalorder %s158, %s160
      %p164 = scmp.eq.s32.totalorder %s19, 0
      %p165 = por %p163, %p164
      %p166 = scmp.ne.s32.totalorder %s158, %s160
      %p167 = scmp.eq.s32.totalorder %s24, 1
      %p168 = por %p166, %p167
      %p169 = scmp.ne.s32.totalorder %s160, %s161
      %p170 = scmp.eq.s32.totalorder %s24, 0
      %p171 = por %p169, %p170
      %p172 = scmp.ne.s32.totalorder %s160, %s161
      %p173 = scmp.eq.s32.totalorder %s25, 1
      %p174 = por %p172, %p173
      %p176 = scmp.ne.s32.totalorder %s161, %s175
      %p177 = scmp.eq.s32.totalorder %s25, 0
      %p178 = por %p176, %p177
      %s179 = ssub.s32 %s19, %s26
      %p180 = scmp.eq.s32.totalorder %s179, 0
      %s182 = sadd.s32 %s181, 1
      %s183 = scalar_select %p180, %s181, %s182
      %p186 = pneg %p180
      %p187 = scmp.eq.s32.totalorder %s19, 1
      %p188 = por %p186, %p187
      %p189 = scmp.ne.s32.totalorder %s181, %s184
      %p190 = scmp.eq.s32.totalorder %s19, 0
      %p191 = por %p189, %p190
      %p192 = scmp.ne.s32.totalorder %s181, %s184
      %p193 = scmp.eq.s32.totalorder %s24, 1
      %p194 = por %p192, %p193
      %p195 = scmp.ne.s32.totalorder %s184, %s185
      %p196 = scmp.eq.s32.totalorder %s24, 0
      %p197 = por %p195, %p196
      %p198 = scmp.ne.s32.totalorder %s184, %s185
      %p199 = scmp.eq.s32.totalorder %s25, 1
      %p200 = por %p198, %p199
      %p202 = scmp.ne.s32.totalorder %s185, %s201
      %p203 = scmp.eq.s32.totalorder %s25, 0
      %p204 = por %p202, %p203
      %p205 = scmp.le.s32.totalorder 1, %s19
      %p206 = scmp.lt.s32.totalorder %s19, 3
      %p207 = pnand %p205, %p206
      %p208 = pneg %p207
      // Predicated region
      $region9: #{tpu_custom_call.1} parent=5 // pred_check
        _
      $region10: #{tpu_custom_call.1} parent=5 // pred_check_branch
        %210 = sbr.rel (%p207) target = $region12
      $region11: #{tpu_custom_call.1} parent=5 // pred_region
        %s211 = ssub.s32 %s19, 1
        // Predicated region
        $region13: #{tpu_custom_call.1} parent=11 // pred_check
          %p212 = pneg %p66
        $region14: #{tpu_custom_call.1} parent=11 // pred_check_branch
          %214 = sbr.rel (%p212) target = $region16
        $region15: #{tpu_custom_call.1} parent=11 // pred_region
          _
        $region16: #{tpu_custom_call.1} parent=11 // pred_fallthru
          _
        // Predicated region
        $region17: #{tpu_custom_call.1} parent=11 // pred_check
          %p215 = pneg %p87
        $region18: #{tpu_custom_call.1} parent=11 // pred_check_branch
          %217 = sbr.rel (%p215) target = $region20
        $region19: #{tpu_custom_call.1} parent=11 // pred_region
          _
        $region20: #{tpu_custom_call.1} parent=11 // pred_fallthru
          _
        // Predicated region
        $region21: #{tpu_custom_call.1} parent=11 // pred_check
          %p218 = pneg %p108
        $region22: #{tpu_custom_call.1} parent=11 // pred_check_branch
          %220 = sbr.rel (%p218) target = $region24
        $region23: #{tpu_custom_call.1} parent=11 // pred_region
          _
        $region24: #{tpu_custom_call.1} parent=11 // pred_fallthru
          _
        // Predicated region
        $region25: #{tpu_custom_call.1} parent=11 // pred_check
          %p221 = pneg %p129
        $region26: #{tpu_custom_call.1} parent=11 // pred_check_branch
          %223 = sbr.rel (%p221) target = $region28
        $region27: #{tpu_custom_call.1} parent=11 // pred_region
          _
        $region28: #{tpu_custom_call.1} parent=11 // pred_fallthru
          _
        // Predicated region
        $region29: #{tpu_custom_call.1} parent=11 // pred_check
          %p224 = pneg %p150
        $region30: #{tpu_custom_call.1} parent=11 // pred_check_branch
          %226 = sbr.rel (%p224) target = $region32
        $region31: #{tpu_custom_call.1} parent=11 // pred_region
          _
        $region32: #{tpu_custom_call.1} parent=11 // pred_fallthru
          _
        // Predicated region
        $region33: #{tpu_custom_call.1} parent=11 // pred_check
          %p227 = pneg %p171
        $region34: #{tpu_custom_call.1} parent=11 // pred_check_branch
          %229 = sbr.rel (%p227) target = $region36
        $region35: #{tpu_custom_call.1} parent=11 // pred_region
          _
        $region36: #{tpu_custom_call.1} parent=11 // pred_fallthru
          _
      $region12: #{tpu_custom_call.1} parent=5 // pred_fallthru
        _
      %p230 = scmp.lt.s32.totalorder %s19, 2
      // Predicated region
      $region37: #{tpu_custom_call.1} parent=5 // pred_check
        %p231 = pneg %p230
      $region38: #{tpu_custom_call.1} parent=5 // pred_check_branch
        %233 = sbr.rel (%p231) target = $region40
      $region39: #{tpu_custom_call.1} parent=5 // pred_region
        // Predicated region
        $region41: #{tpu_custom_call.1} parent=39 // pred_check
          %p234 = pneg %p39
        $region42: #{tpu_custom_call.1} parent=39 // pred_check_branch
          %236 = sbr.rel (%p234) target = $region44
        $region43: #{tpu_custom_call.1} parent=39 // pred_region
          %s237 = sand.u32 %s29, 1
          %s238 = scalar_lea.sflag [#allocation4], %s237
          %s239 = sand.u32 %s29, 1
          %s240 = smul.addr %s239, 128
          %s241 = scalar_lea.vmem [#allocation3], %s240
          %s243 = ssub.s32 2048, 2048
          %244 = vsyncadd %s238, %s243
          %s245 = smul.addr %s19, 16
          %s246 = smul.addr %s245, 128
          %s247 = scalar_lea.hbm %s0, %s246
          %s248 = sshll.u32 %s241, 4
          %s249 = int_to_ptr.vmem [resolvable:$true] %s248
          %254 = dma.hbm_to_vmem [thread:$0]  %s247, 2048, %s249, %s238, 256, 256, 16
        $region44: #{tpu_custom_call.1} parent=39 // pred_fallthru
          _
      $region40: #{tpu_custom_call.1} parent=5 // pred_fallthru
        _
      %p255 = scmp.le.s32.totalorder 1, %s19
      %p256 = scmp.lt.s32.totalorder %s19, 3
      %p257 = pnand %p255, %p256
      %p258 = pneg %p257
      // Predicated region
      $region45: #{tpu_custom_call.1} parent=5 // pred_check
        _
      $region46: #{tpu_custom_call.1} parent=5 // pred_check_branch
        %260 = sbr.rel (%p257) target = $region48
      $region47: #{tpu_custom_call.1} parent=5 // pred_region
        %s261 = ssub.s32 %s19, 1
        %s262 = sand.u32 %s32, 1
        %s263 = scalar_lea.sflag [#allocation4], %s262
        %s264 = sand.u32 %s32, 1
        %s265 = smul.addr %s264, 128
        %s266 = scalar_lea.vmem [#allocation3], %s265
        // Predicated region
        $region49: #{tpu_custom_call.1} parent=47 // pred_check
          %p267 = pneg %p45
        $region50: #{tpu_custom_call.1} parent=47 // pred_check_branch
          %269 = sbr.rel (%p267) target = $region52
        $region51: #{tpu_custom_call.1} parent=47 // pred_region
          %270 = dma.done %s263, 2048
        $region52: #{tpu_custom_call.1} parent=47 // pred_fallthru
          _
        %s271 = sand.u32 %s32, 1
        %s272 = scalar_lea.sflag [#allocation4], %s271
        %s273 = sand.u32 %s32, 1
        %s274 = smul.addr %s273, 128
        %s275 = scalar_lea.vmem [#allocation3], %s274
        %p276 = pneg %p45
        %p277 = pneg %p42
        %p278 = pneg %p66
        %p279 = pneg %p63
        %p280 = pneg %p87
        %p281 = pneg %p84
        %p282 = pneg %p108
        %p283 = pneg %p105
        %p284 = pneg %p129
        %p285 = pneg %p126
        %p286 = pneg %p150
        %p287 = pneg %p147
        %p288 = pneg %p171
        %p289 = pneg %p168
        %p290 = pneg %p197
        %p291 = pneg %p194
        %s292 = sand.u32 %s184, 1
        %s293 = scalar_lea.sflag [#allocation5], %s292
        %s294 = sand.u32 %s184, 1
        %s295 = smul.addr %s294, 12
        %s296 = scalar_lea.vmem [#allocation6], %s295
        %p298 = scmp.eq.s32.totalorder %s24, 0
        // Predicated region
        $region53: #{tpu_custom_call.1} parent=47 // pred_check
          %p299 = pneg %p298
        $region54: #{tpu_custom_call.1} parent=47 // pred_check_branch
          %301 = sbr.rel (%p299) target = $region56
        $region55: #{tpu_custom_call.1} parent=47 // pred_region
          %302 = vst [vmem:[#allocation2] sm:$0xff] 0
          %303 = vst [vmem:[#allocation2 + $0x8] sm:$0xff] 0
          %vm304 = vcmask 572416
          %305 = vst.msk [vmem:[#allocation2 + $0x10] sm:$0xff] %vm304, 0
          %306 = vst [vmem:[#allocation2 + $0x18] sm:$0xff] 0
          %307 = vst [vmem:[#allocation2 + $0x20] sm:$0xff] 0
          %308 = vst.msk [vmem:[#allocation2 + $0x28] sm:$0xff] %vm304, 0
          %309 = vst [vmem:[#allocation2 + $0x30] sm:$0xff] 0
          %310 = vst [vmem:[#allocation2 + $0x38] sm:$0xff] 0
          %311 = vst.msk [vmem:[#allocation2 + $0x40] sm:$0xff] %vm304, 0
          %312 = vst [vmem:[#allocation2 + $0x48] sm:$0xff] 0
          %313 = vst [vmem:[#allocation2 + $0x50] sm:$0xff] 0
          %314 = vst.msk [vmem:[#allocation2 + $0x58] sm:$0xff] %vm304, 0
        $region56: #{tpu_custom_call.1} parent=47 // pred_fallthru
          _
        %v315 = vld [vmem:[%s266] sm:$0xff]
        %v316 = vld [vmem:[%s266 + $0x10] sm:$0xff]
        %v317 = vld [vmem:[%s266 + $0x20] sm:$0xff]
        %v318 = vld [vmem:[%s266 + $0x30] sm:$0xff]
        %v319 = vld [vmem:[%s266 + $0x40] sm:$0xff]
        %v320 = vld [vmem:[%s266 + $0x50] sm:$0xff]
        %v321 = vld [vmem:[%s266 + $0x60] sm:$0xff]
        %v322 = vld [vmem:[%s266 + $0x70] sm:$0xff]
        %323 = vadd.xlane.f32.xlu0 %v315
        %v324 = vpop.xlane.xlu0 %323
        %325 = vadd.xlane.f32.xlu0 %v316
        %v326 = vpop.xlane.xlu0 %325
        %327 = vadd.xlane.f32.xlu0 %v317
        %v328 = vpop.xlane.xlu0 %327
        %329 = vadd.xlane.f32.xlu0 %v318
        %v330 = vpop.xlane.xlu0 %329
        %331 = vadd.xlane.f32.xlu0 %v319
        %v332 = vpop.xlane.xlu0 %331
        %333 = vadd.xlane.f32.xlu0 %v320
        %v334 = vpop.xlane.xlu0 %333
        %335 = vadd.xlane.f32.xlu0 %v321
        %v336 = vpop.xlane.xlu0 %335
        %337 = vadd.xlane.f32.xlu0 %v322
        %v338 = vpop.xlane.xlu0 %337
        %v339 = vadd.f32 %v324, 0.0
        %v340 = vadd.f32 %v326, 0.0
        %v341 = vadd.f32 %v328, 0.0
        %v342 = vadd.f32 %v330, 0.0
        %v343 = vadd.f32 %v332, 0.0
        %v344 = vadd.f32 %v334, 0.0
        %v345 = vadd.f32 %v336, 0.0
        %v346 = vadd.f32 %v338, 0.0
        %v347 = vmul.f32 %v315, %v315
        %v348 = vmul.f32 %v316, %v316
        %v349 = vmul.f32 %v317, %v317
        %v350 = vmul.f32 %v318, %v318
        %v351 = vmul.f32 %v319, %v319
        %v352 = vmul.f32 %v320, %v320
        %v353 = vmul.f32 %v321, %v321
        %v354 = vmul.f32 %v322, %v322
        %355 = vadd.xlane.f32.xlu0 %v347
        %v356 = vpop.xlane.xlu0 %355
        %357 = vadd.xlane.f32.xlu0 %v348
        %v358 = vpop.xlane.xlu0 %357
        %359 = vadd.xlane.f32.xlu0 %v349
        %v360 = vpop.xlane.xlu0 %359
        %361 = vadd.xlane.f32.xlu0 %v350
        %v362 = vpop.xlane.xlu0 %361
        %363 = vadd.xlane.f32.xlu0 %v351
        %v364 = vpop.xlane.xlu0 %363
        %365 = vadd.xlane.f32.xlu0 %v352
        %v366 = vpop.xlane.xlu0 %365
        %367 = vadd.xlane.f32.xlu0 %v353
        %v368 = vpop.xlane.xlu0 %367
        %369 = vadd.xlane.f32.xlu0 %v354
        %v370 = vpop.xlane.xlu0 %369
        %v371 = vadd.f32 %v356, 0.0
        %v372 = vadd.f32 %v358, 0.0
        %v373 = vadd.f32 %v360, 0.0
        %v374 = vadd.f32 %v362, 0.0
        %v375 = vadd.f32 %v364, 0.0
        %v376 = vadd.f32 %v366, 0.0
        %v377 = vadd.f32 %v368, 0.0
        %v378 = vadd.f32 %v370, 0.0
        %v379 = vld [vmem:[%s266 + $0x8] sm:$0xff]
        %v380 = vld [vmem:[%s266 + $0x18] sm:$0xff]
        %v381 = vld [vmem:[%s266 + $0x28] sm:$0xff]
        %v382 = vld [vmem:[%s266 + $0x38] sm:$0xff]
        %v383 = vld [vmem:[%s266 + $0x48] sm:$0xff]
        %v384 = vld [vmem:[%s266 + $0x58] sm:$0xff]
        %v385 = vld [vmem:[%s266 + $0x68] sm:$0xff]
        %v386 = vld [vmem:[%s266 + $0x78] sm:$0xff]
        %387 = vadd.xlane.f32.xlu0 %v379
        %v388 = vpop.xlane.xlu0 %387
        %389 = vadd.xlane.f32.xlu0 %v380
        %v390 = vpop.xlane.xlu0 %389
        %391 = vadd.xlane.f32.xlu0 %v381
        %v392 = vpop.xlane.xlu0 %391
        %393 = vadd.xlane.f32.xlu0 %v382
        %v394 = vpop.xlane.xlu0 %393
        %395 = vadd.xlane.f32.xlu0 %v383
        %v396 = vpop.xlane.xlu0 %395
        %397 = vadd.xlane.f32.xlu0 %v384
        %v398 = vpop.xlane.xlu0 %397
        %399 = vadd.xlane.f32.xlu0 %v385
        %v400 = vpop.xlane.xlu0 %399
        %401 = vadd.xlane.f32.xlu0 %v386
        %v402 = vpop.xlane.xlu0 %401
        %v403 = vadd.f32 %v339, %v388
        %v404 = vadd.f32 %v340, %v390
        %v405 = vadd.f32 %v341, %v392
        %v406 = vadd.f32 %v342, %v394
        %v407 = vadd.f32 %v343, %v396
        %v408 = vadd.f32 %v344, %v398
        %v409 = vadd.f32 %v345, %v400
        %v410 = vadd.f32 %v346, %v402
        %v411 = vmul.f32 %v379, %v379
        %v412 = vmul.f32 %v380, %v380
        %v413 = vmul.f32 %v381, %v381
        %v414 = vmul.f32 %v382, %v382
        %v415 = vmul.f32 %v383, %v383
        %v416 = vmul.f32 %v384, %v384
        %v417 = vmul.f32 %v385, %v385
        %v418 = vmul.f32 %v386, %v386
        %419 = vadd.xlane.f32.xlu0 %v411
        %v420 = vpop.xlane.xlu0 %419
        %421 = vadd.xlane.f32.xlu0 %v412
        %v422 = vpop.xlane.xlu0 %421
        %423 = vadd.xlane.f32.xlu0 %v413
        %v424 = vpop.xlane.xlu0 %423
        %425 = vadd.xlane.f32.xlu0 %v414
        %v426 = vpop.xlane.xlu0 %425
        %427 = vadd.xlane.f32.xlu0 %v415
        %v428 = vpop.xlane.xlu0 %427
        %429 = vadd.xlane.f32.xlu0 %v416
        %v430 = vpop.xlane.xlu0 %429
        %431 = vadd.xlane.f32.xlu0 %v417
        %v432 = vpop.xlane.xlu0 %431
        %433 = vadd.xlane.f32.xlu0 %v418
        %v434 = vpop.xlane.xlu0 %433
        %v435 = vadd.f32 %v371, %v420
        %v436 = vadd.f32 %v372, %v422
        %v437 = vadd.f32 %v373, %v424
        %v438 = vadd.f32 %v374, %v426
        %v439 = vadd.f32 %v375, %v428
        %v440 = vadd.f32 %v376, %v430
        %v441 = vadd.f32 %v377, %v432
        %v442 = vadd.f32 %v378, %v434
        %v443 = vld [vmem:[%s3] sm:$0xff]
        %v444 = vld [vmem:[%s3 + $0x8] sm:$0xff]
        %v445 = vld [vmem:[%s3 + $0x10] sm:$0xff]
        %v446 = vld [vmem:[%s3 + $0x18] sm:$0xff]
        %vm447 = vcmask 523264
        %v449 = vsel %vm447, %v443, 0
        %v452 = vsel %vm447, %v444, 0
        %v455 = vsel %vm447, %v445, 0
        %v458 = vsel %vm447, %v446, 0
        %460 = vmatprep.subr.mxu0 0.0
        %461 = vmatpush1.msra.mxu0 %v403
        %462 = vmatprep.subr.mxu0 0.0
        %463 = vmatpush1.msra.mxu0 %v404
        %464 = vmatprep.subr.mxu0 0.0
        %465 = vmatpush1.msra.mxu0 %v405
        %466 = vmatprep.subr.mxu0 0.0
        %467 = vmatpush1.msra.mxu0 %v406
        %468 = vmatprep.subr.mxu0 0.0
        %469 = vmatpush1.msra.mxu0 %v407
        %470 = vmatprep.subr.mxu0 0.0
        %471 = vmatpush1.msra.mxu0 %v408
        %472 = vmatprep.subr.mxu0 0.0
        %473 = vmatpush1.msra.mxu0 %v409
        %474 = vmatprep.subr.mxu0 0.0
        %475 = vmatpush1.msra.mxu0 %v410
        %476 = vmatprep.subr.mxu0 0.0
        %477 = vmatpush1.msra.mxu0 0.0
        %478 = vmatprep.subr.mxu0 0.0
        %479 = vmatpush1.msra.mxu0 0.0
        %480 = vmatprep.subr.mxu0 0.0
        %481 = vmatpush1.msra.mxu0 0.0
        %482 = vmatprep.subr.mxu0 0.0
        %483 = vmatpush1.msra.mxu0 0.0
        %484 = vmatprep.subr.mxu0 0.0
        %485 = vmatpush1.msra.mxu0 0.0
        %486 = vmatprep.subr.mxu0 0.0
        %487 = vmatpush1.msra.mxu0 0.0
        %488 = vmatprep.subr.mxu0 0.0
        %489 = vmatpush1.msra.mxu0 0.0
        %490 = vmatprep.subr.mxu0 0.0
        %491 = vmatpush1.msra.mxu0 0.0
        %492 = vmatprep.subr.mxu0 0.0
        %493 = vmatpush1.msra.mxu0 0.0
        %494 = vmatprep.subr.mxu0 0.0
        %495 = vmatpush1.msra.mxu0 0.0
        %496 = vmatprep.subr.mxu0 0.0
        %497 = vmatpush1.msra.mxu0 0.0
        %498 = vmatprep.subr.mxu0 0.0
        %499 = vmatpush1.msra.mxu0 0.0
        %500 = vmatprep.subr.mxu0 0.0
        %501 = vmatpush1.msra.mxu0 0.0
        %502 = vmatprep.subr.mxu0 0.0
        %503 = vmatpush1.msra.mxu0 0.0
        %504 = vmatprep.subr.mxu0 0.0
        %505 = vmatpush1.msra.mxu0 0.0
        %506 = vmatprep.subr.mxu0 0.0
        %507 = vmatpush1.msra.mxu0 0.0
        %508 = vmatprep.subr.mxu0 0.0
        %509 = vmatpush1.msra.mxu0 0.0
        %510 = vmatprep.subr.mxu0 0.0
        %511 = vmatpush1.msra.mxu0 0.0
        %512 = vmatprep.subr.mxu0 0.0
        %513 = vmatpush1.msra.mxu0 0.0
        %514 = vmatprep.subr.mxu0 0.0
        %515 = vmatpush1.msra.mxu0 0.0
        %516 = vmatprep.subr.mxu0 0.0
        %517 = vmatpush1.msra.mxu0 0.0
        %518 = vmatprep.subr.mxu0 0.0
        %519 = vmatpush1.msra.mxu0 0.0
        %520 = vmatprep.subr.mxu0 0.0
        %521 = vmatpush1.msra.mxu0 0.0
        %522 = vmatprep.subr.mxu0 0.0
        %523 = vmatpush1.msra.mxu0 0.0
        %524 = vmatprep.mubr.f32.mxu0 0.0
        %525 = vmatmul.mubr.f32.gmra.mrb[0].mxu0 %v449
        %v526 = vpop.f32.mrb[0].mxu0
        %v527 = vadd.f32 0.0, %v526
        %v528 = vpop.f32.mrb[0].mxu0
        %529 = vmatprep.mubr.f32.mxu0 0.0
        %530 = vmatmul.mubr.f32.gmra.mrb[0].mxu0 %v452
        %v531 = vpop.f32.mrb[0].mxu0
        %v532 = vadd.f32 0.0, %v531
        %v533 = vpop.f32.mrb[0].mxu0
        %534 = vmatprep.mubr.f32.mxu0 0.0
        %535 = vmatmul.mubr.f32.gmra.mrb[0].mxu0 %v455
        %v536 = vpop.f32.mrb[0].mxu0
        %v537 = vadd.f32 0.0, %v536
        %v538 = vpop.f32.mrb[0].mxu0
        %539 = vmatprep.mubr.f32.mxu0 0.0
        %540 = vmatmul.mubr.f32.gmra.mrb[0].mxu0 %v458
        %v541 = vpop.f32.mrb[0].mxu0
        %v542 = vadd.f32 0.0, %v541
        %v543 = vpop.f32.mrb[0].mxu0
        %544 = vdwg.mxu0
        %545 = vmatprep.subr.mxu0 0.0
        %546 = vmatpush1.msra.mxu0 %v435
        %547 = vmatprep.subr.mxu0 0.0
        %548 = vmatpush1.msra.mxu0 %v436
        %549 = vmatprep.subr.mxu0 0.0
        %550 = vmatpush1.msra.mxu0 %v437
        %551 = vmatprep.subr.mxu0 0.0
        %552 = vmatpush1.msra.mxu0 %v438
        %553 = vmatprep.subr.mxu0 0.0
        %554 = vmatpush1.msra.mxu0 %v439
        %555 = vmatprep.subr.mxu0 0.0
        %556 = vmatpush1.msra.mxu0 %v440
        %557 = vmatprep.subr.mxu0 0.0
        %558 = vmatpush1.msra.mxu0 %v441
        %559 = vmatprep.subr.mxu0 0.0
        %560 = vmatpush1.msra.mxu0 %v442
        %561 = vmatprep.subr.mxu0 0.0
        %562 = vmatpush1.msra.mxu0 0.0
        %563 = vmatprep.subr.mxu0 0.0
        %564 = vmatpush1.msra.mxu0 0.0
        %565 = vmatprep.subr.mxu0 0.0
        %566 = vmatpush1.msra.mxu0 0.0
        %567 = vmatprep.subr.mxu0 0.0
        %568 = vmatpush1.msra.mxu0 0.0
        %569 = vmatprep.subr.mxu0 0.0
        %570 = vmatpush1.msra.mxu0 0.0
        %571 = vmatprep.subr.mxu0 0.0
        %572 = vmatpush1.msra.mxu0 0.0
        %573 = vmatprep.subr.mxu0 0.0
        %574 = vmatpush1.msra.mxu0 0.0
        %575 = vmatprep.subr.mxu0 0.0
        %576 = vmatpush1.msra.mxu0 0.0
        %577 = vmatprep.subr.mxu0 0.0
        %578 = vmatpush1.msra.mxu0 0.0
        %579 = vmatprep.subr.mxu0 0.0
        %580 = vmatpush1.msra.mxu0 0.0
        %581 = vmatprep.subr.mxu0 0.0
        %582 = vmatpush1.msra.mxu0 0.0
        %583 = vmatprep.subr.mxu0 0.0
        %584 = vmatpush1.msra.mxu0 0.0
        %585 = vmatprep.subr.mxu0 0.0
        %586 = vmatpush1.msra.mxu0 0.0
        %587 = vmatprep.subr.mxu0 0.0
        %588 = vmatpush1.msra.mxu0 0.0
        %589 = vmatprep.subr.mxu0 0.0
        %590 = vmatpush1.msra.mxu0 0.0
        %591 = vmatprep.subr.mxu0 0.0
        %592 = vmatpush1.msra.mxu0 0.0
        %593 = vmatprep.subr.mxu0 0.0
        %594 = vmatpush1.msra.mxu0 0.0
        %595 = vmatprep.subr.mxu0 0.0
        %596 = vmatpush1.msra.mxu0 0.0
        %597 = vmatprep.subr.mxu0 0.0
        %598 = vmatpush1.msra.mxu0 0.0
        %599 = vmatprep.subr.mxu0 0.0
        %600 = vmatpush1.msra.mxu0 0.0
        %601 = vmatprep.subr.mxu0 0.0
        %602 = vmatpush1.msra.mxu0 0.0
        %603 = vmatprep.subr.mxu0 0.0
        %604 = vmatpush1.msra.mxu0 0.0
        %605 = vmatprep.subr.mxu0 0.0
        %606 = vmatpush1.msra.mxu0 0.0
        %607 = vmatprep.subr.mxu0 0.0
        %608 = vmatpush1.msra.mxu0 0.0
        %609 = vmatprep.mubr.f32.mxu0 0.0
        %610 = vmatmul.mubr.f32.gmra.mrb[0].mxu0 %v449
        %v611 = vpop.f32.mrb[0].mxu0
        %v612 = vadd.f32 0.0, %v611
        %v613 = vpop.f32.mrb[0].mxu0
        %614 = vmatprep.mubr.f32.mxu0 0.0
        %615 = vmatmul.mubr.f32.gmra.mrb[0].mxu0 %v452
        %v616 = vpop.f32.mrb[0].mxu0
        %v617 = vadd.f32 0.0, %v616
        %v618 = vpop.f32.mrb[0].mxu0
        %619 = vmatprep.mubr.f32.mxu0 0.0
        %620 = vmatmul.mubr.f32.gmra.mrb[0].mxu0 %v455
        %v621 = vpop.f32.mrb[0].mxu0
        %v622 = vadd.f32 0.0, %v621
        %v623 = vpop.f32.mrb[0].mxu0
        %624 = vmatprep.mubr.f32.mxu0 0.0
        %625 = vmatmul.mubr.f32.gmra.mrb[0].mxu0 %v458
        %v626 = vpop.f32.mrb[0].mxu0
        %v627 = vadd.f32 0.0, %v626
        %v628 = vpop.f32.mrb[0].mxu0
        %629 = vdwg.mxu0
        %v630 = vmul.f32 %v527, 0.001953125
        %v631 = vmul.f32 %v532, 0.001953125
        %v632 = vmul.f32 %v537, 0.001953125
        %v633 = vmul.f32 %v542, 0.001953125
        %v634 = vmul.f32 %v612, 0.001953125
        %v635 = vmul.f32 %v617, 0.001953125
        %v636 = vmul.f32 %v622, 0.001953125
        %v637 = vmul.f32 %v627, 0.001953125
        %v638 = vmul.f32 %v630, %v630
        %v639 = vmul.f32 %v631, %v631
        %v640 = vmul.f32 %v632, %v632
        %v641 = vmul.f32 %v633, %v633
        %v642 = vsub.f32 %v634, %v638
        %v643 = vsub.f32 %v635, %v639
        %v644 = vsub.f32 %v636, %v640
        %v645 = vsub.f32 %v637, %v641
        %v646 = vadd.f32 %v642, 1e-05
        %v647 = vadd.f32 %v643, 1e-05
        %v648 = vadd.f32 %v644, 1e-05
        %v649 = vadd.f32 %v645, 1e-05
        %v650 = vrsqrt.pop %v646
        %v651 = vrsqrt.pop %v647
        %v652 = vrsqrt.pop %v648
        %v653 = vrsqrt.pop %v649
        %v654 = vld [vmem:[%s4] sm:$0xff]
        %v655 = vld [vmem:[%s4 + $0x8] sm:$0xff]
        %v656 = vld [vmem:[%s4 + $0x10] sm:$0xff]
        %v657 = vld [vmem:[%s4 + $0x18] sm:$0xff]
        %v658 = vld [vmem:[%s4 + $0x20] sm:$0xff]
        %v659 = vld [vmem:[%s4 + $0x28] sm:$0xff]
        %v660 = vld [vmem:[%s4 + $0x30] sm:$0xff]
        %v661 = vld [vmem:[%s4 + $0x38] sm:$0xff]
        %vm662 = vcmask 261120
        %v664 = vsel %vm662, %v654, 0
        %v667 = vsel %vm662, %v655, 0
        %v670 = vsel %vm662, %v656, 0
        %v673 = vsel %vm662, %v657, 0
        %v676 = vsel %vm662, %v658, 0
        %v679 = vsel %vm662, %v659, 0
        %v682 = vsel %vm662, %v660, 0
        %v685 = vsel %vm662, %v661, 0
        %687 = vmatprep.subr.mxu0 0.0
        %688 = vmatpush1.msra.mxu0 %v630
        %689 = vmatprep.subr.mxu0 0.0
        %690 = vmatpush1.msra.mxu0 %v631
        %691 = vmatprep.subr.mxu0 0.0
        %692 = vmatpush1.msra.mxu0 %v632
        %693 = vmatprep.subr.mxu0 0.0
        %694 = vmatpush1.msra.mxu0 %v633
        %695 = vmatprep.subr.mxu0 0.0
        %696 = vmatpush1.msra.mxu0 0.0
        %697 = vmatprep.subr.mxu0 0.0
        %698 = vmatpush1.msra.mxu0 0.0
        %699 = vmatprep.subr.mxu0 0.0
        %700 = vmatpush1.msra.mxu0 0.0
        %701 = vmatprep.subr.mxu0 0.0
        %702 = vmatpush1.msra.mxu0 0.0
        %703 = vmatprep.subr.mxu0 0.0
        %704 = vmatpush1.msra.mxu0 0.0
        %705 = vmatprep.subr.mxu0 0.0
        %706 = vmatpush1.msra.mxu0 0.0
        %707 = vmatprep.subr.mxu0 0.0
        %708 = vmatpush1.msra.mxu0 0.0
        %709 = vmatprep.subr.mxu0 0.0
        %710 = vmatpush1.msra.mxu0 0.0
        %711 = vmatprep.subr.mxu0 0.0
        %712 = vmatpush1.msra.mxu0 0.0
        %713 = vmatprep.subr.mxu0 0.0
        %714 = vmatpush1.msra.mxu0 0.0
        %715 = vmatprep.subr.mxu0 0.0
        %716 = vmatpush1.msra.mxu0 0.0
        %717 = vmatprep.subr.mxu0 0.0
        %718 = vmatpush1.msra.mxu0 0.0
        %719 = vmatprep.subr.mxu0 0.0
        %720 = vmatpush1.msra.mxu0 0.0
        %721 = vmatprep.subr.mxu0 0.0
        %722 = vmatpush1.msra.mxu0 0.0
        %723 = vmatprep.subr.mxu0 0.0
        %724 = vmatpush1.msra.mxu0 0.0
        %725 = vmatprep.subr.mxu0 0.0
        %726 = vmatpush1.msra.mxu0 0.0
        %727 = vmatprep.subr.mxu0 0.0
        %728 = vmatpush1.msra.mxu0 0.0
        %729 = vmatprep.subr.mxu0 0.0
        %730 = vmatpush1.msra.mxu0 0.0
        %731 = vmatprep.subr.mxu0 0.0
        %732 = vmatpush1.msra.mxu0 0.0
        %733 = vmatprep.subr.mxu0 0.0
        %734 = vmatpush1.msra.mxu0 0.0
        %735 = vmatprep.subr.mxu0 0.0
        %736 = vmatpush1.msra.mxu0 0.0
        %737 = vmatprep.subr.mxu0 0.0
        %738 = vmatpush1.msra.mxu0 0.0
        %739 = vmatprep.subr.mxu0 0.0
        %740 = vmatpush1.msra.mxu0 0.0
        %741 = vmatprep.subr.mxu0 0.0
        %742 = vmatpush1.msra.mxu0 0.0
        %743 = vmatprep.subr.mxu0 0.0
        %744 = vmatpush1.msra.mxu0 0.0
        %745 = vmatprep.subr.mxu0 0.0
        %746 = vmatpush1.msra.mxu0 0.0
        %747 = vmatprep.subr.mxu0 0.0
        %748 = vmatpush1.msra.mxu0 0.0
        %749 = vmatprep.subr.mxu0 0.0
        %750 = vmatpush1.msra.mxu0 0.0
        %751 = vmatprep.mubr.f32.mxu0 0.0
        %752 = vmatmul.mubr.f32.gmra.mrb[0].mxu0 %v664
        %v753 = vpop.f32.mrb[0].mxu0
        %v754 = vadd.f32 0.0, %v753
        %v755 = vpop.f32.mrb[0].mxu0
        %756 = vmatprep.mubr.f32.mxu0 0.0
        %757 = vmatmul.mubr.f32.gmra.mrb[0].mxu0 %v667
        %v758 = vpop.f32.mrb[0].mxu0
        %v759 = vadd.f32 0.0, %v758
        %v760 = vpop.f32.mrb[0].mxu0
        %761 = vmatprep.mubr.f32.mxu0 0.0
        %762 = vmatmul.mubr.f32.gmra.mrb[0].mxu0 %v670
        %v763 = vpop.f32.mrb[0].mxu0
        %v764 = vadd.f32 0.0, %v763
        %v765 = vpop.f32.mrb[0].mxu0
        %766 = vmatprep.mubr.f32.mxu0 0.0
        %767 = vmatmul.mubr.f32.gmra.mrb[0].mxu0 %v673
        %v768 = vpop.f32.mrb[0].mxu0
        %v769 = vadd.f32 0.0, %v768
        %v770 = vpop.f32.mrb[0].mxu0
        %771 = vmatprep.mubr.f32.mxu0 0.0
        %772 = vmatmul.mubr.f32.gmra.mrb[0].mxu0 %v676
        %v773 = vpop.f32.mrb[0].mxu0
        %v774 = vadd.f32 0.0, %v773
        %v775 = vpop.f32.mrb[0].mxu0
        %776 = vmatprep.mubr.f32.mxu0 0.0
        %777 = vmatmul.mubr.f32.gmra.mrb[0].mxu0 %v679
        %v778 = vpop.f32.mrb[0].mxu0
        %v779 = vadd.f32 0.0, %v778
        %v780 = vpop.f32.mrb[0].mxu0
        %781 = vmatprep.mubr.f32.mxu0 0.0
        %782 = vmatmul.mubr.f32.gmra.mrb[0].mxu0 %v682
        %v783 = vpop.f32.mrb[0].mxu0
        %v784 = vadd.f32 0.0, %v783
        %v785 = vpop.f32.mrb[0].mxu0
        %786 = vmatprep.mubr.f32.mxu0 0.0
        %787 = vmatmul.mubr.f32.gmra.mrb[0].mxu0 %v685
        %v788 = vpop.f32.mrb[0].mxu0
        %v789 = vadd.f32 0.0, %v788
        %v790 = vpop.f32.mrb[0].mxu0
        %791 = vdwg.mxu0
        %792 = vmatprep.subr.mxu0 0.0
        %793 = vmatpush1.msra.mxu0 %v650
        %794 = vmatprep.subr.mxu0 0.0
        %795 = vmatpush1.msra.mxu0 %v651
        %796 = vmatprep.subr.mxu0 0.0
        %797 = vmatpush1.msra.mxu0 %v652
        %798 = vmatprep.subr.mxu0 0.0
        %799 = vmatpush1.msra.mxu0 %v653
        %800 = vmatprep.subr.mxu0 0.0
        %801 = vmatpush1.msra.mxu0 0.0
        %802 = vmatprep.subr.mxu0 0.0
        %803 = vmatpush1.msra.mxu0 0.0
        %804 = vmatprep.subr.mxu0 0.0
        %805 = vmatpush1.msra.mxu0 0.0
        %806 = vmatprep.subr.mxu0 0.0
        %807 = vmatpush1.msra.mxu0 0.0
        %808 = vmatprep.subr.mxu0 0.0
        %809 = vmatpush1.msra.mxu0 0.0
        %810 = vmatprep.subr.mxu0 0.0
        %811 = vmatpush1.msra.mxu0 0.0
        %812 = vmatprep.subr.mxu0 0.0
        %813 = vmatpush1.msra.mxu0 0.0
        %814 = vmatprep.subr.mxu0 0.0
        %815 = vmatpush1.msra.mxu0 0.0
        %816 = vmatprep.subr.mxu0 0.0
        %817 = vmatpush1.msra.mxu0 0.0
        %818 = vmatprep.subr.mxu0 0.0
        %819 = vmatpush1.msra.mxu0 0.0
        %820 = vmatprep.subr.mxu0 0.0
        %821 = vmatpush1.msra.mxu0 0.0
        %822 = vmatprep.subr.mxu0 0.0
        %823 = vmatpush1.msra.mxu0 0.0
        %824 = vmatprep.subr.mxu0 0.0
        %825 = vmatpush1.msra.mxu0 0.0
        %826 = vmatprep.subr.mxu0 0.0
        %827 = vmatpush1.msra.mxu0 0.0
        %828 = vmatprep.subr.mxu0 0.0
        %829 = vmatpush1.msra.mxu0 0.0
        %830 = vmatprep.subr.mxu0 0.0
        %831 = vmatpush1.msra.mxu0 0.0
        %832 = vmatprep.subr.mxu0 0.0
        %833 = vmatpush1.msra.mxu0 0.0
        %834 = vmatprep.subr.mxu0 0.0
        %835 = vmatpush1.msra.mxu0 0.0
        %836 = vmatprep.subr.mxu0 0.0
        %837 = vmatpush1.msra.mxu0 0.0
        %838 = vmatprep.subr.mxu0 0.0
        %839 = vmatpush1.msra.mxu0 0.0
        %840 = vmatprep.subr.mxu0 0.0
        %841 = vmatpush1.msra.mxu0 0.0
        %842 = vmatprep.subr.mxu0 0.0
        %843 = vmatpush1.msra.mxu0 0.0
        %844 = vmatprep.subr.mxu0 0.0
        %845 = vmatpush1.msra.mxu0 0.0
        %846 = vmatprep.subr.mxu0 0.0
        %847 = vmatpush1.msra.mxu0 0.0
        %848 = vmatprep.subr.mxu0 0.0
        %849 = vmatpush1.msra.mxu0 0.0
        %850 = vmatprep.subr.mxu0 0.0
        %851 = vmatpush1.msra.mxu0 0.0
        %852 = vmatprep.subr.mxu0 0.0
        %853 = vmatpush1.msra.mxu0 0.0
        %854 = vmatprep.subr.mxu0 0.0
        %855 = vmatpush1.msra.mxu0 0.0
        %856 = vmatprep.mubr.f32.mxu0 0.0
        %857 = vmatmul.mubr.f32.gmra.mrb[0].mxu0 %v664
        %v858 = vpop.f32.mrb[0].mxu0
        %v859 = vadd.f32 0.0, %v858
        %v860 = vpop.f32.mrb[0].mxu0
        %861 = vmatprep.mubr.f32.mxu0 0.0
        %862 = vmatmul.mubr.f32.gmra.mrb[0].mxu0 %v667
        %v863 = vpop.f32.mrb[0].mxu0
        %v864 = vadd.f32 0.0, %v863
        %v865 = vpop.f32.mrb[0].mxu0
        %866 = vmatprep.mubr.f32.mxu0 0.0
        %867 = vmatmul.mubr.f32.gmra.mrb[0].mxu0 %v670
        %v868 = vpop.f32.mrb[0].mxu0
        %v869 = vadd.f32 0.0, %v868
        %v870 = vpop.f32.mrb[0].mxu0
        %871 = vmatprep.mubr.f32.mxu0 0.0
        %872 = vmatmul.mubr.f32.gmra.mrb[0].mxu0 %v673
        %v873 = vpop.f32.mrb[0].mxu0
        %v874 = vadd.f32 0.0, %v873
        %v875 = vpop.f32.mrb[0].mxu0
        %876 = vmatprep.mubr.f32.mxu0 0.0
        %877 = vmatmul.mubr.f32.gmra.mrb[0].mxu0 %v676
        %v878 = vpop.f32.mrb[0].mxu0
        %v879 = vadd.f32 0.0, %v878
        %v880 = vpop.f32.mrb[0].mxu0
        %881 = vmatprep.mubr.f32.mxu0 0.0
        %882 = vmatmul.mubr.f32.gmra.mrb[0].mxu0 %v679
        %v883 = vpop.f32.mrb[0].mxu0
        %v884 = vadd.f32 0.0, %v883
        %v885 = vpop.f32.mrb[0].mxu0
        %886 = vmatprep.mubr.f32.mxu0 0.0
        %887 = vmatmul.mubr.f32.gmra.mrb[0].mxu0 %v682
        %v888 = vpop.f32.mrb[0].mxu0
        %v889 = vadd.f32 0.0, %v888
        %v890 = vpop.f32.mrb[0].mxu0
        %891 = vmatprep.mubr.f32.mxu0 0.0
        %892 = vmatmul.mubr.f32.gmra.mrb[0].mxu0 %v685
        %v893 = vpop.f32.mrb[0].mxu0
        %v894 = vadd.f32 0.0, %v893
        %v895 = vpop.f32.mrb[0].mxu0
        %896 = vdwg.mxu0
        %v897 = vld [vmem:[%s1] sm:$0xff]
        %v898 = vld [vmem:[%s1 + $0x8] sm:$0xff]
        %v899 = vld [vmem:[%s1 + $0x10] sm:$0xff]
        %v900 = vld [vmem:[%s1 + $0x18] sm:$0xff]
        %v901 = vld [vmem:[%s1 + $0x20] sm:$0xff]
        %v902 = vld [vmem:[%s1 + $0x28] sm:$0xff]
        %v903 = vld [vmem:[%s1 + $0x30] sm:$0xff]
        %v904 = vld [vmem:[%s1 + $0x38] sm:$0xff]
        %v905 = vmul.f32 %v897, %v859
        %v906 = vmul.f32 %v898, %v864
        %v907 = vmul.f32 %v899, %v869
        %v908 = vmul.f32 %v900, %v874
        %v909 = vmul.f32 %v901, %v879
        %v910 = vmul.f32 %v902, %v884
        %v911 = vmul.f32 %v903, %v889
        %v912 = vmul.f32 %v904, %v894
        %v913 = vld [vmem:[%s2] sm:$0xff]
        %v914 = vld [vmem:[%s2 + $0x8] sm:$0xff]
        %v915 = vld [vmem:[%s2 + $0x10] sm:$0xff]
        %v916 = vld [vmem:[%s2 + $0x18] sm:$0xff]
        %v917 = vld [vmem:[%s2 + $0x20] sm:$0xff]
        %v918 = vld [vmem:[%s2 + $0x28] sm:$0xff]
        %v919 = vld [vmem:[%s2 + $0x30] sm:$0xff]
        %v920 = vld [vmem:[%s2 + $0x38] sm:$0xff]
        %v921 = vmul.f32 %v754, %v905
        %v922 = vmul.f32 %v759, %v906
        %v923 = vmul.f32 %v764, %v907
        %v924 = vmul.f32 %v769, %v908
        %v925 = vmul.f32 %v774, %v909
        %v926 = vmul.f32 %v779, %v910
        %v927 = vmul.f32 %v784, %v911
        %v928 = vmul.f32 %v789, %v912
        %v929 = vsub.f32 %v913, %v921
        %v930 = vsub.f32 %v914, %v922
        %v931 = vsub.f32 %v915, %v923
        %v932 = vsub.f32 %v916, %v924
        %v933 = vsub.f32 %v917, %v925
        %v934 = vsub.f32 %v918, %v926
        %v935 = vsub.f32 %v919, %v927
        %v936 = vsub.f32 %v920, %v928
        %938 = vset.pattern.permute.xlu0 0
        %939 = vperm.xlu0 %938, %v905
        %v940 = vpop.permute.xlu0 %939
        %943 = vset.pattern.permute.xlu0 0
        %944 = vperm.xlu0 %943, %v906
        %v945 = vpop.permute.xlu0 %944
        %948 = vset.pattern.permute.xlu0 0
        %949 = vperm.xlu0 %948, %v907
        %v950 = vpop.permute.xlu0 %949
        %953 = vset.pattern.permute.xlu0 0
        %954 = vperm.xlu0 %953, %v908
        %v955 = vpop.permute.xlu0 %954
        %958 = vset.pattern.permute.xlu0 0
        %959 = vperm.xlu0 %958, %v909
        %v960 = vpop.permute.xlu0 %959
        %963 = vset.pattern.permute.xlu0 0
        %964 = vperm.xlu0 %963, %v910
        %v965 = vpop.permute.xlu0 %964
        %968 = vset.pattern.permute.xlu0 0
        %969 = vperm.xlu0 %968, %v911
        %v970 = vpop.permute.xlu0 %969
        %973 = vset.pattern.permute.xlu0 0
        %974 = vperm.xlu0 %973, %v912
        %v975 = vpop.permute.xlu0 %974
        %v977 = vmul.f32 %v315, %v940
        %v978 = vmul.f32 %v316, %v945
        %v979 = vmul.f32 %v317, %v950
        %v980 = vmul.f32 %v318, %v955
        %v981 = vmul.f32 %v319, %v960
        %v982 = vmul.f32 %v320, %v965
        %v983 = vmul.f32 %v321, %v970
        %v984 = vmul.f32 %v322, %v975
        %986 = vset.pattern.permute.xlu0 0
        %987 = vperm.xlu0 %986, %v929
        %v988 = vpop.permute.xlu0 %987
        %991 = vset.pattern.permute.xlu0 0
        %992 = vperm.xlu0 %991, %v930
        %v993 = vpop.permute.xlu0 %992
        %996 = vset.pattern.permute.xlu0 0
        %997 = vperm.xlu0 %996, %v931
        %v998 = vpop.permute.xlu0 %997
        %1001 = vset.pattern.permute.xlu0 0
        %1002 = vperm.xlu0 %1001, %v932
        %v1003 = vpop.permute.xlu0 %1002
        %1006 = vset.pattern.permute.xlu0 0
        %1007 = vperm.xlu0 %1006, %v933
        %v1008 = vpop.permute.xlu0 %1007
        %1011 = vset.pattern.permute.xlu0 0
        %1012 = vperm.xlu0 %1011, %v934
        %v1013 = vpop.permute.xlu0 %1012
        %1016 = vset.pattern.permute.xlu0 0
        %1017 = vperm.xlu0 %1016, %v935
        %v1018 = vpop.permute.xlu0 %1017
        %1021 = vset.pattern.permute.xlu0 0
        %1022 = vperm.xlu0 %1021, %v936
        %v1023 = vpop.permute.xlu0 %1022
        %v1025 = vadd.f32 %v977, %v988
        %v1026 = vadd.f32 %v978, %v993
        %v1027 = vadd.f32 %v979, %v998
        %v1028 = vadd.f32 %v980, %v1003
        %v1029 = vadd.f32 %v981, %v1008
        %v1030 = vadd.f32 %v982, %v1013
        %v1031 = vadd.f32 %v983, %v1018
        %v1032 = vadd.f32 %v984, %v1023
        %v1033 = vxor.u32 %v1025, 2147483648
        %v1034 = vxor.u32 %v1026, 2147483648
        %v1035 = vxor.u32 %v1027, 2147483648
        %v1036 = vxor.u32 %v1028, 2147483648
        %v1037 = vxor.u32 %v1029, 2147483648
        %v1038 = vxor.u32 %v1030, 2147483648
        %v1039 = vxor.u32 %v1031, 2147483648
        %v1040 = vxor.u32 %v1032, 2147483648
        %v1041 = vmul.f32 %v1033, 1.442695
        %v1042 = vpow.pop %v1041
        %v1043 = vmul.f32 %v1034, 1.442695
        %v1044 = vpow.pop %v1043
        %v1045 = vmul.f32 %v1035, 1.442695
        %v1046 = vpow.pop %v1045
        %v1047 = vmul.f32 %v1036, 1.442695
        %v1048 = vpow.pop %v1047
        %v1049 = vmul.f32 %v1037, 1.442695
        %v1050 = vpow.pop %v1049
        %v1051 = vmul.f32 %v1038, 1.442695
        %v1052 = vpow.pop %v1051
        %v1053 = vmul.f32 %v1039, 1.442695
        %v1054 = vpow.pop %v1053
        %v1055 = vmul.f32 %v1040, 1.442695
        %v1056 = vpow.pop %v1055
        %v1057 = vadd.f32 %v1042, 1.0
        %v1058 = vadd.f32 %v1044, 1.0
        %v1059 = vadd.f32 %v1046, 1.0
        %v1060 = vadd.f32 %v1048, 1.0
        %v1061 = vadd.f32 %v1050, 1.0
        %v1062 = vadd.f32 %v1052, 1.0
        %v1063 = vadd.f32 %v1054, 1.0
        %v1064 = vadd.f32 %v1056, 1.0
        %v1065 = vrcp.pop %v1057
        %v1066 = vmul.f32 1.0, %v1065
        %v1067 = vrcp.pop %v1058
        %v1068 = vmul.f32 1.0, %v1067
        %v1069 = vrcp.pop %v1059
        %v1070 = vmul.f32 1.0, %v1069
        %v1071 = vrcp.pop %v1060
        %v1072 = vmul.f32 1.0, %v1071
        %v1073 = vrcp.pop %v1061
        %v1074 = vmul.f32 1.0, %v1073
        %v1075 = vrcp.pop %v1062
        %v1076 = vmul.f32 1.0, %v1075
        %v1077 = vrcp.pop %v1063
        %v1078 = vmul.f32 1.0, %v1077
        %v1079 = vrcp.pop %v1064
        %v1080 = vmul.f32 1.0, %v1079
        %v1081 = vmul.f32 %v1025, %v1066
        %v1082 = vmul.f32 %v1026, %v1068
        %v1083 = vmul.f32 %v1027, %v1070
        %v1084 = vmul.f32 %v1028, %v1072
        %v1085 = vmul.f32 %v1029, %v1074
        %v1086 = vmul.f32 %v1030, %v1076
        %v1087 = vmul.f32 %v1031, %v1078
        %v1088 = vmul.f32 %v1032, %v1080
        %v1089 = vpack.c.bf16 %v1082, %v1081
        %v1090 = vpack.c.bf16 %v1084, %v1083
        %v1091 = vpack.c.bf16 %v1086, %v1085
        %v1092 = vpack.c.bf16 %v1088, %v1087
        %1097 = vrot.lane.b32.xlu0 %v1089, 19
        %v1098 = vpop.permute.xlu0 %1097
        %1099 = vrot.lane.b32.xlu0 %v1090, 19
        %v1100 = vpop.permute.xlu0 %1099
        %1101 = vrot.lane.b32.xlu0 %v1091, 19
        %v1102 = vpop.permute.xlu0 %1101
        %1103 = vrot.lane.b32.xlu0 %v1092, 19
        %v1104 = vpop.permute.xlu0 %1103
        %vm1109 = vcmask 285848
        %1110 = vst.msk [vmem:[#allocation2] sm:$0xff] %vm1109, %v1098
        %1111 = vst.msk [vmem:[#allocation2 + $0x18] sm:$0xff] %vm1109, %v1100
        %1112 = vst.msk [vmem:[#allocation2 + $0x30] sm:$0xff] %vm1109, %v1102
        %1113 = vst.msk [vmem:[#allocation2 + $0x48] sm:$0xff] %vm1109, %v1104
        %1114 = vrot.lane.b32.xlu0 %v1089, 21
        %v1115 = vpop.permute.xlu0 %1114
        %1116 = vrot.lane.b32.xlu0 %v1090, 21
        %v1117 = vpop.permute.xlu0 %1116
        %1118 = vrot.lane.b32.xlu0 %v1091, 21
        %v1119 = vpop.permute.xlu0 %1118
        %1120 = vrot.lane.b32.xlu0 %v1092, 21
        %v1121 = vpop.permute.xlu0 %1120
        %vm1126 = vcmask 433448
        %1127 = vst.msk [vmem:[#allocation2] sm:$0xff] %vm1126, %v1115
        %1128 = vst.msk [vmem:[#allocation2 + $0x18] sm:$0xff] %vm1126, %v1117
        %1129 = vst.msk [vmem:[#allocation2 + $0x30] sm:$0xff] %vm1126, %v1119
        %1130 = vst.msk [vmem:[#allocation2 + $0x48] sm:$0xff] %vm1126, %v1121
        %1131 = vrot.lane.b32.xlu0 %v1089, 23
        %v1132 = vpop.permute.xlu0 %1131
        %1133 = vrot.lane.b32.xlu0 %v1090, 23
        %v1134 = vpop.permute.xlu0 %1133
        %1135 = vrot.lane.b32.xlu0 %v1091, 23
        %v1136 = vpop.permute.xlu0 %1135
        %1137 = vrot.lane.b32.xlu0 %v1092, 23
        %v1138 = vpop.permute.xlu0 %1137
        %vm1143 = vcmask 581048
        %1144 = vst.msk [vmem:[#allocation2] sm:$0xff] %vm1143, %v1132
        %1145 = vst.msk [vmem:[#allocation2 + $0x18] sm:$0xff] %vm1143, %v1134
        %1146 = vst.msk [vmem:[#allocation2 + $0x30] sm:$0xff] %vm1143, %v1136
        %1147 = vst.msk [vmem:[#allocation2 + $0x48] sm:$0xff] %vm1143, %v1138
        %1148 = vrot.lane.b32.xlu0 %v1089, 25
        %v1149 = vpop.permute.xlu0 %1148
        %1150 = vrot.lane.b32.xlu0 %v1090, 25
        %v1151 = vpop.permute.xlu0 %1150
        %1152 = vrot.lane.b32.xlu0 %v1091, 25
        %v1153 = vpop.permute.xlu0 %1152
        %1154 = vrot.lane.b32.xlu0 %v1092, 25
        %v1155 = vpop.permute.xlu0 %1154
        %vm1160 = vcmask 728648
        %1161 = vst.msk [vmem:[#allocation2] sm:$0xff] %vm1160, %v1149
        %1162 = vst.msk [vmem:[#allocation2 + $0x18] sm:$0xff] %vm1160, %v1151
        %1163 = vst.msk [vmem:[#allocation2 + $0x30] sm:$0xff] %vm1160, %v1153
        %1164 = vst.msk [vmem:[#allocation2 + $0x48] sm:$0xff] %vm1160, %v1155
        %1165 = vrot.lane.b32.xlu0 %v1089, 27
        %v1166 = vpop.permute.xlu0 %1165
        %1167 = vrot.lane.b32.xlu0 %v1090, 27
        %v1168 = vpop.permute.xlu0 %1167
        %1169 = vrot.lane.b32.xlu0 %v1091, 27
        %v1170 = vpop.permute.xlu0 %1169
        %1171 = vrot.lane.b32.xlu0 %v1092, 27
        %v1172 = vpop.permute.xlu0 %1171
        %vm1177 = vcmask 876248
        %1178 = vst.msk [vmem:[#allocation2] sm:$0xff] %vm1177, %v1166
        %1179 = vst.msk [vmem:[#allocation2 + $0x18] sm:$0xff] %vm1177, %v1168
        %1180 = vst.msk [vmem:[#allocation2 + $0x30] sm:$0xff] %vm1177, %v1170
        %1181 = vst.msk [vmem:[#allocation2 + $0x48] sm:$0xff] %vm1177, %v1172
        %1182 = vrot.lane.b32.xlu0 %v1089, 29
        %v1183 = vpop.permute.xlu0 %1182
        %1184 = vrot.lane.b32.xlu0 %v1090, 29
        %v1185 = vpop.permute.xlu0 %1184
        %1186 = vrot.lane.b32.xlu0 %v1091, 29
        %v1187 = vpop.permute.xlu0 %1186
        %1188 = vrot.lane.b32.xlu0 %v1092, 29
        %v1189 = vpop.permute.xlu0 %1188
        %vm1194 = vcmask 1023848
        %1195 = vst.msk [vmem:[#allocation2] sm:$0xff] %vm1194, %v1183
        %1196 = vst.msk [vmem:[#allocation2 + $0x18] sm:$0xff] %vm1194, %v1185
        %1197 = vst.msk [vmem:[#allocation2 + $0x30] sm:$0xff] %vm1194, %v1187
        %1198 = vst.msk [vmem:[#allocation2 + $0x48] sm:$0xff] %vm1194, %v1189
        %1199 = vrot.lane.b32.xlu0 %v1089, 31
        %v1200 = vpop.permute.xlu0 %1199
        %1201 = vrot.lane.b32.xlu0 %v1090, 31
        %v1202 = vpop.permute.xlu0 %1201
        %1203 = vrot.lane.b32.xlu0 %v1091, 31
        %v1204 = vpop.permute.xlu0 %1203
        %1205 = vrot.lane.b32.xlu0 %v1092, 31
        %v1206 = vpop.permute.xlu0 %1205
        %vm1211 = vcmask 1048568
        %1212 = vst.msk [vmem:[#allocation2] sm:$0xff] %vm1211, %v1200
        %vm1213 = vcmask 121856
        %1214 = vst.msk [vmem:[#allocation2 + $0x8] sm:$0xff] %vm1213, %v1200
        %1215 = vst.msk [vmem:[#allocation2 + $0x18] sm:$0xff] %vm1211, %v1202
        %1216 = vst.msk [vmem:[#allocation2 + $0x20] sm:$0xff] %vm1213, %v1202
        %1217 = vst.msk [vmem:[#allocation2 + $0x30] sm:$0xff] %vm1211, %v1204
        %1218 = vst.msk [vmem:[#allocation2 + $0x38] sm:$0xff] %vm1213, %v1204
        %1219 = vst.msk [vmem:[#allocation2 + $0x48] sm:$0xff] %vm1211, %v1206
        %1220 = vst.msk [vmem:[#allocation2 + $0x50] sm:$0xff] %vm1213, %v1206
        %1221 = vrot.lane.b32.xlu0 %v1089, 33
        %v1222 = vpop.permute.xlu0 %1221
        %1223 = vrot.lane.b32.xlu0 %v1090, 33
        %v1224 = vpop.permute.xlu0 %1223
        %1225 = vrot.lane.b32.xlu0 %v1091, 33
        %v1226 = vpop.permute.xlu0 %1225
        %1227 = vrot.lane.b32.xlu0 %v1092, 33
        %v1228 = vpop.permute.xlu0 %1227
        %vm1233 = vcmask 269448
        %1234 = vst.msk [vmem:[#allocation2 + $0x8] sm:$0xff] %vm1233, %v1222
        %1235 = vst.msk [vmem:[#allocation2 + $0x20] sm:$0xff] %vm1233, %v1224
        %1236 = vst.msk [vmem:[#allocation2 + $0x38] sm:$0xff] %vm1233, %v1226
        %1237 = vst.msk [vmem:[#allocation2 + $0x50] sm:$0xff] %vm1233, %v1228
        %v1238 = vld [vmem:[%s266 + $0x8] sm:$0xff]
        %v1239 = vld [vmem:[%s266 + $0x18] sm:$0xff]
        %v1240 = vld [vmem:[%s266 + $0x28] sm:$0xff]
        %v1241 = vld [vmem:[%s266 + $0x38] sm:$0xff]
        %v1242 = vld [vmem:[%s266 + $0x48] sm:$0xff]
        %v1243 = vld [vmem:[%s266 + $0x58] sm:$0xff]
        %v1244 = vld [vmem:[%s266 + $0x68] sm:$0xff]
        %v1245 = vld [vmem:[%s266 + $0x78] sm:$0xff]
        %v1246 = vmul.f32 %v1238, %v940
        %v1247 = vmul.f32 %v1239, %v945
        %v1248 = vmul.f32 %v1240, %v950
        %v1249 = vmul.f32 %v1241, %v955
        %v1250 = vmul.f32 %v1242, %v960
        %v1251 = vmul.f32 %v1243, %v965
        %v1252 = vmul.f32 %v1244, %v970
        %v1253 = vmul.f32 %v1245, %v975
        %v1254 = vadd.f32 %v1246, %v988
        %v1255 = vadd.f32 %v1247, %v993
        %v1256 = vadd.f32 %v1248, %v998
        %v1257 = vadd.f32 %v1249, %v1003
        %v1258 = vadd.f32 %v1250, %v1008
        %v1259 = vadd.f32 %v1251, %v1013
        %v1260 = vadd.f32 %v1252, %v1018
        %v1261 = vadd.f32 %v1253, %v1023
        %v1262 = vxor.u32 %v1254, 2147483648
        %v1263 = vxor.u32 %v1255, 2147483648
        %v1264 = vxor.u32 %v1256, 2147483648
        %v1265 = vxor.u32 %v1257, 2147483648
        %v1266 = vxor.u32 %v1258, 2147483648
        %v1267 = vxor.u32 %v1259, 2147483648
        %v1268 = vxor.u32 %v1260, 2147483648
        %v1269 = vxor.u32 %v1261, 2147483648
        %v1270 = vmul.f32 %v1262, 1.442695
        %v1271 = vpow.pop %v1270
        %v1272 = vmul.f32 %v1263, 1.442695
        %v1273 = vpow.pop %v1272
        %v1274 = vmul.f32 %v1264, 1.442695
        %v1275 = vpow.pop %v1274
        %v1276 = vmul.f32 %v1265, 1.442695
        %v1277 = vpow.pop %v1276
        %v1278 = vmul.f32 %v1266, 1.442695
        %v1279 = vpow.pop %v1278
        %v1280 = vmul.f32 %v1267, 1.442695
        %v1281 = vpow.pop %v1280
        %v1282 = vmul.f32 %v1268, 1.442695
        %v1283 = vpow.pop %v1282
        %v1284 = vmul.f32 %v1269, 1.442695
        %v1285 = vpow.pop %v1284
        %v1286 = vadd.f32 %v1271, 1.0
        %v1287 = vadd.f32 %v1273, 1.0
        %v1288 = vadd.f32 %v1275, 1.0
        %v1289 = vadd.f32 %v1277, 1.0
        %v1290 = vadd.f32 %v1279, 1.0
        %v1291 = vadd.f32 %v1281, 1.0
        %v1292 = vadd.f32 %v1283, 1.0
        %v1293 = vadd.f32 %v1285, 1.0
        %v1294 = vrcp.pop %v1286
        %v1295 = vmul.f32 1.0, %v1294
        %v1296 = vrcp.pop %v1287
        %v1297 = vmul.f32 1.0, %v1296
        %v1298 = vrcp.pop %v1288
        %v1299 = vmul.f32 1.0, %v1298
        %v1300 = vrcp.pop %v1289
        %v1301 = vmul.f32 1.0, %v1300
        %v1302 = vrcp.pop %v1290
        %v1303 = vmul.f32 1.0, %v1302
        %v1304 = vrcp.pop %v1291
        %v1305 = vmul.f32 1.0, %v1304
        %v1306 = vrcp.pop %v1292
        %v1307 = vmul.f32 1.0, %v1306
        %v1308 = vrcp.pop %v1293
        %v1309 = vmul.f32 1.0, %v1308
        %v1310 = vmul.f32 %v1254, %v1295
        %v1311 = vmul.f32 %v1255, %v1297
        %v1312 = vmul.f32 %v1256, %v1299
        %v1313 = vmul.f32 %v1257, %v1301
        %v1314 = vmul.f32 %v1258, %v1303
        %v1315 = vmul.f32 %v1259, %v1305
        %v1316 = vmul.f32 %v1260, %v1307
        %v1317 = vmul.f32 %v1261, %v1309
        %v1318 = vpack.c.bf16 %v1311, %v1310
        %v1319 = vpack.c.bf16 %v1313, %v1312
        %v1320 = vpack.c.bf16 %v1315, %v1314
        %v1321 = vpack.c.bf16 %v1317, %v1316
        %1326 = vrot.lane.b32.xlu0 %v1318, 35
        %v1327 = vpop.permute.xlu0 %1326
        %1328 = vrot.lane.b32.xlu0 %v1319, 35
        %v1329 = vpop.permute.xlu0 %1328
        %1330 = vrot.lane.b32.xlu0 %v1320, 35
        %v1331 = vpop.permute.xlu0 %1330
        %1332 = vrot.lane.b32.xlu0 %v1321, 35
        %v1333 = vpop.permute.xlu0 %1332
        %vm1338 = vcmask 417048
        %1339 = vst.msk [vmem:[#allocation2 + $0x8] sm:$0xff] %vm1338, %v1327
        %1340 = vst.msk [vmem:[#allocation2 + $0x20] sm:$0xff] %vm1338, %v1329
        %1341 = vst.msk [vmem:[#allocation2 + $0x38] sm:$0xff] %vm1338, %v1331
        %1342 = vst.msk [vmem:[#allocation2 + $0x50] sm:$0xff] %vm1338, %v1333
        %1343 = vrot.lane.b32.xlu0 %v1318, 37
        %v1344 = vpop.permute.xlu0 %1343
        %1345 = vrot.lane.b32.xlu0 %v1319, 37
        %v1346 = vpop.permute.xlu0 %1345
        %1347 = vrot.lane.b32.xlu0 %v1320, 37
        %v1348 = vpop.permute.xlu0 %1347
        %1349 = vrot.lane.b32.xlu0 %v1321, 37
        %v1350 = vpop.permute.xlu0 %1349
        %vm1355 = vcmask 564648
        %1356 = vst.msk [vmem:[#allocation2 + $0x8] sm:$0xff] %vm1355, %v1344
        %1357 = vst.msk [vmem:[#allocation2 + $0x20] sm:$0xff] %vm1355, %v1346
        %1358 = vst.msk [vmem:[#allocation2 + $0x38] sm:$0xff] %vm1355, %v1348
        %1359 = vst.msk [vmem:[#allocation2 + $0x50] sm:$0xff] %vm1355, %v1350
        %1360 = vrot.lane.b32.xlu0 %v1318, 39
        %v1361 = vpop.permute.xlu0 %1360
        %1362 = vrot.lane.b32.xlu0 %v1319, 39
        %v1363 = vpop.permute.xlu0 %1362
        %1364 = vrot.lane.b32.xlu0 %v1320, 39
        %v1365 = vpop.permute.xlu0 %1364
        %1366 = vrot.lane.b32.xlu0 %v1321, 39
        %v1367 = vpop.permute.xlu0 %1366
        %vm1372 = vcmask 712248
        %1373 = vst.msk [vmem:[#allocation2 + $0x8] sm:$0xff] %vm1372, %v1361
        %1374 = vst.msk [vmem:[#allocation2 + $0x20] sm:$0xff] %vm1372, %v1363
        %1375 = vst.msk [vmem:[#allocation2 + $0x38] sm:$0xff] %vm1372, %v1365
        %1376 = vst.msk [vmem:[#allocation2 + $0x50] sm:$0xff] %vm1372, %v1367
        %1377 = vrot.lane.b32.xlu0 %v1318, 41
        %v1378 = vpop.permute.xlu0 %1377
        %1379 = vrot.lane.b32.xlu0 %v1319, 41
        %v1380 = vpop.permute.xlu0 %1379
        %1381 = vrot.lane.b32.xlu0 %v1320, 41
        %v1382 = vpop.permute.xlu0 %1381
        %1383 = vrot.lane.b32.xlu0 %v1321, 41
        %v1384 = vpop.permute.xlu0 %1383
        %vm1389 = vcmask 859848
        %1390 = vst.msk [vmem:[#allocation2 + $0x8] sm:$0xff] %vm1389, %v1378
        %1391 = vst.msk [vmem:[#allocation2 + $0x20] sm:$0xff] %vm1389, %v1380
        %1392 = vst.msk [vmem:[#allocation2 + $0x38] sm:$0xff] %vm1389, %v1382
        %1393 = vst.msk [vmem:[#allocation2 + $0x50] sm:$0xff] %vm1389, %v1384
        %1394 = vrot.lane.b32.xlu0 %v1318, 43
        %v1395 = vpop.permute.xlu0 %1394
        %1396 = vrot.lane.b32.xlu0 %v1319, 43
        %v1397 = vpop.permute.xlu0 %1396
        %1398 = vrot.lane.b32.xlu0 %v1320, 43
        %v1399 = vpop.permute.xlu0 %1398
        %1400 = vrot.lane.b32.xlu0 %v1321, 43
        %v1401 = vpop.permute.xlu0 %1400
        %vm1406 = vcmask 1007448
        %1407 = vst.msk [vmem:[#allocation2 + $0x8] sm:$0xff] %vm1406, %v1395
        %1408 = vst.msk [vmem:[#allocation2 + $0x20] sm:$0xff] %vm1406, %v1397
        %1409 = vst.msk [vmem:[#allocation2 + $0x38] sm:$0xff] %vm1406, %v1399
        %1410 = vst.msk [vmem:[#allocation2 + $0x50] sm:$0xff] %vm1406, %v1401
        %1411 = vrot.lane.b32.xlu0 %v1318, 45
        %v1412 = vpop.permute.xlu0 %1411
        %1413 = vrot.lane.b32.xlu0 %v1319, 45
        %v1414 = vpop.permute.xlu0 %1413
        %1415 = vrot.lane.b32.xlu0 %v1320, 45
        %v1416 = vpop.permute.xlu0 %1415
        %1417 = vrot.lane.b32.xlu0 %v1321, 45
        %v1418 = vpop.permute.xlu0 %1417
        %vm1423 = vcmask 1048552
        %1424 = vst.msk [vmem:[#allocation2 + $0x8] sm:$0xff] %vm1423, %v1412
        %vm1425 = vcmask 105472
        %1426 = vst.msk [vmem:[#allocation2 + $0x10] sm:$0xff] %vm1425, %v1412
        %1427 = vst.msk [vmem:[#allocation2 + $0x20] sm:$0xff] %vm1423, %v1414
        %1428 = vst.msk [vmem:[#allocation2 + $0x28] sm:$0xff] %vm1425, %v1414
        %1429 = vst.msk [vmem:[#allocation2 + $0x38] sm:$0xff] %vm1423, %v1416
        %1430 = vst.msk [vmem:[#allocation2 + $0x40] sm:$0xff] %vm1425, %v1416
        %1431 = vst.msk [vmem:[#allocation2 + $0x50] sm:$0xff] %vm1423, %v1418
        %1432 = vst.msk [vmem:[#allocation2 + $0x58] sm:$0xff] %vm1425, %v1418
        %1433 = vrot.lane.b32.xlu0 %v1318, 47
        %v1434 = vpop.permute.xlu0 %1433
        %1435 = vrot.lane.b32.xlu0 %v1319, 47
        %v1436 = vpop.permute.xlu0 %1435
        %1437 = vrot.lane.b32.xlu0 %v1320, 47
        %v1438 = vpop.permute.xlu0 %1437
        %1439 = vrot.lane.b32.xlu0 %v1321, 47
        %v1440 = vpop.permute.xlu0 %1439
        %vm1445 = vcmask 253048
        %1446 = vst.msk [vmem:[#allocation2 + $0x10] sm:$0xff] %vm1445, %v1434
        %1447 = vst.msk [vmem:[#allocation2 + $0x28] sm:$0xff] %vm1445, %v1436
        %1448 = vst.msk [vmem:[#allocation2 + $0x40] sm:$0xff] %vm1445, %v1438
        %1449 = vst.msk [vmem:[#allocation2 + $0x58] sm:$0xff] %vm1445, %v1440
        %1450 = vrot.lane.b32.xlu0 %v1318, 49
        %v1451 = vpop.permute.xlu0 %1450
        %1452 = vrot.lane.b32.xlu0 %v1319, 49
        %v1453 = vpop.permute.xlu0 %1452
        %1454 = vrot.lane.b32.xlu0 %v1320, 49
        %v1455 = vpop.permute.xlu0 %1454
        %1456 = vrot.lane.b32.xlu0 %v1321, 49
        %v1457 = vpop.permute.xlu0 %1456
        %vm1462 = vcmask 400648
        %1463 = vst.msk [vmem:[#allocation2 + $0x10] sm:$0xff] %vm1462, %v1451
        %1464 = vst.msk [vmem:[#allocation2 + $0x28] sm:$0xff] %vm1462, %v1453
        %1465 = vst.msk [vmem:[#allocation2 + $0x40] sm:$0xff] %vm1462, %v1455
        %1466 = vst.msk [vmem:[#allocation2 + $0x58] sm:$0xff] %vm1462, %v1457
        %v1467 = vld [vmem:[%s5] sm:$0x3]
        %s1468 = scalar_lea.vmem %s5, 2
        %v1469 = vld [vmem:[%s1468] sm:$0x3]
        %s1470 = scalar_lea.vmem %s5, 4
        %v1471 = vld [vmem:[%s1470] sm:$0x3]
        %s1472 = scalar_lea.vmem %s5, 6
        %v1473 = vld [vmem:[%s1472] sm:$0x3]
        %s1474 = scalar_lea.vmem %s5, 8
        %v1475 = vld [vmem:[%s1474] sm:$0x3]
        %s1476 = scalar_lea.vmem %s5, 10
        %v1477 = vld [vmem:[%s1476] sm:$0x3]
        %s1478 = scalar_lea.vmem %s5, 12
        %v1479 = vld [vmem:[%s1478] sm:$0x3]
        %s1480 = scalar_lea.vmem %s5, 14
        %v1481 = vld [vmem:[%s1480] sm:$0x3]
        %s1482 = scalar_lea.vmem %s5, 16
        %v1483 = vld [vmem:[%s1482] sm:$0x3]
        %v1484 = vld [vmem:[%s6] sm:$0xf]
        %v1485 = vld [vmem:[#allocation2] sm:$0xff]
        %v1486 = vld [vmem:[#allocation2 + $0x8] sm:$0xff]
        %v1487 = vld [vmem:[#allocation2 + $0x18] sm:$0xff]
        %v1488 = vld [vmem:[#allocation2 + $0x20] sm:$0xff]
        %v1489 = vld [vmem:[#allocation2 + $0x30] sm:$0xff]
        %v1490 = vld [vmem:[#allocation2 + $0x38] sm:$0xff]
        %v1491 = vld [vmem:[#allocation2 + $0x48] sm:$0xff]
        %v1492 = vld [vmem:[#allocation2 + $0x50] sm:$0xff]
        %1501 = vrot.lane.b32.xlu0 %v1485, 127
        %v1502 = vpop.permute.xlu0 %1501
        %1503 = vrot.lane.b32.xlu0 %v1486, 127
        %v1504 = vpop.permute.xlu0 %1503
        %1505 = vrot.lane.b32.xlu0 %v1487, 127
        %v1506 = vpop.permute.xlu0 %1505
        %1507 = vrot.lane.b32.xlu0 %v1488, 127
        %v1508 = vpop.permute.xlu0 %1507
        %1509 = vrot.lane.b32.xlu0 %v1489, 127
        %v1510 = vpop.permute.xlu0 %1509
        %1511 = vrot.lane.b32.xlu0 %v1490, 127
        %v1512 = vpop.permute.xlu0 %1511
        %1513 = vrot.lane.b32.xlu0 %v1491, 127
        %v1514 = vpop.permute.xlu0 %1513
        %1515 = vrot.lane.b32.xlu0 %v1492, 127
        %v1516 = vpop.permute.xlu0 %1515
        %vm1517 = vcmask 1039360
        %v1518 = vsel %vm1517, %v1502, %v1504
        %v1519 = vsel %vm1517, %v1506, %v1508
        %v1520 = vsel %vm1517, %v1510, %v1512
        %v1521 = vsel %vm1517, %v1514, %v1516
        %v1531 = vsel %vm447, %v1469, 0
        %1533 = vmatprep.subr.bf16.mxu0 %v1504
        %1534 = vmatpush1.bf16.msra.mxu0 %v1518
        %1535 = vmatprep.subr.bf16.mxu0 %v1508
        %1536 = vmatpush1.bf16.msra.mxu0 %v1519
        %1537 = vmatprep.subr.bf16.mxu0 %v1512
        %1538 = vmatpush1.bf16.msra.mxu0 %v1520
        %1539 = vmatprep.subr.bf16.mxu0 %v1516
        %1540 = vmatpush1.bf16.msra.mxu0 %v1521
        %1541 = vmatprep.subr.bf16.mxu0 0
        %1542 = vmatpush1.bf16.msra.mxu0 0
        %1543 = vmatprep.subr.bf16.mxu0 0
        %1544 = vmatpush1.bf16.msra.mxu0 0
        %1545 = vmatprep.subr.bf16.mxu0 0
        %1546 = vmatpush1.bf16.msra.mxu0 0
        %1547 = vmatprep.subr.bf16.mxu0 0
        %1548 = vmatpush1.bf16.msra.mxu0 0
        %1549 = vmatprep.subr.bf16.mxu0 0
        %1550 = vmatpush1.bf16.msra.mxu0 0
        %1551 = vmatprep.subr.bf16.mxu0 0
        %1552 = vmatpush1.bf16.msra.mxu0 0
        %1553 = vmatprep.subr.bf16.mxu0 0
        %1554 = vmatpush1.bf16.msra.mxu0 0
        %1555 = vmatprep.subr.bf16.mxu0 0
        %1556 = vmatpush1.bf16.msra.mxu0 0
        %1557 = vmatprep.subr.bf16.mxu0 0
        %1558 = vmatpush1.bf16.msra.mxu0 0
        %1559 = vmatprep.subr.bf16.mxu0 0
        %1560 = vmatpush1.bf16.msra.mxu0 0
        %1561 = vmatprep.subr.bf16.mxu0 0
        %1562 = vmatpush1.bf16.msra.mxu0 0
        %1563 = vmatprep.subr.bf16.mxu0 0
        %1564 = vmatpush1.bf16.msra.mxu0 0
        %1565 = vmatprep.mubr.bf16.mxu0 0
        %1566 = vmatmul.mubr.bf16.gmra.mrb[0].mxu0 %v1531
        %v1567 = vpop.f32.mrb[0].mxu0
        %v1568 = vadd.f32 0.0, %v1567
        %v1569 = vpop.f32.mrb[0].mxu0
        %v1570 = vadd.f32 0.0, %v1569
        %v1571 = vpop.f32.mrb[0].mxu0
        %v1572 = vpop.f32.mrb[0].mxu0
        %1573 = vdwg.mxu0
        %v1575 = vsel %vm447, %v1467, 0
        %1577 = vmatprep.subr.bf16.mxu0 %v1486
        %1578 = vmatpush1.bf16.msra.mxu0 %v1485
        %1579 = vmatprep.subr.bf16.mxu0 %v1488
        %1580 = vmatpush1.bf16.msra.mxu0 %v1487
        %1581 = vmatprep.subr.bf16.mxu0 %v1490
        %1582 = vmatpush1.bf16.msra.mxu0 %v1489
        %1583 = vmatprep.subr.bf16.mxu0 %v1492
        %1584 = vmatpush1.bf16.msra.mxu0 %v1491
        %1585 = vmatprep.subr.bf16.mxu0 0
        %1586 = vmatpush1.bf16.msra.mxu0 0
        %1587 = vmatprep.subr.bf16.mxu0 0
        %1588 = vmatpush1.bf16.msra.mxu0 0
        %1589 = vmatprep.subr.bf16.mxu0 0
        %1590 = vmatpush1.bf16.msra.mxu0 0
        %1591 = vmatprep.subr.bf16.mxu0 0
        %1592 = vmatpush1.bf16.msra.mxu0 0
        %1593 = vmatprep.subr.bf16.mxu0 0
        %1594 = vmatpush1.bf16.msra.mxu0 0
        %1595 = vmatprep.subr.bf16.mxu0 0
        %1596 = vmatpush1.bf16.msra.mxu0 0
        %1597 = vmatprep.subr.bf16.mxu0 0
        %1598 = vmatpush1.bf16.msra.mxu0 0
        %1599 = vmatprep.subr.bf16.mxu0 0
        %1600 = vmatpush1.bf16.msra.mxu0 0
        %1601 = vmatprep.subr.bf16.mxu0 0
        %1602 = vmatpush1.bf16.msra.mxu0 0
        %1603 = vmatprep.subr.bf16.mxu0 0
        %1604 = vmatpush1.bf16.msra.mxu0 0
        %1605 = vmatprep.subr.bf16.mxu0 0
        %1606 = vmatpush1.bf16.msra.mxu0 0
        %1607 = vmatprep.subr.bf16.mxu0 0
        %1608 = vmatpush1.bf16.msra.mxu0 0
        %1609 = vmatprep.mubr.bf16.mxu0 0
        %1610 = vmatmul.mubr.bf16.gmra.mrb[0].mxu0 %v1575
        %v1611 = vpop.f32.mrb[0].mxu0
        %v1612 = vadd.f32 %v1568, %v1611
        %v1613 = vpop.f32.mrb[0].mxu0
        %v1614 = vadd.f32 %v1570, %v1613
        %v1615 = vpop.f32.mrb[0].mxu0
        %v1616 = vpop.f32.mrb[0].mxu0
        %1617 = vdwg.mxu0
        %1618 = vrot.lane.b32.xlu0 %v1485, 126
        %v1619 = vpop.permute.xlu0 %1618
        %1620 = vrot.lane.b32.xlu0 %v1486, 126
        %v1621 = vpop.permute.xlu0 %1620
        %1622 = vrot.lane.b32.xlu0 %v1487, 126
        %v1623 = vpop.permute.xlu0 %1622
        %1624 = vrot.lane.b32.xlu0 %v1488, 126
        %v1625 = vpop.permute.xlu0 %1624
        %1626 = vrot.lane.b32.xlu0 %v1489, 126
        %v1627 = vpop.permute.xlu0 %1626
        %1628 = vrot.lane.b32.xlu0 %v1490, 126
        %v1629 = vpop.permute.xlu0 %1628
        %1630 = vrot.lane.b32.xlu0 %v1491, 126
        %v1631 = vpop.permute.xlu0 %1630
        %1632 = vrot.lane.b32.xlu0 %v1492, 126
        %v1633 = vpop.permute.xlu0 %1632
        %vm1634 = vcmask 1031168
        %v1635 = vsel %vm1634, %v1619, %v1621
        %v1636 = vsel %vm1634, %v1623, %v1625
        %v1637 = vsel %vm1634, %v1627, %v1629
        %v1638 = vsel %vm1634, %v1631, %v1633
        %v1648 = vsel %vm447, %v1471, 0
        %1650 = vmatprep.subr.bf16.mxu0 %v1621
        %1651 = vmatpush1.bf16.msra.mxu0 %v1635
        %1652 = vmatprep.subr.bf16.mxu0 %v1625
        %1653 = vmatpush1.bf16.msra.mxu0 %v1636
        %1654 = vmatprep.subr.bf16.mxu0 %v1629
        %1655 = vmatpush1.bf16.msra.mxu0 %v1637
        %1656 = vmatprep.subr.bf16.mxu0 %v1633
        %1657 = vmatpush1.bf16.msra.mxu0 %v1638
        %1658 = vmatprep.subr.bf16.mxu0 0
        %1659 = vmatpush1.bf16.msra.mxu0 0
        %1660 = vmatprep.subr.bf16.mxu0 0
        %1661 = vmatpush1.bf16.msra.mxu0 0
        %1662 = vmatprep.subr.bf16.mxu0 0
        %1663 = vmatpush1.bf16.msra.mxu0 0
        %1664 = vmatprep.subr.bf16.mxu0 0
        %1665 = vmatpush1.bf16.msra.mxu0 0
        %1666 = vmatprep.subr.bf16.mxu0 0
        %1667 = vmatpush1.bf16.msra.mxu0 0
        %1668 = vmatprep.subr.bf16.mxu0 0
        %1669 = vmatpush1.bf16.msra.mxu0 0
        %1670 = vmatprep.subr.bf16.mxu0 0
        %1671 = vmatpush1.bf16.msra.mxu0 0
        %1672 = vmatprep.subr.bf16.mxu0 0
        %1673 = vmatpush1.bf16.msra.mxu0 0
        %1674 = vmatprep.subr.bf16.mxu0 0
        %1675 = vmatpush1.bf16.msra.mxu0 0
        %1676 = vmatprep.subr.bf16.mxu0 0
        %1677 = vmatpush1.bf16.msra.mxu0 0
        %1678 = vmatprep.subr.bf16.mxu0 0
        %1679 = vmatpush1.bf16.msra.mxu0 0
        %1680 = vmatprep.subr.bf16.mxu0 0
        %1681 = vmatpush1.bf16.msra.mxu0 0
        %1682 = vmatprep.mubr.bf16.mxu0 0
        %1683 = vmatmul.mubr.bf16.gmra.mrb[0].mxu0 %v1648
        %v1684 = vpop.f32.mrb[0].mxu0
        %v1685 = vadd.f32 0.0, %v1684
        %v1686 = vpop.f32.mrb[0].mxu0
        %v1687 = vadd.f32 0.0, %v1686
        %v1688 = vpop.f32.mrb[0].mxu0
        %v1689 = vpop.f32.mrb[0].mxu0
        %1690 = vdwg.mxu0
        %v1691 = vadd.f32 %v1612, %v1685
        %v1692 = vadd.f32 %v1614, %v1687
        %1693 = vrot.lane.b32.xlu0 %v1485, 110
        %v1694 = vpop.permute.xlu0 %1693
        %1695 = vrot.lane.b32.xlu0 %v1486, 110
        %v1696 = vpop.permute.xlu0 %1695
        %1697 = vrot.lane.b32.xlu0 %v1487, 110
        %v1698 = vpop.permute.xlu0 %1697
        %1699 = vrot.lane.b32.xlu0 %v1488, 110
        %v1700 = vpop.permute.xlu0 %1699
        %1701 = vrot.lane.b32.xlu0 %v1489, 110
        %v1702 = vpop.permute.xlu0 %1701
        %1703 = vrot.lane.b32.xlu0 %v1490, 110
        %v1704 = vpop.permute.xlu0 %1703
        %1705 = vrot.lane.b32.xlu0 %v1491, 110
        %v1706 = vpop.permute.xlu0 %1705
        %1707 = vrot.lane.b32.xlu0 %v1492, 110
        %v1708 = vpop.permute.xlu0 %1707
        %vm1709 = vcmask 900096
        %v1710 = vsel %vm1709, %v1694, %v1696
        %v1711 = vsel %vm1709, %v1698, %v1700
        %v1712 = vsel %vm1709, %v1702, %v1704
        %v1713 = vsel %vm1709, %v1706, %v1708
        %v1723 = vsel %vm447, %v1473, 0
        %1725 = vmatprep.subr.bf16.mxu0 %v1696
        %1726 = vmatpush1.bf16.msra.mxu0 %v1710
        %1727 = vmatprep.subr.bf16.mxu0 %v1700
        %1728 = vmatpush1.bf16.msra.mxu0 %v1711
        %1729 = vmatprep.subr.bf16.mxu0 %v1704
        %1730 = vmatpush1.bf16.msra.mxu0 %v1712
        %1731 = vmatprep.subr.bf16.mxu0 %v1708
        %1732 = vmatpush1.bf16.msra.mxu0 %v1713
        %1733 = vmatprep.subr.bf16.mxu0 0
        %1734 = vmatpush1.bf16.msra.mxu0 0
        %1735 = vmatprep.subr.bf16.mxu0 0
        %1736 = vmatpush1.bf16.msra.mxu0 0
        %1737 = vmatprep.subr.bf16.mxu0 0
        %1738 = vmatpush1.bf16.msra.mxu0 0
        %1739 = vmatprep.subr.bf16.mxu0 0
        %1740 = vmatpush1.bf16.msra.mxu0 0
        %1741 = vmatprep.subr.bf16.mxu0 0
        %1742 = vmatpush1.bf16.msra.mxu0 0
        %1743 = vmatprep.subr.bf16.mxu0 0
        %1744 = vmatpush1.bf16.msra.mxu0 0
        %1745 = vmatprep.subr.bf16.mxu0 0
        %1746 = vmatpush1.bf16.msra.mxu0 0
        %1747 = vmatprep.subr.bf16.mxu0 0
        %1748 = vmatpush1.bf16.msra.mxu0 0
        %1749 = vmatprep.subr.bf16.mxu0 0
        %1750 = vmatpush1.bf16.msra.mxu0 0
        %1751 = vmatprep.subr.bf16.mxu0 0
        %1752 = vmatpush1.bf16.msra.mxu0 0
        %1753 = vmatprep.subr.bf16.mxu0 0
        %1754 = vmatpush1.bf16.msra.mxu0 0
        %1755 = vmatprep.subr.bf16.mxu0 0
        %1756 = vmatpush1.bf16.msra.mxu0 0
        %1757 = vmatprep.mubr.bf16.mxu0 0
        %1758 = vmatmul.mubr.bf16.gmra.mrb[0].mxu0 %v1723
        %v1759 = vpop.f32.mrb[0].mxu0
        %v1760 = vadd.f32 0.0, %v1759
        %v1761 = vpop.f32.mrb[0].mxu0
        %v1762 = vadd.f32 0.0, %v1761
        %v1763 = vpop.f32.mrb[0].mxu0
        %v1764 = vpop.f32.mrb[0].mxu0
        %1765 = vdwg.mxu0
        %v1766 = vadd.f32 %v1691, %v1760
        %v1767 = vadd.f32 %v1692, %v1762
        %1768 = vrot.lane.b32.xlu0 %v1485, 109
        %v1769 = vpop.permute.xlu0 %1768
        %1770 = vrot.lane.b32.xlu0 %v1486, 109
        %v1771 = vpop.permute.xlu0 %1770
        %1772 = vrot.lane.b32.xlu0 %v1487, 109
        %v1773 = vpop.permute.xlu0 %1772
        %1774 = vrot.lane.b32.xlu0 %v1488, 109
        %v1775 = vpop.permute.xlu0 %1774
        %1776 = vrot.lane.b32.xlu0 %v1489, 109
        %v1777 = vpop.permute.xlu0 %1776
        %1778 = vrot.lane.b32.xlu0 %v1490, 109
        %v1779 = vpop.permute.xlu0 %1778
        %1780 = vrot.lane.b32.xlu0 %v1491, 109
        %v1781 = vpop.permute.xlu0 %1780
        %1782 = vrot.lane.b32.xlu0 %v1492, 109
        %v1783 = vpop.permute.xlu0 %1782
        %vm1784 = vcmask 891904
        %v1785 = vsel %vm1784, %v1769, %v1771
        %v1786 = vsel %vm1784, %v1773, %v1775
        %v1787 = vsel %vm1784, %v1777, %v1779
        %v1788 = vsel %vm1784, %v1781, %v1783
        %v1798 = vsel %vm447, %v1475, 0
        %1800 = vmatprep.subr.bf16.mxu0 %v1771
        %1801 = vmatpush1.bf16.msra.mxu0 %v1785
        %1802 = vmatprep.subr.bf16.mxu0 %v1775
        %1803 = vmatpush1.bf16.msra.mxu0 %v1786
        %1804 = vmatprep.subr.bf16.mxu0 %v1779
        %1805 = vmatpush1.bf16.msra.mxu0 %v1787
        %1806 = vmatprep.subr.bf16.mxu0 %v1783
        %1807 = vmatpush1.bf16.msra.mxu0 %v1788
        %1808 = vmatprep.subr.bf16.mxu0 0
        %1809 = vmatpush1.bf16.msra.mxu0 0
        %1810 = vmatprep.subr.bf16.mxu0 0
        %1811 = vmatpush1.bf16.msra.mxu0 0
        %1812 = vmatprep.subr.bf16.mxu0 0
        %1813 = vmatpush1.bf16.msra.mxu0 0
        %1814 = vmatprep.subr.bf16.mxu0 0
        %1815 = vmatpush1.bf16.msra.mxu0 0
        %1816 = vmatprep.subr.bf16.mxu0 0
        %1817 = vmatpush1.bf16.msra.mxu0 0
        %1818 = vmatprep.subr.bf16.mxu0 0
        %1819 = vmatpush1.bf16.msra.mxu0 0
        %1820 = vmatprep.subr.bf16.mxu0 0
        %1821 = vmatpush1.bf16.msra.mxu0 0
        %1822 = vmatprep.subr.bf16.mxu0 0
        %1823 = vmatpush1.bf16.msra.mxu0 0
        %1824 = vmatprep.subr.bf16.mxu0 0
        %1825 = vmatpush1.bf16.msra.mxu0 0
        %1826 = vmatprep.subr.bf16.mxu0 0
        %1827 = vmatpush1.bf16.msra.mxu0 0
        %1828 = vmatprep.subr.bf16.mxu0 0
        %1829 = vmatpush1.bf16.msra.mxu0 0
        %1830 = vmatprep.subr.bf16.mxu0 0
        %1831 = vmatpush1.bf16.msra.mxu0 0
        %1832 = vmatprep.mubr.bf16.mxu0 0
        %1833 = vmatmul.mubr.bf16.gmra.mrb[0].mxu0 %v1798
        %v1834 = vpop.f32.mrb[0].mxu0
        %v1835 = vadd.f32 0.0, %v1834
        %v1836 = vpop.f32.mrb[0].mxu0
        %v1837 = vadd.f32 0.0, %v1836
        %v1838 = vpop.f32.mrb[0].mxu0
        %v1839 = vpop.f32.mrb[0].mxu0
        %1840 = vdwg.mxu0
        %v1841 = vadd.f32 %v1766, %v1835
        %v1842 = vadd.f32 %v1767, %v1837
        %1843 = vrot.lane.b32.xlu0 %v1485, 108
        %v1844 = vpop.permute.xlu0 %1843
        %1845 = vrot.lane.b32.xlu0 %v1486, 108
        %v1846 = vpop.permute.xlu0 %1845
        %1847 = vrot.lane.b32.xlu0 %v1487, 108
        %v1848 = vpop.permute.xlu0 %1847
        %1849 = vrot.lane.b32.xlu0 %v1488, 108
        %v1850 = vpop.permute.xlu0 %1849
        %1851 = vrot.lane.b32.xlu0 %v1489, 108
        %v1852 = vpop.permute.xlu0 %1851
        %1853 = vrot.lane.b32.xlu0 %v1490, 108
        %v1854 = vpop.permute.xlu0 %1853
        %1855 = vrot.lane.b32.xlu0 %v1491, 108
        %v1856 = vpop.permute.xlu0 %1855
        %1857 = vrot.lane.b32.xlu0 %v1492, 108
        %v1858 = vpop.permute.xlu0 %1857
        %vm1859 = vcmask 883712
        %v1860 = vsel %vm1859, %v1844, %v1846
        %v1861 = vsel %vm1859, %v1848, %v1850
        %v1862 = vsel %vm1859, %v1852, %v1854
        %v1863 = vsel %vm1859, %v1856, %v1858
        %v1873 = vsel %vm447, %v1477, 0
        %1875 = vmatprep.subr.bf16.mxu0 %v1846
        %1876 = vmatpush1.bf16.msra.mxu0 %v1860
        %1877 = vmatprep.subr.bf16.mxu0 %v1850
        %1878 = vmatpush1.bf16.msra.mxu0 %v1861
        %1879 = vmatprep.subr.bf16.mxu0 %v1854
        %1880 = vmatpush1.bf16.msra.mxu0 %v1862
        %1881 = vmatprep.subr.bf16.mxu0 %v1858
        %1882 = vmatpush1.bf16.msra.mxu0 %v1863
        %1883 = vmatprep.subr.bf16.mxu0 0
        %1884 = vmatpush1.bf16.msra.mxu0 0
        %1885 = vmatprep.subr.bf16.mxu0 0
        %1886 = vmatpush1.bf16.msra.mxu0 0
        %1887 = vmatprep.subr.bf16.mxu0 0
        %1888 = vmatpush1.bf16.msra.mxu0 0
        %1889 = vmatprep.subr.bf16.mxu0 0
        %1890 = vmatpush1.bf16.msra.mxu0 0
        %1891 = vmatprep.subr.bf16.mxu0 0
        %1892 = vmatpush1.bf16.msra.mxu0 0
        %1893 = vmatprep.subr.bf16.mxu0 0
        %1894 = vmatpush1.bf16.msra.mxu0 0
        %1895 = vmatprep.subr.bf16.mxu0 0
        %1896 = vmatpush1.bf16.msra.mxu0 0
        %1897 = vmatprep.subr.bf16.mxu0 0
        %1898 = vmatpush1.bf16.msra.mxu0 0
        %1899 = vmatprep.subr.bf16.mxu0 0
        %1900 = vmatpush1.bf16.msra.mxu0 0
        %1901 = vmatprep.subr.bf16.mxu0 0
        %1902 = vmatpush1.bf16.msra.mxu0 0
        %1903 = vmatprep.subr.bf16.mxu0 0
        %1904 = vmatpush1.bf16.msra.mxu0 0
        %1905 = vmatprep.subr.bf16.mxu0 0
        %1906 = vmatpush1.bf16.msra.mxu0 0
        %1907 = vmatprep.mubr.bf16.mxu0 0
        %1908 = vmatmul.mubr.bf16.gmra.mrb[0].mxu0 %v1873
        %v1909 = vpop.f32.mrb[0].mxu0
        %v1910 = vadd.f32 0.0, %v1909
        %v1911 = vpop.f32.mrb[0].mxu0
        %v1912 = vadd.f32 0.0, %v1911
        %v1913 = vpop.f32.mrb[0].mxu0
        %v1914 = vpop.f32.mrb[0].mxu0
        %1915 = vdwg.mxu0
        %v1916 = vadd.f32 %v1841, %v1910
        %v1917 = vadd.f32 %v1842, %v1912
        %1918 = vrot.lane.b32.xlu0 %v1485, 92
        %v1919 = vpop.permute.xlu0 %1918
        %1920 = vrot.lane.b32.xlu0 %v1486, 92
        %v1921 = vpop.permute.xlu0 %1920
        %1922 = vrot.lane.b32.xlu0 %v1487, 92
        %v1923 = vpop.permute.xlu0 %1922
        %1924 = vrot.lane.b32.xlu0 %v1488, 92
        %v1925 = vpop.permute.xlu0 %1924
        %1926 = vrot.lane.b32.xlu0 %v1489, 92
        %v1927 = vpop.permute.xlu0 %1926
        %1928 = vrot.lane.b32.xlu0 %v1490, 92
        %v1929 = vpop.permute.xlu0 %1928
        %1930 = vrot.lane.b32.xlu0 %v1491, 92
        %v1931 = vpop.permute.xlu0 %1930
        %1932 = vrot.lane.b32.xlu0 %v1492, 92
        %v1933 = vpop.permute.xlu0 %1932
        %vm1934 = vcmask 752640
        %v1935 = vsel %vm1934, %v1919, %v1921
        %v1936 = vsel %vm1934, %v1923, %v1925
        %v1937 = vsel %vm1934, %v1927, %v1929
        %v1938 = vsel %vm1934, %v1931, %v1933
        %v1948 = vsel %vm447, %v1479, 0
        %1950 = vmatprep.subr.bf16.mxu0 %v1921
        %1951 = vmatpush1.bf16.msra.mxu0 %v1935
        %1952 = vmatprep.subr.bf16.mxu0 %v1925
        %1953 = vmatpush1.bf16.msra.mxu0 %v1936
        %1954 = vmatprep.subr.bf16.mxu0 %v1929
        %1955 = vmatpush1.bf16.msra.mxu0 %v1937
        %1956 = vmatprep.subr.bf16.mxu0 %v1933
        %1957 = vmatpush1.bf16.msra.mxu0 %v1938
        %1958 = vmatprep.subr.bf16.mxu0 0
        %1959 = vmatpush1.bf16.msra.mxu0 0
        %1960 = vmatprep.subr.bf16.mxu0 0
        %1961 = vmatpush1.bf16.msra.mxu0 0
        %1962 = vmatprep.subr.bf16.mxu0 0
        %1963 = vmatpush1.bf16.msra.mxu0 0
        %1964 = vmatprep.subr.bf16.mxu0 0
        %1965 = vmatpush1.bf16.msra.mxu0 0
        %1966 = vmatprep.subr.bf16.mxu0 0
        %1967 = vmatpush1.bf16.msra.mxu0 0
        %1968 = vmatprep.subr.bf16.mxu0 0
        %1969 = vmatpush1.bf16.msra.mxu0 0
        %1970 = vmatprep.subr.bf16.mxu0 0
        %1971 = vmatpush1.bf16.msra.mxu0 0
        %1972 = vmatprep.subr.bf16.mxu0 0
        %1973 = vmatpush1.bf16.msra.mxu0 0
        %1974 = vmatprep.subr.bf16.mxu0 0
        %1975 = vmatpush1.bf16.msra.mxu0 0
        %1976 = vmatprep.subr.bf16.mxu0 0
        %1977 = vmatpush1.bf16.msra.mxu0 0
        %1978 = vmatprep.subr.bf16.mxu0 0
        %1979 = vmatpush1.bf16.msra.mxu0 0
        %1980 = vmatprep.subr.bf16.mxu0 0
        %1981 = vmatpush1.bf16.msra.mxu0 0
        %1982 = vmatprep.mubr.bf16.mxu0 0
        %1983 = vmatmul.mubr.bf16.gmra.mrb[0].mxu0 %v1948
        %v1984 = vpop.f32.mrb[0].mxu0
        %v1985 = vadd.f32 0.0, %v1984
        %v1986 = vpop.f32.mrb[0].mxu0
        %v1987 = vadd.f32 0.0, %v1986
        %v1988 = vpop.f32.mrb[0].mxu0
        %v1989 = vpop.f32.mrb[0].mxu0
        %1990 = vdwg.mxu0
        %v1991 = vadd.f32 %v1916, %v1985
        %v1992 = vadd.f32 %v1917, %v1987
        %1993 = vrot.lane.b32.xlu0 %v1485, 91
        %v1994 = vpop.permute.xlu0 %1993
        %1995 = vrot.lane.b32.xlu0 %v1486, 91
        %v1996 = vpop.permute.xlu0 %1995
        %1997 = vrot.lane.b32.xlu0 %v1487, 91
        %v1998 = vpop.permute.xlu0 %1997
        %1999 = vrot.lane.b32.xlu0 %v1488, 91
        %v2000 = vpop.permute.xlu0 %1999
        %2001 = vrot.lane.b32.xlu0 %v1489, 91
        %v2002 = vpop.permute.xlu0 %2001
        %2003 = vrot.lane.b32.xlu0 %v1490, 91
        %v2004 = vpop.permute.xlu0 %2003
        %2005 = vrot.lane.b32.xlu0 %v1491, 91
        %v2006 = vpop.permute.xlu0 %2005
        %2007 = vrot.lane.b32.xlu0 %v1492, 91
        %v2008 = vpop.permute.xlu0 %2007
        %vm2009 = vcmask 744448
        %v2010 = vsel %vm2009, %v1994, %v1996
        %v2011 = vsel %vm2009, %v1998, %v2000
        %v2012 = vsel %vm2009, %v2002, %v2004
        %v2013 = vsel %vm2009, %v2006, %v2008
        %v2023 = vsel %vm447, %v1481, 0
        %2025 = vmatprep.subr.bf16.mxu0 %v1996
        %2026 = vmatpush1.bf16.msra.mxu0 %v2010
        %2027 = vmatprep.subr.bf16.mxu0 %v2000
        %2028 = vmatpush1.bf16.msra.mxu0 %v2011
        %2029 = vmatprep.subr.bf16.mxu0 %v2004
        %2030 = vmatpush1.bf16.msra.mxu0 %v2012
        %2031 = vmatprep.subr.bf16.mxu0 %v2008
        %2032 = vmatpush1.bf16.msra.mxu0 %v2013
        %2033 = vmatprep.subr.bf16.mxu0 0
        %2034 = vmatpush1.bf16.msra.mxu0 0
        %2035 = vmatprep.subr.bf16.mxu0 0
        %2036 = vmatpush1.bf16.msra.mxu0 0
        %2037 = vmatprep.subr.bf16.mxu0 0
        %2038 = vmatpush1.bf16.msra.mxu0 0
        %2039 = vmatprep.subr.bf16.mxu0 0
        %2040 = vmatpush1.bf16.msra.mxu0 0
        %2041 = vmatprep.subr.bf16.mxu0 0
        %2042 = vmatpush1.bf16.msra.mxu0 0
        %2043 = vmatprep.subr.bf16.mxu0 0
        %2044 = vmatpush1.bf16.msra.mxu0 0
        %2045 = vmatprep.subr.bf16.mxu0 0
        %2046 = vmatpush1.bf16.msra.mxu0 0
        %2047 = vmatprep.subr.bf16.mxu0 0
        %2048 = vmatpush1.bf16.msra.mxu0 0
        %2049 = vmatprep.subr.bf16.mxu0 0
        %2050 = vmatpush1.bf16.msra.mxu0 0
        %2051 = vmatprep.subr.bf16.mxu0 0
        %2052 = vmatpush1.bf16.msra.mxu0 0
        %2053 = vmatprep.subr.bf16.mxu0 0
        %2054 = vmatpush1.bf16.msra.mxu0 0
        %2055 = vmatprep.subr.bf16.mxu0 0
        %2056 = vmatpush1.bf16.msra.mxu0 0
        %2057 = vmatprep.mubr.bf16.mxu0 0
        %2058 = vmatmul.mubr.bf16.gmra.mrb[0].mxu0 %v2023
        %v2059 = vpop.f32.mrb[0].mxu0
        %v2060 = vadd.f32 0.0, %v2059
        %v2061 = vpop.f32.mrb[0].mxu0
        %v2062 = vadd.f32 0.0, %v2061
        %v2063 = vpop.f32.mrb[0].mxu0
        %v2064 = vpop.f32.mrb[0].mxu0
        %2065 = vdwg.mxu0
        %v2066 = vadd.f32 %v1991, %v2060
        %v2067 = vadd.f32 %v1992, %v2062
        %2068 = vrot.lane.b32.xlu0 %v1485, 90
        %v2069 = vpop.permute.xlu0 %2068
        %2070 = vrot.lane.b32.xlu0 %v1486, 90
        %v2071 = vpop.permute.xlu0 %2070
        %2072 = vrot.lane.b32.xlu0 %v1487, 90
        %v2073 = vpop.permute.xlu0 %2072
        %2074 = vrot.lane.b32.xlu0 %v1488, 90
        %v2075 = vpop.permute.xlu0 %2074
        %2076 = vrot.lane.b32.xlu0 %v1489, 90
        %v2077 = vpop.permute.xlu0 %2076
        %2078 = vrot.lane.b32.xlu0 %v1490, 90
        %v2079 = vpop.permute.xlu0 %2078
        %2080 = vrot.lane.b32.xlu0 %v1491, 90
        %v2081 = vpop.permute.xlu0 %2080
        %2082 = vrot.lane.b32.xlu0 %v1492, 90
        %v2083 = vpop.permute.xlu0 %2082
        %vm2084 = vcmask 736256
        %v2085 = vsel %vm2084, %v2069, %v2071
        %v2086 = vsel %vm2084, %v2073, %v2075
        %v2087 = vsel %vm2084, %v2077, %v2079
        %v2088 = vsel %vm2084, %v2081, %v2083
        %v2098 = vsel %vm447, %v1483, 0
        %2100 = vmatprep.subr.bf16.mxu0 %v2071
        %2101 = vmatpush1.bf16.msra.mxu0 %v2085
        %2102 = vmatprep.subr.bf16.mxu0 %v2075
        %2103 = vmatpush1.bf16.msra.mxu0 %v2086
        %2104 = vmatprep.subr.bf16.mxu0 %v2079
        %2105 = vmatpush1.bf16.msra.mxu0 %v2087
        %2106 = vmatprep.subr.bf16.mxu0 %v2083
        %2107 = vmatpush1.bf16.msra.mxu0 %v2088
        %2108 = vmatprep.subr.bf16.mxu0 0
        %2109 = vmatpush1.bf16.msra.mxu0 0
        %2110 = vmatprep.subr.bf16.mxu0 0
        %2111 = vmatpush1.bf16.msra.mxu0 0
        %2112 = vmatprep.subr.bf16.mxu0 0
        %2113 = vmatpush1.bf16.msra.mxu0 0
        %2114 = vmatprep.subr.bf16.mxu0 0
        %2115 = vmatpush1.bf16.msra.mxu0 0
        %2116 = vmatprep.subr.bf16.mxu0 0
        %2117 = vmatpush1.bf16.msra.mxu0 0
        %2118 = vmatprep.subr.bf16.mxu0 0
        %2119 = vmatpush1.bf16.msra.mxu0 0
        %2120 = vmatprep.subr.bf16.mxu0 0
        %2121 = vmatpush1.bf16.msra.mxu0 0
        %2122 = vmatprep.subr.bf16.mxu0 0
        %2123 = vmatpush1.bf16.msra.mxu0 0
        %2124 = vmatprep.subr.bf16.mxu0 0
        %2125 = vmatpush1.bf16.msra.mxu0 0
        %2126 = vmatprep.subr.bf16.mxu0 0
        %2127 = vmatpush1.bf16.msra.mxu0 0
        %2128 = vmatprep.subr.bf16.mxu0 0
        %2129 = vmatpush1.bf16.msra.mxu0 0
        %2130 = vmatprep.subr.bf16.mxu0 0
        %2131 = vmatpush1.bf16.msra.mxu0 0
        %2132 = vmatprep.mubr.bf16.mxu0 0
        %2133 = vmatmul.mubr.bf16.gmra.mrb[0].mxu0 %v2098
        %v2134 = vpop.f32.mrb[0].mxu0
        %v2135 = vadd.f32 0.0, %v2134
        %v2136 = vpop.f32.mrb[0].mxu0
        %v2137 = vadd.f32 0.0, %v2136
        %v2138 = vpop.f32.mrb[0].mxu0
        %v2139 = vpop.f32.mrb[0].mxu0
        %2140 = vdwg.mxu0
        %v2141 = vadd.f32 %v2066, %v2135
        %v2142 = vadd.f32 %v2067, %v2137
        %2144 = vset.pattern.permute.xlu0 0
        %2145 = vperm.xlu0 %2144, %v1484
        %v2146 = vpop.permute.xlu0 %2145
        %v2148 = vadd.f32 %v2141, %v2146
        %v2149 = vadd.f32 %v2142, %v2146
        %v2152 = vcombine.low %v2148, %v2149
        %vm2154 = vcmask 1043456
        %vm2155 = vcmask 130052
        %vm2156 = vmor %vm2155, %vm2154
        %2157 = vst.msk [vmem:[%s296] sm:$0xff] %vm2156, %v2152
        %v2158 = vld [vmem:[#allocation2 + $0x8] sm:$0xff]
        %v2159 = vld [vmem:[#allocation2 + $0x10] sm:$0xff]
        %v2160 = vld [vmem:[#allocation2 + $0x20] sm:$0xff]
        %v2161 = vld [vmem:[#allocation2 + $0x28] sm:$0xff]
        %v2162 = vld [vmem:[#allocation2 + $0x38] sm:$0xff]
        %v2163 = vld [vmem:[#allocation2 + $0x40] sm:$0xff]
        %v2164 = vld [vmem:[#allocation2 + $0x50] sm:$0xff]
        %v2165 = vld [vmem:[#allocation2 + $0x58] sm:$0xff]
        %2174 = vrot.lane.b32.xlu0 %v2158, 111
        %v2175 = vpop.permute.xlu0 %2174
        %2176 = vrot.lane.b32.xlu0 %v2159, 111
        %v2177 = vpop.permute.xlu0 %2176
        %2178 = vrot.lane.b32.xlu0 %v2160, 111
        %v2179 = vpop.permute.xlu0 %2178
        %2180 = vrot.lane.b32.xlu0 %v2161, 111
        %v2181 = vpop.permute.xlu0 %2180
        %2182 = vrot.lane.b32.xlu0 %v2162, 111
        %v2183 = vpop.permute.xlu0 %2182
        %2184 = vrot.lane.b32.xlu0 %v2163, 111
        %v2185 = vpop.permute.xlu0 %2184
        %2186 = vrot.lane.b32.xlu0 %v2164, 111
        %v2187 = vpop.permute.xlu0 %2186
        %2188 = vrot.lane.b32.xlu0 %v2165, 111
        %v2189 = vpop.permute.xlu0 %2188
        %vm2190 = vcmask 908288
        %v2191 = vsel %vm2190, %v2175, %v2177
        %v2192 = vsel %vm2190, %v2179, %v2181
        %v2193 = vsel %vm2190, %v2183, %v2185
        %v2194 = vsel %vm2190, %v2187, %v2189
        %2203 = vmatprep.subr.bf16.mxu0 %v2177
        %2204 = vmatpush1.bf16.msra.mxu0 %v2191
        %2205 = vmatprep.subr.bf16.mxu0 %v2181
        %2206 = vmatpush1.bf16.msra.mxu0 %v2192
        %2207 = vmatprep.subr.bf16.mxu0 %v2185
        %2208 = vmatpush1.bf16.msra.mxu0 %v2193
        %2209 = vmatprep.subr.bf16.mxu0 %v2189
        %2210 = vmatpush1.bf16.msra.mxu0 %v2194
        %2211 = vmatprep.subr.bf16.mxu0 0
        %2212 = vmatpush1.bf16.msra.mxu0 0
        %2213 = vmatprep.subr.bf16.mxu0 0
        %2214 = vmatpush1.bf16.msra.mxu0 0
        %2215 = vmatprep.subr.bf16.mxu0 0
        %2216 = vmatpush1.bf16.msra.mxu0 0
        %2217 = vmatprep.subr.bf16.mxu0 0
        %2218 = vmatpush1.bf16.msra.mxu0 0
        %2219 = vmatprep.subr.bf16.mxu0 0
        %2220 = vmatpush1.bf16.msra.mxu0 0
        %2221 = vmatprep.subr.bf16.mxu0 0
        %2222 = vmatpush1.bf16.msra.mxu0 0
        %2223 = vmatprep.subr.bf16.mxu0 0
        %2224 = vmatpush1.bf16.msra.mxu0 0
        %2225 = vmatprep.subr.bf16.mxu0 0
        %2226 = vmatpush1.bf16.msra.mxu0 0
        %2227 = vmatprep.subr.bf16.mxu0 0
        %2228 = vmatpush1.bf16.msra.mxu0 0
        %2229 = vmatprep.subr.bf16.mxu0 0
        %2230 = vmatpush1.bf16.msra.mxu0 0
        %2231 = vmatprep.subr.bf16.mxu0 0
        %2232 = vmatpush1.bf16.msra.mxu0 0
        %2233 = vmatprep.subr.bf16.mxu0 0
        %2234 = vmatpush1.bf16.msra.mxu0 0
        %2235 = vmatprep.mubr.bf16.mxu0 0
        %2236 = vmatmul.mubr.bf16.gmra.mrb[0].mxu0 %v1531
        %v2237 = vpop.f32.mrb[0].mxu0
        %v2238 = vadd.f32 0.0, %v2237
        %v2239 = vpop.f32.mrb[0].mxu0
        %v2240 = vadd.f32 0.0, %v2239
        %v2241 = vpop.f32.mrb[0].mxu0
        %v2242 = vpop.f32.mrb[0].mxu0
        %2243 = vdwg.mxu0
        %2244 = vrot.lane.b32.xlu0 %v2158, 112
        %v2245 = vpop.permute.xlu0 %2244
        %2246 = vrot.lane.b32.xlu0 %v2159, 112
        %v2247 = vpop.permute.xlu0 %2246
        %2248 = vrot.lane.b32.xlu0 %v2160, 112
        %v2249 = vpop.permute.xlu0 %2248
        %2250 = vrot.lane.b32.xlu0 %v2161, 112
        %v2251 = vpop.permute.xlu0 %2250
        %2252 = vrot.lane.b32.xlu0 %v2162, 112
        %v2253 = vpop.permute.xlu0 %2252
        %2254 = vrot.lane.b32.xlu0 %v2163, 112
        %v2255 = vpop.permute.xlu0 %2254
        %2256 = vrot.lane.b32.xlu0 %v2164, 112
        %v2257 = vpop.permute.xlu0 %2256
        %2258 = vrot.lane.b32.xlu0 %v2165, 112
        %v2259 = vpop.permute.xlu0 %2258
        %vm2260 = vcmask 916480
        %v2261 = vsel %vm2260, %v2245, %v2247
        %v2262 = vsel %vm2260, %v2249, %v2251
        %v2263 = vsel %vm2260, %v2253, %v2255
        %v2264 = vsel %vm2260, %v2257, %v2259
        %2273 = vmatprep.subr.bf16.mxu0 %v2247
        %2274 = vmatpush1.bf16.msra.mxu0 %v2261
        %2275 = vmatprep.subr.bf16.mxu0 %v2251
        %2276 = vmatpush1.bf16.msra.mxu0 %v2262
        %2277 = vmatprep.subr.bf16.mxu0 %v2255
        %2278 = vmatpush1.bf16.msra.mxu0 %v2263
        %2279 = vmatprep.subr.bf16.mxu0 %v2259
        %2280 = vmatpush1.bf16.msra.mxu0 %v2264
        %2281 = vmatprep.subr.bf16.mxu0 0
        %2282 = vmatpush1.bf16.msra.mxu0 0
        %2283 = vmatprep.subr.bf16.mxu0 0
        %2284 = vmatpush1.bf16.msra.mxu0 0
        %2285 = vmatprep.subr.bf16.mxu0 0
        %2286 = vmatpush1.bf16.msra.mxu0 0
        %2287 = vmatprep.subr.bf16.mxu0 0
        %2288 = vmatpush1.bf16.msra.mxu0 0
        %2289 = vmatprep.subr.bf16.mxu0 0
        %2290 = vmatpush1.bf16.msra.mxu0 0
        %2291 = vmatprep.subr.bf16.mxu0 0
        %2292 = vmatpush1.bf16.msra.mxu0 0
        %2293 = vmatprep.subr.bf16.mxu0 0
        %2294 = vmatpush1.bf16.msra.mxu0 0
        %2295 = vmatprep.subr.bf16.mxu0 0
        %2296 = vmatpush1.bf16.msra.mxu0 0
        %2297 = vmatprep.subr.bf16.mxu0 0
        %2298 = vmatpush1.bf16.msra.mxu0 0
        %2299 = vmatprep.subr.bf16.mxu0 0
        %2300 = vmatpush1.bf16.msra.mxu0 0
        %2301 = vmatprep.subr.bf16.mxu0 0
        %2302 = vmatpush1.bf16.msra.mxu0 0
        %2303 = vmatprep.subr.bf16.mxu0 0
        %2304 = vmatpush1.bf16.msra.mxu0 0
        %2305 = vmatprep.mubr.bf16.mxu0 0
        %2306 = vmatmul.mubr.bf16.gmra.mrb[0].mxu0 %v1575
        %v2307 = vpop.f32.mrb[0].mxu0
        %v2308 = vadd.f32 %v2238, %v2307
        %v2309 = vpop.f32.mrb[0].mxu0
        %v2310 = vadd.f32 %v2240, %v2309
        %v2311 = vpop.f32.mrb[0].mxu0
        %v2312 = vpop.f32.mrb[0].mxu0
        %2313 = vdwg.mxu0
        %2314 = vrot.lane.b32.xlu0 %v2158, 110
        %v2315 = vpop.permute.xlu0 %2314
        %2316 = vrot.lane.b32.xlu0 %v2159, 110
        %v2317 = vpop.permute.xlu0 %2316
        %2318 = vrot.lane.b32.xlu0 %v2160, 110
        %v2319 = vpop.permute.xlu0 %2318
        %2320 = vrot.lane.b32.xlu0 %v2161, 110
        %v2321 = vpop.permute.xlu0 %2320
        %2322 = vrot.lane.b32.xlu0 %v2162, 110
        %v2323 = vpop.permute.xlu0 %2322
        %2324 = vrot.lane.b32.xlu0 %v2163, 110
        %v2325 = vpop.permute.xlu0 %2324
        %2326 = vrot.lane.b32.xlu0 %v2164, 110
        %v2327 = vpop.permute.xlu0 %2326
        %2328 = vrot.lane.b32.xlu0 %v2165, 110
        %v2329 = vpop.permute.xlu0 %2328
        %v2330 = vsel %vm1709, %v2315, %v2317
        %v2331 = vsel %vm1709, %v2319, %v2321
        %v2332 = vsel %vm1709, %v2323, %v2325
        %v2333 = vsel %vm1709, %v2327, %v2329
        %2342 = vmatprep.subr.bf16.mxu0 %v2317
        %2343 = vmatpush1.bf16.msra.mxu0 %v2330
        %2344 = vmatprep.subr.bf16.mxu0 %v2321
        %2345 = vmatpush1.bf16.msra.mxu0 %v2331
        %2346 = vmatprep.subr.bf16.mxu0 %v2325
        %2347 = vmatpush1.bf16.msra.mxu0 %v2332
        %2348 = vmatprep.subr.bf16.mxu0 %v2329
        %2349 = vmatpush1.bf16.msra.mxu0 %v2333
        %2350 = vmatprep.subr.bf16.mxu0 0
        %2351 = vmatpush1.bf16.msra.mxu0 0
        %2352 = vmatprep.subr.bf16.mxu0 0
        %2353 = vmatpush1.bf16.msra.mxu0 0
        %2354 = vmatprep.subr.bf16.mxu0 0
        %2355 = vmatpush1.bf16.msra.mxu0 0
        %2356 = vmatprep.subr.bf16.mxu0 0
        %2357 = vmatpush1.bf16.msra.mxu0 0
        %2358 = vmatprep.subr.bf16.mxu0 0
        %2359 = vmatpush1.bf16.msra.mxu0 0
        %2360 = vmatprep.subr.bf16.mxu0 0
        %2361 = vmatpush1.bf16.msra.mxu0 0
        %2362 = vmatprep.subr.bf16.mxu0 0
        %2363 = vmatpush1.bf16.msra.mxu0 0
        %2364 = vmatprep.subr.bf16.mxu0 0
        %2365 = vmatpush1.bf16.msra.mxu0 0
        %2366 = vmatprep.subr.bf16.mxu0 0
        %2367 = vmatpush1.bf16.msra.mxu0 0
        %2368 = vmatprep.subr.bf16.mxu0 0
        %2369 = vmatpush1.bf16.msra.mxu0 0
        %2370 = vmatprep.subr.bf16.mxu0 0
        %2371 = vmatpush1.bf16.msra.mxu0 0
        %2372 = vmatprep.subr.bf16.mxu0 0
        %2373 = vmatpush1.bf16.msra.mxu0 0
        %2374 = vmatprep.mubr.bf16.mxu0 0
        %2375 = vmatmul.mubr.bf16.gmra.mrb[0].mxu0 %v1648
        %v2376 = vpop.f32.mrb[0].mxu0
        %v2377 = vadd.f32 0.0, %v2376
        %v2378 = vpop.f32.mrb[0].mxu0
        %v2379 = vadd.f32 0.0, %v2378
        %v2380 = vpop.f32.mrb[0].mxu0
        %v2381 = vpop.f32.mrb[0].mxu0
        %2382 = vdwg.mxu0
        %v2383 = vadd.f32 %v2308, %v2377
        %v2384 = vadd.f32 %v2310, %v2379
        %2385 = vrot.lane.b32.xlu0 %v2158, 94
        %v2386 = vpop.permute.xlu0 %2385
        %2387 = vrot.lane.b32.xlu0 %v2159, 94
        %v2388 = vpop.permute.xlu0 %2387
        %2389 = vrot.lane.b32.xlu0 %v2160, 94
        %v2390 = vpop.permute.xlu0 %2389
        %2391 = vrot.lane.b32.xlu0 %v2161, 94
        %v2392 = vpop.permute.xlu0 %2391
        %2393 = vrot.lane.b32.xlu0 %v2162, 94
        %v2394 = vpop.permute.xlu0 %2393
        %2395 = vrot.lane.b32.xlu0 %v2163, 94
        %v2396 = vpop.permute.xlu0 %2395
        %2397 = vrot.lane.b32.xlu0 %v2164, 94
        %v2398 = vpop.permute.xlu0 %2397
        %2399 = vrot.lane.b32.xlu0 %v2165, 94
        %v2400 = vpop.permute.xlu0 %2399
        %vm2401 = vcmask 769024
        %v2402 = vsel %vm2401, %v2386, %v2388
        %v2403 = vsel %vm2401, %v2390, %v2392
        %v2404 = vsel %vm2401, %v2394, %v2396
        %v2405 = vsel %vm2401, %v2398, %v2400
        %2414 = vmatprep.subr.bf16.mxu0 %v2388
        %2415 = vmatpush1.bf16.msra.mxu0 %v2402
        %2416 = vmatprep.subr.bf16.mxu0 %v2392
        %2417 = vmatpush1.bf16.msra.mxu0 %v2403
        %2418 = vmatprep.subr.bf16.mxu0 %v2396
        %2419 = vmatpush1.bf16.msra.mxu0 %v2404
        %2420 = vmatprep.subr.bf16.mxu0 %v2400
        %2421 = vmatpush1.bf16.msra.mxu0 %v2405
        %2422 = vmatprep.subr.bf16.mxu0 0
        %2423 = vmatpush1.bf16.msra.mxu0 0
        %2424 = vmatprep.subr.bf16.mxu0 0
        %2425 = vmatpush1.bf16.msra.mxu0 0
        %2426 = vmatprep.subr.bf16.mxu0 0
        %2427 = vmatpush1.bf16.msra.mxu0 0
        %2428 = vmatprep.subr.bf16.mxu0 0
        %2429 = vmatpush1.bf16.msra.mxu0 0
        %2430 = vmatprep.subr.bf16.mxu0 0
        %2431 = vmatpush1.bf16.msra.mxu0 0
        %2432 = vmatprep.subr.bf16.mxu0 0
        %2433 = vmatpush1.bf16.msra.mxu0 0
        %2434 = vmatprep.subr.bf16.mxu0 0
        %2435 = vmatpush1.bf16.msra.mxu0 0
        %2436 = vmatprep.subr.bf16.mxu0 0
        %2437 = vmatpush1.bf16.msra.mxu0 0
        %2438 = vmatprep.subr.bf16.mxu0 0
        %2439 = vmatpush1.bf16.msra.mxu0 0
        %2440 = vmatprep.subr.bf16.mxu0 0
        %2441 = vmatpush1.bf16.msra.mxu0 0
        %2442 = vmatprep.subr.bf16.mxu0 0
        %2443 = vmatpush1.bf16.msra.mxu0 0
        %2444 = vmatprep.subr.bf16.mxu0 0
        %2445 = vmatpush1.bf16.msra.mxu0 0
        %2446 = vmatprep.mubr.bf16.mxu0 0
        %2447 = vmatmul.mubr.bf16.gmra.mrb[0].mxu0 %v1723
        %v2448 = vpop.f32.mrb[0].mxu0
        %v2449 = vadd.f32 0.0, %v2448
        %v2450 = vpop.f32.mrb[0].mxu0
        %v2451 = vadd.f32 0.0, %v2450
        %v2452 = vpop.f32.mrb[0].mxu0
        %v2453 = vpop.f32.mrb[0].mxu0
        %2454 = vdwg.mxu0
        %v2455 = vadd.f32 %v2383, %v2449
        %v2456 = vadd.f32 %v2384, %v2451
        %2457 = vrot.lane.b32.xlu0 %v2158, 93
        %v2458 = vpop.permute.xlu0 %2457
        %2459 = vrot.lane.b32.xlu0 %v2159, 93
        %v2460 = vpop.permute.xlu0 %2459
        %2461 = vrot.lane.b32.xlu0 %v2160, 93
        %v2462 = vpop.permute.xlu0 %2461
        %2463 = vrot.lane.b32.xlu0 %v2161, 93
        %v2464 = vpop.permute.xlu0 %2463
        %2465 = vrot.lane.b32.xlu0 %v2162, 93
        %v2466 = vpop.permute.xlu0 %2465
        %2467 = vrot.lane.b32.xlu0 %v2163, 93
        %v2468 = vpop.permute.xlu0 %2467
        %2469 = vrot.lane.b32.xlu0 %v2164, 93
        %v2470 = vpop.permute.xlu0 %2469
        %2471 = vrot.lane.b32.xlu0 %v2165, 93
        %v2472 = vpop.permute.xlu0 %2471
        %vm2473 = vcmask 760832
        %v2474 = vsel %vm2473, %v2458, %v2460
        %v2475 = vsel %vm2473, %v2462, %v2464
        %v2476 = vsel %vm2473, %v2466, %v2468
        %v2477 = vsel %vm2473, %v2470, %v2472
        %2486 = vmatprep.subr.bf16.mxu0 %v2460
        %2487 = vmatpush1.bf16.msra.mxu0 %v2474
        %2488 = vmatprep.subr.bf16.mxu0 %v2464
        %2489 = vmatpush1.bf16.msra.mxu0 %v2475
        %2490 = vmatprep.subr.bf16.mxu0 %v2468
        %2491 = vmatpush1.bf16.msra.mxu0 %v2476
        %2492 = vmatprep.subr.bf16.mxu0 %v2472
        %2493 = vmatpush1.bf16.msra.mxu0 %v2477
        %2494 = vmatprep.subr.bf16.mxu0 0
        %2495 = vmatpush1.bf16.msra.mxu0 0
        %2496 = vmatprep.subr.bf16.mxu0 0
        %2497 = vmatpush1.bf16.msra.mxu0 0
        %2498 = vmatprep.subr.bf16.mxu0 0
        %2499 = vmatpush1.bf16.msra.mxu0 0
        %2500 = vmatprep.subr.bf16.mxu0 0
        %2501 = vmatpush1.bf16.msra.mxu0 0
        %2502 = vmatprep.subr.bf16.mxu0 0
        %2503 = vmatpush1.bf16.msra.mxu0 0
        %2504 = vmatprep.subr.bf16.mxu0 0
        %2505 = vmatpush1.bf16.msra.mxu0 0
        %2506 = vmatprep.subr.bf16.mxu0 0
        %2507 = vmatpush1.bf16.msra.mxu0 0
        %2508 = vmatprep.subr.bf16.mxu0 0
        %2509 = vmatpush1.bf16.msra.mxu0 0
        %2510 = vmatprep.subr.bf16.mxu0 0
        %2511 = vmatpush1.bf16.msra.mxu0 0
        %2512 = vmatprep.subr.bf16.mxu0 0
        %2513 = vmatpush1.bf16.msra.mxu0 0
        %2514 = vmatprep.subr.bf16.mxu0 0
        %2515 = vmatpush1.bf16.msra.mxu0 0
        %2516 = vmatprep.subr.bf16.mxu0 0
        %2517 = vmatpush1.bf16.msra.mxu0 0
        %2518 = vmatprep.mubr.bf16.mxu0 0
        %2519 = vmatmul.mubr.bf16.gmra.mrb[0].mxu0 %v1798
        %v2520 = vpop.f32.mrb[0].mxu0
        %v2521 = vadd.f32 0.0, %v2520
        %v2522 = vpop.f32.mrb[0].mxu0
        %v2523 = vadd.f32 0.0, %v2522
        %v2524 = vpop.f32.mrb[0].mxu0
        %v2525 = vpop.f32.mrb[0].mxu0
        %2526 = vdwg.mxu0
        %v2527 = vadd.f32 %v2455, %v2521
        %v2528 = vadd.f32 %v2456, %v2523
        %2529 = vrot.lane.b32.xlu0 %v2158, 92
        %v2530 = vpop.permute.xlu0 %2529
        %2531 = vrot.lane.b32.xlu0 %v2159, 92
        %v2532 = vpop.permute.xlu0 %2531
        %2533 = vrot.lane.b32.xlu0 %v2160, 92
        %v2534 = vpop.permute.xlu0 %2533
        %2535 = vrot.lane.b32.xlu0 %v2161, 92
        %v2536 = vpop.permute.xlu0 %2535
        %2537 = vrot.lane.b32.xlu0 %v2162, 92
        %v2538 = vpop.permute.xlu0 %2537
        %2539 = vrot.lane.b32.xlu0 %v2163, 92
        %v2540 = vpop.permute.xlu0 %2539
        %2541 = vrot.lane.b32.xlu0 %v2164, 92
        %v2542 = vpop.permute.xlu0 %2541
        %2543 = vrot.lane.b32.xlu0 %v2165, 92
        %v2544 = vpop.permute.xlu0 %2543
        %v2545 = vsel %vm1934, %v2530, %v2532
        %v2546 = vsel %vm1934, %v2534, %v2536
        %v2547 = vsel %vm1934, %v2538, %v2540
        %v2548 = vsel %vm1934, %v2542, %v2544
        %2557 = vmatprep.subr.bf16.mxu0 %v2532
        %2558 = vmatpush1.bf16.msra.mxu0 %v2545
        %2559 = vmatprep.subr.bf16.mxu0 %v2536
        %2560 = vmatpush1.bf16.msra.mxu0 %v2546
        %2561 = vmatprep.subr.bf16.mxu0 %v2540
        %2562 = vmatpush1.bf16.msra.mxu0 %v2547
        %2563 = vmatprep.subr.bf16.mxu0 %v2544
        %2564 = vmatpush1.bf16.msra.mxu0 %v2548
        %2565 = vmatprep.subr.bf16.mxu0 0
        %2566 = vmatpush1.bf16.msra.mxu0 0
        %2567 = vmatprep.subr.bf16.mxu0 0
        %2568 = vmatpush1.bf16.msra.mxu0 0
        %2569 = vmatprep.subr.bf16.mxu0 0
        %2570 = vmatpush1.bf16.msra.mxu0 0
        %2571 = vmatprep.subr.bf16.mxu0 0
        %2572 = vmatpush1.bf16.msra.mxu0 0
        %2573 = vmatprep.subr.bf16.mxu0 0
        %2574 = vmatpush1.bf16.msra.mxu0 0
        %2575 = vmatprep.subr.bf16.mxu0 0
        %2576 = vmatpush1.bf16.msra.mxu0 0
        %2577 = vmatprep.subr.bf16.mxu0 0
        %2578 = vmatpush1.bf16.msra.mxu0 0
        %2579 = vmatprep.subr.bf16.mxu0 0
        %2580 = vmatpush1.bf16.msra.mxu0 0
        %2581 = vmatprep.subr.bf16.mxu0 0
        %2582 = vmatpush1.bf16.msra.mxu0 0
        %2583 = vmatprep.subr.bf16.mxu0 0
        %2584 = vmatpush1.bf16.msra.mxu0 0
        %2585 = vmatprep.subr.bf16.mxu0 0
        %2586 = vmatpush1.bf16.msra.mxu0 0
        %2587 = vmatprep.subr.bf16.mxu0 0
        %2588 = vmatpush1.bf16.msra.mxu0 0
        %2589 = vmatprep.mubr.bf16.mxu0 0
        %2590 = vmatmul.mubr.bf16.gmra.mrb[0].mxu0 %v1873
        %v2591 = vpop.f32.mrb[0].mxu0
        %v2592 = vadd.f32 0.0, %v2591
        %v2593 = vpop.f32.mrb[0].mxu0
        %v2594 = vadd.f32 0.0, %v2593
        %v2595 = vpop.f32.mrb[0].mxu0
        %v2596 = vpop.f32.mrb[0].mxu0
        %2597 = vdwg.mxu0
        %v2598 = vadd.f32 %v2527, %v2592
        %v2599 = vadd.f32 %v2528, %v2594
        %2600 = vrot.lane.b32.xlu0 %v2158, 76
        %v2601 = vpop.permute.xlu0 %2600
        %2602 = vrot.lane.b32.xlu0 %v2159, 76
        %v2603 = vpop.permute.xlu0 %2602
        %2604 = vrot.lane.b32.xlu0 %v2160, 76
        %v2605 = vpop.permute.xlu0 %2604
        %2606 = vrot.lane.b32.xlu0 %v2161, 76
        %v2607 = vpop.permute.xlu0 %2606
        %2608 = vrot.lane.b32.xlu0 %v2162, 76
        %v2609 = vpop.permute.xlu0 %2608
        %2610 = vrot.lane.b32.xlu0 %v2163, 76
        %v2611 = vpop.permute.xlu0 %2610
        %2612 = vrot.lane.b32.xlu0 %v2164, 76
        %v2613 = vpop.permute.xlu0 %2612
        %2614 = vrot.lane.b32.xlu0 %v2165, 76
        %v2615 = vpop.permute.xlu0 %2614
        %vm2616 = vcmask 621568
        %v2617 = vsel %vm2616, %v2601, %v2603
        %v2618 = vsel %vm2616, %v2605, %v2607
        %v2619 = vsel %vm2616, %v2609, %v2611
        %v2620 = vsel %vm2616, %v2613, %v2615
        %2629 = vmatprep.subr.bf16.mxu0 %v2603
        %2630 = vmatpush1.bf16.msra.mxu0 %v2617
        %2631 = vmatprep.subr.bf16.mxu0 %v2607
        %2632 = vmatpush1.bf16.msra.mxu0 %v2618
        %2633 = vmatprep.subr.bf16.mxu0 %v2611
        %2634 = vmatpush1.bf16.msra.mxu0 %v2619
        %2635 = vmatprep.subr.bf16.mxu0 %v2615
        %2636 = vmatpush1.bf16.msra.mxu0 %v2620
        %2637 = vmatprep.subr.bf16.mxu0 0
        %2638 = vmatpush1.bf16.msra.mxu0 0
        %2639 = vmatprep.subr.bf16.mxu0 0
        %2640 = vmatpush1.bf16.msra.mxu0 0
        %2641 = vmatprep.subr.bf16.mxu0 0
        %2642 = vmatpush1.bf16.msra.mxu0 0
        %2643 = vmatprep.subr.bf16.mxu0 0
        %2644 = vmatpush1.bf16.msra.mxu0 0
        %2645 = vmatprep.subr.bf16.mxu0 0
        %2646 = vmatpush1.bf16.msra.mxu0 0
        %2647 = vmatprep.subr.bf16.mxu0 0
        %2648 = vmatpush1.bf16.msra.mxu0 0
        %2649 = vmatprep.subr.bf16.mxu0 0
        %2650 = vmatpush1.bf16.msra.mxu0 0
        %2651 = vmatprep.subr.bf16.mxu0 0
        %2652 = vmatpush1.bf16.msra.mxu0 0
        %2653 = vmatprep.subr.bf16.mxu0 0
        %2654 = vmatpush1.bf16.msra.mxu0 0
        %2655 = vmatprep.subr.bf16.mxu0 0
        %2656 = vmatpush1.bf16.msra.mxu0 0
        %2657 = vmatprep.subr.bf16.mxu0 0
        %2658 = vmatpush1.bf16.msra.mxu0 0
        %2659 = vmatprep.subr.bf16.mxu0 0
        %2660 = vmatpush1.bf16.msra.mxu0 0
        %2661 = vmatprep.mubr.bf16.mxu0 0
        %2662 = vmatmul.mubr.bf16.gmra.mrb[0].mxu0 %v1948
        %v2663 = vpop.f32.mrb[0].mxu0
        %v2664 = vadd.f32 0.0, %v2663
        %v2665 = vpop.f32.mrb[0].mxu0
        %v2666 = vadd.f32 0.0, %v2665
        %v2667 = vpop.f32.mrb[0].mxu0
        %v2668 = vpop.f32.mrb[0].mxu0
        %2669 = vdwg.mxu0
        %v2670 = vadd.f32 %v2598, %v2664
        %v2671 = vadd.f32 %v2599, %v2666
        %2672 = vrot.lane.b32.xlu0 %v2158, 75
        %v2673 = vpop.permute.xlu0 %2672
        %2674 = vrot.lane.b32.xlu0 %v2159, 75
        %v2675 = vpop.permute.xlu0 %2674
        %2676 = vrot.lane.b32.xlu0 %v2160, 75
        %v2677 = vpop.permute.xlu0 %2676
        %2678 = vrot.lane.b32.xlu0 %v2161, 75
        %v2679 = vpop.permute.xlu0 %2678
        %2680 = vrot.lane.b32.xlu0 %v2162, 75
        %v2681 = vpop.permute.xlu0 %2680
        %2682 = vrot.lane.b32.xlu0 %v2163, 75
        %v2683 = vpop.permute.xlu0 %2682
        %2684 = vrot.lane.b32.xlu0 %v2164, 75
        %v2685 = vpop.permute.xlu0 %2684
        %2686 = vrot.lane.b32.xlu0 %v2165, 75
        %v2687 = vpop.permute.xlu0 %2686
        %vm2688 = vcmask 613376
        %v2689 = vsel %vm2688, %v2673, %v2675
        %v2690 = vsel %vm2688, %v2677, %v2679
        %v2691 = vsel %vm2688, %v2681, %v2683
        %v2692 = vsel %vm2688, %v2685, %v2687
        %2701 = vmatprep.subr.bf16.mxu0 %v2675
        %2702 = vmatpush1.bf16.msra.mxu0 %v2689
        %2703 = vmatprep.subr.bf16.mxu0 %v2679
        %2704 = vmatpush1.bf16.msra.mxu0 %v2690
        %2705 = vmatprep.subr.bf16.mxu0 %v2683
        %2706 = vmatpush1.bf16.msra.mxu0 %v2691
        %2707 = vmatprep.subr.bf16.mxu0 %v2687
        %2708 = vmatpush1.bf16.msra.mxu0 %v2692
        %2709 = vmatprep.subr.bf16.mxu0 0
        %2710 = vmatpush1.bf16.msra.mxu0 0
        %2711 = vmatprep.subr.bf16.mxu0 0
        %2712 = vmatpush1.bf16.msra.mxu0 0
        %2713 = vmatprep.subr.bf16.mxu0 0
        %2714 = vmatpush1.bf16.msra.mxu0 0
        %2715 = vmatprep.subr.bf16.mxu0 0
        %2716 = vmatpush1.bf16.msra.mxu0 0
        %2717 = vmatprep.subr.bf16.mxu0 0
        %2718 = vmatpush1.bf16.msra.mxu0 0
        %2719 = vmatprep.subr.bf16.mxu0 0
        %2720 = vmatpush1.bf16.msra.mxu0 0
        %2721 = vmatprep.subr.bf16.mxu0 0
        %2722 = vmatpush1.bf16.msra.mxu0 0
        %2723 = vmatprep.subr.bf16.mxu0 0
        %2724 = vmatpush1.bf16.msra.mxu0 0
        %2725 = vmatprep.subr.bf16.mxu0 0
        %2726 = vmatpush1.bf16.msra.mxu0 0
        %2727 = vmatprep.subr.bf16.mxu0 0
        %2728 = vmatpush1.bf16.msra.mxu0 0
        %2729 = vmatprep.subr.bf16.mxu0 0
        %2730 = vmatpush1.bf16.msra.mxu0 0
        %2731 = vmatprep.subr.bf16.mxu0 0
        %2732 = vmatpush1.bf16.msra.mxu0 0
        %2733 = vmatprep.mubr.bf16.mxu0 0
        %2734 = vmatmul.mubr.bf16.gmra.mrb[0].mxu0 %v2023
        %v2735 = vpop.f32.mrb[0].mxu0
        %v2736 = vadd.f32 0.0, %v2735
        %v2737 = vpop.f32.mrb[0].mxu0
        %v2738 = vadd.f32 0.0, %v2737
        %v2739 = vpop.f32.mrb[0].mxu0
        %v2740 = vpop.f32.mrb[0].mxu0
        %2741 = vdwg.mxu0
        %v2742 = vadd.f32 %v2670, %v2736
        %v2743 = vadd.f32 %v2671, %v2738
        %2744 = vrot.lane.b32.xlu0 %v2158, 74
        %v2745 = vpop.permute.xlu0 %2744
        %2746 = vrot.lane.b32.xlu0 %v2159, 74
        %v2747 = vpop.permute.xlu0 %2746
        %2748 = vrot.lane.b32.xlu0 %v2160, 74
        %v2749 = vpop.permute.xlu0 %2748
        %2750 = vrot.lane.b32.xlu0 %v2161, 74
        %v2751 = vpop.permute.xlu0 %2750
        %2752 = vrot.lane.b32.xlu0 %v2162, 74
        %v2753 = vpop.permute.xlu0 %2752
        %2754 = vrot.lane.b32.xlu0 %v2163, 74
        %v2755 = vpop.permute.xlu0 %2754
        %2756 = vrot.lane.b32.xlu0 %v2164, 74
        %v2757 = vpop.permute.xlu0 %2756
        %2758 = vrot.lane.b32.xlu0 %v2165, 74
        %v2759 = vpop.permute.xlu0 %2758
        %vm2760 = vcmask 605184
        %v2761 = vsel %vm2760, %v2745, %v2747
        %v2762 = vsel %vm2760, %v2749, %v2751
        %v2763 = vsel %vm2760, %v2753, %v2755
        %v2764 = vsel %vm2760, %v2757, %v2759
        %2773 = vmatprep.subr.bf16.mxu0 %v2747
        %2774 = vmatpush1.bf16.msra.mxu0 %v2761
        %2775 = vmatprep.subr.bf16.mxu0 %v2751
        %2776 = vmatpush1.bf16.msra.mxu0 %v2762
        %2777 = vmatprep.subr.bf16.mxu0 %v2755
        %2778 = vmatpush1.bf16.msra.mxu0 %v2763
        %2779 = vmatprep.subr.bf16.mxu0 %v2759
        %2780 = vmatpush1.bf16.msra.mxu0 %v2764
        %2781 = vmatprep.subr.bf16.mxu0 0
        %2782 = vmatpush1.bf16.msra.mxu0 0
        %2783 = vmatprep.subr.bf16.mxu0 0
        %2784 = vmatpush1.bf16.msra.mxu0 0
        %2785 = vmatprep.subr.bf16.mxu0 0
        %2786 = vmatpush1.bf16.msra.mxu0 0
        %2787 = vmatprep.subr.bf16.mxu0 0
        %2788 = vmatpush1.bf16.msra.mxu0 0
        %2789 = vmatprep.subr.bf16.mxu0 0
        %2790 = vmatpush1.bf16.msra.mxu0 0
        %2791 = vmatprep.subr.bf16.mxu0 0
        %2792 = vmatpush1.bf16.msra.mxu0 0
        %2793 = vmatprep.subr.bf16.mxu0 0
        %2794 = vmatpush1.bf16.msra.mxu0 0
        %2795 = vmatprep.subr.bf16.mxu0 0
        %2796 = vmatpush1.bf16.msra.mxu0 0
        %2797 = vmatprep.subr.bf16.mxu0 0
        %2798 = vmatpush1.bf16.msra.mxu0 0
        %2799 = vmatprep.subr.bf16.mxu0 0
        %2800 = vmatpush1.bf16.msra.mxu0 0
        %2801 = vmatprep.subr.bf16.mxu0 0
        %2802 = vmatpush1.bf16.msra.mxu0 0
        %2803 = vmatprep.subr.bf16.mxu0 0
        %2804 = vmatpush1.bf16.msra.mxu0 0
        %2805 = vmatprep.mubr.bf16.mxu0 0
        %2806 = vmatmul.mubr.bf16.gmra.mrb[0].mxu0 %v2098
        %v2807 = vpop.f32.mrb[0].mxu0
        %v2808 = vadd.f32 0.0, %v2807
        %v2809 = vpop.f32.mrb[0].mxu0
        %v2810 = vadd.f32 0.0, %v2809
        %v2811 = vpop.f32.mrb[0].mxu0
        %v2812 = vpop.f32.mrb[0].mxu0
        %2813 = vdwg.mxu0
        %v2814 = vadd.f32 %v2742, %v2808
        %v2815 = vadd.f32 %v2743, %v2810
        %v2816 = vadd.f32 %v2814, %v2146
        %v2817 = vadd.f32 %v2815, %v2146
        %v2820 = vcombine.low %v2816, %v2817
        %2821 = vrot.lane.b32.xlu0 %v2820, 16
        %v2822 = vpop.permute.xlu0 %2821
        %v2823 = vrot.slane %v2822, 4
        %vm2824 = vcmask 130048
        %v2825 = vsel %vm2824, %v2823, %v2822
        %vm2827 = vcmask 1043584
        %vm2828 = vcmask 261124
        %vm2829 = vmor %vm2828, %vm2827
        %2830 = vst.msk [vmem:[%s296 + $0x4] sm:$0xff] %vm2829, %v2825
        %s2831 = sand.u32 %s184, 1
        %s2832 = scalar_lea.sflag [#allocation5], %s2831
        %s2833 = sand.u32 %s184, 1
        %s2834 = smul.addr %s2833, 12
        %s2835 = scalar_lea.vmem [#allocation6], %s2834
        // Predicated region
        $region57: #{tpu_custom_call.1} parent=47 // pred_check
          %p2836 = pneg %p194
        $region58: #{tpu_custom_call.1} parent=47 // pred_check_branch
          %2838 = sbr.rel (%p2836) target = $region60
        $region59: #{tpu_custom_call.1} parent=47 // pred_region
          %s2840 = ssub.s32 192, 192
          %2841 = vsyncadd %s2832, %s2840
          %s2842 = smul.addr %s24, 3
          %s2843 = smul.addr %s2842, 64
          %s2844 = scalar_lea.hbm %s7, %s2843
          %s2846 = sshll.u32 %s2835, 4
          %s2847 = int_to_ptr.vmem [resolvable:$true] %s2846
          %2849 = dma.vmem_to_hbm [thread:$0]  %s2847, 192, %s2844, %s2832
        $region60: #{tpu_custom_call.1} parent=47 // pred_fallthru
          _
      $region48: #{tpu_custom_call.1} parent=5 // pred_fallthru
        _
      %p2850 = scmp.le.s32.totalorder 2, %s19
      // Predicated region
      $region61: #{tpu_custom_call.1} parent=5 // pred_check
        %p2851 = pneg %p2850
      $region62: #{tpu_custom_call.1} parent=5 // pred_check_branch
        %2853 = sbr.rel (%p2851) target = $region64
      $region63: #{tpu_custom_call.1} parent=5 // pred_region
        %s2854 = ssub.s32 %s19, 2
        // Predicated region
        $region65: #{tpu_custom_call.1} parent=63 // pred_check
          %p2855 = pneg %p200
        $region66: #{tpu_custom_call.1} parent=63 // pred_check_branch
          %2857 = sbr.rel (%p2855) target = $region68
        $region67: #{tpu_custom_call.1} parent=63 // pred_region
          %s2858 = sand.u32 %s185, 1
          %s2859 = scalar_lea.sflag [#allocation5], %s2858
          %s2860 = sand.u32 %s185, 1
          %s2861 = smul.addr %s2860, 12
          %s2862 = scalar_lea.vmem [#allocation6], %s2861
          %2863 = dma.done %s2859, 192
        $region68: #{tpu_custom_call.1} parent=63 // pred_fallthru
          _
      $region64: #{tpu_custom_call.1} parent=5 // pred_fallthru
        _
    $region6: #{tpu_custom_call.1} parent=1 // loop_footer
      %s23 = sadd.s32 1, %s19
    $region7: #{tpu_custom_call.1} parent=1 // loop_footer_branch
      %18 = sbr.rel target = $region3
    $region8: #{tpu_custom_call.1} parent=1 // loop_exit
      _
    %2864 = vsyncpa [#allocation4], 1
    %s2865 = scalar_lea.sflag [#allocation4], 1
    %2866 = vsyncpa %s2865, 1
    %2867 = vsyncpa [#allocation5], 1
    %s2868 = scalar_lea.sflag [#allocation5], 1
    %2869 = vsyncpa %s2868, 1

</llo_original>
